<compile_context>
chip_gen: v5e
topology: v5e:2x2
jax: 0.10.0
libtpu: 0.0.40
codegen_flags: <defaults>
</compile_context>

<pallas_src>
import functools
import math

import jax
import jax.numpy as jnp
from jax import lax
from jax.experimental import pallas as pl
from jax.experimental.pallas import tpu as pltpu


def _round_up(n, m):
    return (n + m - 1) // m * m


# ---------------------------------------------------------------------------
# Fused kernel: fc1 + ReLU -> [Linear + BN(batch stats) + ReLU] * (n_layers-1) -> logits
# ---------------------------------------------------------------------------
def _hhn_fused_kernel(factors_ref, x_ref, w1_ref, wh_ref, w2_ref, o_ref, *,
                      dims, n_hidden, n_units, n_classes):
    """
    factors_ref: SMEM (dims,) f32                        -- softmax hypernet output
    x_ref      : VMEM (B, K) f32                         -- flattened input
    w1_ref     : VMEM (K, DUp) bf16                      -- fc1 stack, dims packed along lanes
    wh_ref     : VMEM (max(n_hidden,1), Np, DUp) bf16    -- hidden stacks, dims packed along lanes
    w2_ref     : VMEM (Np, DCp) bf16                     -- fc2 stack, dims packed along lanes
    o_ref      : VMEM (B, Cp) f32                        -- padded logits
    Layout: W*p[k, d*out + n] = W_d[k, n]; padded rows/lanes are zero.
    """
    DUp = w1_ref.shape[1]
    Np = w2_ref.shape[0]
    DCp = w2_ref.shape[1]
    Cp = o_ref.shape[1]

    def combine_matrix(out_real, n_rows, n_cols):
        # C[d*out_real + n, n] = factors[d]  (n < out_real, d < dims); zero elsewhere.
        row = lax.broadcasted_iota(jnp.int32, (n_rows, n_cols), 0)
        col = lax.broadcasted_iota(jnp.int32, (n_rows, n_cols), 1)
        c = jnp.zeros((n_rows, n_cols), jnp.float32)
        for d in range(dims):  # dims is small & static
            c = c + jnp.where((row == col + d * out_real) & (col < out_real),
                              factors_ref[d], 0.0)
        return c

    # Built once, reused by fc1 + every hidden layer / by the fc2 head.
    c_units = combine_matrix(n_units, DUp, Np)      # (DUp, Np) f32
    c_cls = combine_matrix(n_classes, DCp, Cp)      # (DCp, Cp) f32

    def wsum_dot(a, w, c):
        # sum_d f_d * (a @ W_d):  per-dim partials land in lane blocks of (a @ Wp),
        # then the factor-weighted block-diagonal combine is one tiny f32 matmul.
        g = jnp.dot(a.astype(jnp.bfloat16), w, preferred_element_type=jnp.float32)
        return jnp.dot(g, c, preferred_element_type=jnp.float32)

    # fc1 + ReLU  (padded lanes of h stay exactly zero)
    h = jnp.maximum(wsum_dot(x_ref[...], w1_ref[...], c_units), 0.0)

    # Hidden layers: Linear + BatchNorm(batch stats, no affine, eps=1e-5) + ReLU.
    # Statically unrolled (small fixed count) for full scheduler visibility.
    for l in range(n_hidden):
        y = wsum_dot(h, wh_ref[l], c_units)
        mean = jnp.mean(y, axis=0, keepdims=True)                # batch mean (training=True)
        var = jnp.mean((y - mean) ** 2, axis=0, keepdims=True)   # biased variance
        h = jnp.maximum((y - mean) * lax.rsqrt(var + 1e-5), 0.0)
        # TODO(synk): F.batch_norm(training=True) also updates running_mean/var in place;
        # the forward output does not depend on them, so that stateful update is omitted.

    # Logits head.
    o_ref[...] = wsum_dot(h, w2_ref[...], c_cls).astype(o_ref.dtype)


# ---------------------------------------------------------------------------
# Parameter init (deterministic; PyTorch kaiming_uniform(a=sqrt(5)) -> U(-1/sqrt(fan_in), ...)).
# Main-path weights are stored transposed (in, out), with the `dims` axis packed along lanes,
# zero-padded to 128-lane multiples, in bfloat16.
# ---------------------------------------------------------------------------
def init_hhn_params(key, *, hin, dims, n_layers, n_units, n_channels, n_classes):
    K = 96 * 96 * n_channels
    U = n_units
    Np = _round_up(U, 128)
    DUp = _round_up(dims * U, 128)
    DCp = _round_up(dims * n_classes, 128)
    n_hidden = n_layers - 1
    ks = jax.random.split(key, 7)

    def uniform(k, shape, bound):
        return jax.random.uniform(k, shape, jnp.float32, -bound, bound)

    p = {}
    # hyper_stack (tiny; kept f32, evaluated as plain JAX glue)
    b1 = 1.0 / math.sqrt(hin)
    p["hw1"] = uniform(ks[0], (hin, 64), b1)
    p["hb1"] = uniform(ks[1], (64,), b1)
    b2 = 1.0 / math.sqrt(64)
    p["hw2"] = uniform(ks[2], (64, dims), b2)
    p["hb2"] = uniform(ks[3], (dims,), b2)

    # fc1 stack: dims x (K, U) -> packed (K, DUp) bf16, lanes [d*U + n]
    w1 = uniform(ks[4], (dims, K, U), 1.0 / math.sqrt(K))
    w1p = w1.transpose(1, 0, 2).reshape(K, dims * U).astype(jnp.bfloat16)
    p["w1p"] = jnp.zeros((K, DUp), jnp.bfloat16).at[:, :dims * U].set(w1p)

    # hidden stacks: n_hidden x dims x (U, U) -> packed (max(n_hidden,1), Np, DUp) bf16
    nh = max(n_hidden, 1)
    whp = jnp.zeros((nh, Np, DUp), jnp.bfloat16)
    if n_hidden > 0:
        wh = uniform(ks[5], (n_hidden, dims, U, U), 1.0 / math.sqrt(U))
        whp = whp.at[:n_hidden, :U, :dims * U].set(
            wh.transpose(0, 2, 1, 3).reshape(n_hidden, U, dims * U).astype(jnp.bfloat16))
    p["whp"] = whp

    # fc2 stack: dims x (U, n_classes) -> packed (Np, DCp) bf16
    w2 = uniform(ks[6], (dims, U, n_classes), 1.0 / math.sqrt(U))
    w2p = w2.transpose(1, 0, 2).reshape(U, dims * n_classes).astype(jnp.bfloat16)
    p["w2p"] = jnp.zeros((Np, DCp), jnp.bfloat16).at[:U, :dims * n_classes].set(w2p)
    return p


# ---------------------------------------------------------------------------
# Forward: tiny hypernet in plain JAX, main path in one fused Pallas kernel.
# ---------------------------------------------------------------------------
def hhn_forward(params, x, hyper_x, *, dims, n_layers, n_units, n_classes):
    # hyper_stack: Linear -> ReLU -> Linear -> Softmax(dim=0)
    hh = jnp.maximum(hyper_x @ params["hw1"] + params["hb1"], 0.0)
    factors = jax.nn.softmax(hh @ params["hw2"] + params["hb2"], axis=0)  # (dims,) f32

    B = x.shape[0]
    x_flat = x.reshape(B, -1)  # torch.flatten(x, start_dim=1) on NCHW, same row-major order
    Cp = _round_up(n_classes, 128)
    n_hidden = n_layers - 1

    out_padded = pl.pallas_call(
        functools.partial(_hhn_fused_kernel, dims=dims, n_hidden=n_hidden,
                          n_units=n_units, n_classes=n_classes),
        out_shape=jax.ShapeDtypeStruct((B, Cp), jnp.float32),
        in_specs=[
            pl.BlockSpec(memory_space=pltpu.MemorySpace.SMEM),   # factors (scalar reads)
            pl.BlockSpec(memory_space=pltpu.MemorySpace.VMEM),   # x_flat
            pl.BlockSpec(memory_space=pltpu.MemorySpace.VMEM),   # fc1 weight stack (packed)
            pl.BlockSpec(memory_space=pltpu.MemorySpace.VMEM),   # hidden weight stacks (packed)
            pl.BlockSpec(memory_space=pltpu.MemorySpace.VMEM),   # fc2 weight stack (packed)
        ],
        out_specs=pl.BlockSpec(memory_space=pltpu.MemorySpace.VMEM),
    )(factors, x_flat, params["w1p"], params["whp"], params["w2p"])
    return out_padded[:, :n_classes]


# Pure-JAX reference mirroring the kernel's numerics (same packed bf16 weights, f32 accum).
def hhn_forward_ref(params, x, hyper_x, *, dims, n_layers, n_units, n_classes):
    hh = jnp.maximum(hyper_x @ params["hw1"] + params["hb1"], 0.0)
    factors = jax.nn.softmax(hh @ params["hw2"] + params["hb2"], axis=0)
    B = x.shape[0]
    U = n_units

    def wsum(a, wp, out_real):
        g = jnp.dot(a.astype(jnp.bfloat16), wp[:a.shape[1]],
                    preferred_element_type=jnp.float32)
        g = g[:, :dims * out_real].reshape(B, dims, out_real)
        return jnp.einsum("bdo,d->bo", g, factors)

    h = jnp.maximum(wsum(x.reshape(B, -1), params["w1p"], U), 0.0)
    for l in range(n_layers - 1):
        y = wsum(h, params["whp"][l], U)
        mean = jnp.mean(y, axis=0, keepdims=True)
        var = jnp.mean((y - mean) ** 2, axis=0, keepdims=True)
        h = jnp.maximum((y - mean) * lax.rsqrt(var + 1e-5), 0.0)
    return wsum(h, params["w2p"], n_classes)


if __name__ == "__main__":
    # Spatial size (96x96) is fixed by the module's fc1 fan-in; other dims kept small.
    dims, n_layers, n_units, n_channels, n_classes, hin = 3, 3, 32, 1, 10, 16
    batch = 8

    key = jax.random.PRNGKey(0)
    kp, kx, kh = jax.random.split(key, 3)
    params = init_hhn_params(kp, hin=hin, dims=dims, n_layers=n_layers,
                             n_units=n_units, n_channels=n_channels, n_classes=n_classes)
    x = jax.random.normal(kx, (batch, n_channels, 96, 96), jnp.float32)   # NCHW
    hyper_x = jax.random.normal(kh, (hin,), jnp.float32)

    fwd = jax.jit(functools.partial(hhn_forward, dims=dims, n_layers=n_layers,
                                    n_units=n_units, n_classes=n_classes))
    logits = jax.block_until_ready(fwd(params, x, hyper_x))

    ref = hhn_forward_ref(params, x, hyper_x, dims=dims, n_layers=n_layers,
                          n_units=n_units, n_classes=n_classes)
    assert logits.shape == (batch, n_classes)
    assert jnp.allclose(logits, ref, atol=5e-3, rtol=5e-3), "mismatch vs JAX reference"

    print("KERNEL_OK")
</pallas_src>

<mosaic_0001>
module attributes {stable_mosaic.version = 11 : i64} {
  func.func @_hhn_fused_kernel(%arg0: memref<3xf32, #tpu.memory_space<smem>>, %arg1: memref<8x9216xf32, #tpu.memory_space<vmem>>, %arg2: memref<9216x128xbf16, #tpu.memory_space<vmem>>, %arg3: memref<2x128x128xbf16, #tpu.memory_space<vmem>>, %arg4: memref<128x128xbf16, #tpu.memory_space<vmem>>, %arg5: memref<8x128xf32, #tpu.memory_space<vmem>>) attributes {dimension_semantics = [], scalar_prefetch = 0 : i64, scratch_operands = 0 : i64, tpu.core_type = #tpu.core_type<tc>} {
    %0 = tpu.iota {dimensions = array<i32: 0>} : vector<128x128xi32>
    %1 = tpu.iota {dimensions = array<i32: 1>} : vector<128x128xi32>
    %cst = arith.constant 0.000000e+00 : f32
    %2 = vector.broadcast %cst : f32 to vector<128x128xf32>
    %c0_i32 = arith.constant 0 : i32
    %3 = vector.broadcast %c0_i32 : i32 to vector<128x128xi32>
    %4 = arith.addi %1, %3 : vector<128x128xi32>
    %5 = arith.cmpi eq, %0, %4 : vector<128x128xi32>
    %c32_i32 = arith.constant 32 : i32
    %6 = vector.broadcast %c32_i32 : i32 to vector<128x128xi32>
    %7 = arith.cmpi slt, %1, %6 : vector<128x128xi32>
    %8 = arith.andi %5, %7 : vector<128x128xi1>
    %c0 = arith.constant 0 : index
    %9 = memref.load %arg0[%c0] : memref<3xf32, #tpu.memory_space<smem>>
    %cst_0 = arith.constant 0.000000e+00 : f32
    %10 = vector.broadcast %9 : f32 to vector<128x128xf32>
    %11 = vector.broadcast %cst_0 : f32 to vector<128x128xf32>
    %12 = arith.select %8, %10, %11 : vector<128x128xi1>, vector<128x128xf32>
    %13 = arith.addf %2, %12 : vector<128x128xf32>
    %c32_i32_1 = arith.constant 32 : i32
    %14 = vector.broadcast %c32_i32_1 : i32 to vector<128x128xi32>
    %15 = arith.addi %1, %14 : vector<128x128xi32>
    %16 = arith.cmpi eq, %0, %15 : vector<128x128xi32>
    %c32_i32_2 = arith.constant 32 : i32
    %17 = vector.broadcast %c32_i32_2 : i32 to vector<128x128xi32>
    %18 = arith.cmpi slt, %1, %17 : vector<128x128xi32>
    %19 = arith.andi %16, %18 : vector<128x128xi1>
    %c1 = arith.constant 1 : index
    %20 = memref.load %arg0[%c1] : memref<3xf32, #tpu.memory_space<smem>>
    %cst_3 = arith.constant 0.000000e+00 : f32
    %21 = vector.broadcast %20 : f32 to vector<128x128xf32>
    %22 = vector.broadcast %cst_3 : f32 to vector<128x128xf32>
    %23 = arith.select %19, %21, %22 : vector<128x128xi1>, vector<128x128xf32>
    %24 = arith.addf %13, %23 : vector<128x128xf32>
    %c64_i32 = arith.constant 64 : i32
    %25 = vector.broadcast %c64_i32 : i32 to vector<128x128xi32>
    %26 = arith.addi %1, %25 : vector<128x128xi32>
    %27 = arith.cmpi eq, %0, %26 : vector<128x128xi32>
    %c32_i32_4 = arith.constant 32 : i32
    %28 = vector.broadcast %c32_i32_4 : i32 to vector<128x128xi32>
    %29 = arith.cmpi slt, %1, %28 : vector<128x128xi32>
    %30 = arith.andi %27, %29 : vector<128x128xi1>
    %c2 = arith.constant 2 : index
    %31 = memref.load %arg0[%c2] : memref<3xf32, #tpu.memory_space<smem>>
    %cst_5 = arith.constant 0.000000e+00 : f32
    %32 = vector.broadcast %31 : f32 to vector<128x128xf32>
    %33 = vector.broadcast %cst_5 : f32 to vector<128x128xf32>
    %34 = arith.select %30, %32, %33 : vector<128x128xi1>, vector<128x128xf32>
    %35 = arith.addf %24, %34 : vector<128x128xf32>
    %36 = tpu.iota {dimensions = array<i32: 0>} : vector<128x128xi32>
    %37 = tpu.iota {dimensions = array<i32: 1>} : vector<128x128xi32>
    %cst_6 = arith.constant 0.000000e+00 : f32
    %38 = vector.broadcast %cst_6 : f32 to vector<128x128xf32>
    %c0_i32_7 = arith.constant 0 : i32
    %39 = vector.broadcast %c0_i32_7 : i32 to vector<128x128xi32>
    %40 = arith.addi %37, %39 : vector<128x128xi32>
    %41 = arith.cmpi eq, %36, %40 : vector<128x128xi32>
    %c10_i32 = arith.constant 10 : i32
    %42 = vector.broadcast %c10_i32 : i32 to vector<128x128xi32>
    %43 = arith.cmpi slt, %37, %42 : vector<128x128xi32>
    %44 = arith.andi %41, %43 : vector<128x128xi1>
    %c0_8 = arith.constant 0 : index
    %45 = memref.load %arg0[%c0_8] : memref<3xf32, #tpu.memory_space<smem>>
    %cst_9 = arith.constant 0.000000e+00 : f32
    %46 = vector.broadcast %45 : f32 to vector<128x128xf32>
    %47 = vector.broadcast %cst_9 : f32 to vector<128x128xf32>
    %48 = arith.select %44, %46, %47 : vector<128x128xi1>, vector<128x128xf32>
    %49 = arith.addf %38, %48 : vector<128x128xf32>
    %c10_i32_10 = arith.constant 10 : i32
    %50 = vector.broadcast %c10_i32_10 : i32 to vector<128x128xi32>
    %51 = arith.addi %37, %50 : vector<128x128xi32>
    %52 = arith.cmpi eq, %36, %51 : vector<128x128xi32>
    %c10_i32_11 = arith.constant 10 : i32
    %53 = vector.broadcast %c10_i32_11 : i32 to vector<128x128xi32>
    %54 = arith.cmpi slt, %37, %53 : vector<128x128xi32>
    %55 = arith.andi %52, %54 : vector<128x128xi1>
    %c1_12 = arith.constant 1 : index
    %56 = memref.load %arg0[%c1_12] : memref<3xf32, #tpu.memory_space<smem>>
    %cst_13 = arith.constant 0.000000e+00 : f32
    %57 = vector.broadcast %56 : f32 to vector<128x128xf32>
    %58 = vector.broadcast %cst_13 : f32 to vector<128x128xf32>
    %59 = arith.select %55, %57, %58 : vector<128x128xi1>, vector<128x128xf32>
    %60 = arith.addf %49, %59 : vector<128x128xf32>
    %c20_i32 = arith.constant 20 : i32
    %61 = vector.broadcast %c20_i32 : i32 to vector<128x128xi32>
    %62 = arith.addi %37, %61 : vector<128x128xi32>
    %63 = arith.cmpi eq, %36, %62 : vector<128x128xi32>
    %c10_i32_14 = arith.constant 10 : i32
    %64 = vector.broadcast %c10_i32_14 : i32 to vector<128x128xi32>
    %65 = arith.cmpi slt, %37, %64 : vector<128x128xi32>
    %66 = arith.andi %63, %65 : vector<128x128xi1>
    %c2_15 = arith.constant 2 : index
    %67 = memref.load %arg0[%c2_15] : memref<3xf32, #tpu.memory_space<smem>>
    %cst_16 = arith.constant 0.000000e+00 : f32
    %68 = vector.broadcast %67 : f32 to vector<128x128xf32>
    %69 = vector.broadcast %cst_16 : f32 to vector<128x128xf32>
    %70 = arith.select %66, %68, %69 : vector<128x128xi1>, vector<128x128xf32>
    %71 = arith.addf %60, %70 : vector<128x128xf32>
    %c0_17 = arith.constant 0 : index
    %c0_18 = arith.constant 0 : index
    %72 = vector.load %arg1[%c0_17, %c0_18] : memref<8x9216xf32, #tpu.memory_space<vmem>>, vector<8x9216xf32>
    %c0_19 = arith.constant 0 : index
    %c0_20 = arith.constant 0 : index
    %73 = vector.load %arg2[%c0_19, %c0_20] : memref<9216x128xbf16, #tpu.memory_space<vmem>>, vector<9216x128xbf16>
    %74 = arith.truncf %72 : vector<8x9216xf32> to vector<8x9216xbf16>
    %cst_21 = arith.constant dense<0.000000e+00> : vector<8x128xf32>
    %75 = tpu.matmul %74, %73, %cst_21 {dimension_numbers = #tpu.dot_dimension_numbers<[1], [0], [0], [1], [0, 0, 1, 1], [], []>} : vector<8x9216xbf16>, vector<9216x128xbf16>, vector<8x128xf32> -> vector<8x128xf32>
    %cst_22 = arith.constant dense<0.000000e+00> : vector<8x128xf32>
    %76 = tpu.matmul %75, %35, %cst_22 {dimension_numbers = #tpu.dot_dimension_numbers<[1], [0], [0], [1], [0, 0, 1, 1], [], []>} : vector<8x128xf32>, vector<128x128xf32>, vector<8x128xf32> -> vector<8x128xf32>
    %cst_23 = arith.constant 0.000000e+00 : f32
    %77 = vector.broadcast %cst_23 : f32 to vector<8x128xf32>
    %78 = arith.maximumf %76, %77 : vector<8x128xf32>
    %c0_24 = arith.constant 0 : index
    %c0_25 = arith.constant 0 : index
    %c0_26 = arith.constant 0 : index
    %79 = vector.load %arg3[%c0_24, %c0_25, %c0_26] : memref<2x128x128xbf16, #tpu.memory_space<vmem>>, vector<1x128x128xbf16>
    %80 = vector.shape_cast %79 : vector<1x128x128xbf16> to vector<128x128xbf16>
    %81 = arith.truncf %78 : vector<8x128xf32> to vector<8x128xbf16>
    %cst_27 = arith.constant dense<0.000000e+00> : vector<8x128xf32>
    %82 = tpu.matmul %81, %80, %cst_27 {dimension_numbers = #tpu.dot_dimension_numbers<[1], [0], [0], [1], [0, 0, 1, 1], [], []>} : vector<8x128xbf16>, vector<128x128xbf16>, vector<8x128xf32> -> vector<8x128xf32>
    %cst_28 = arith.constant dense<0.000000e+00> : vector<8x128xf32>
    %83 = tpu.matmul %82, %35, %cst_28 {dimension_numbers = #tpu.dot_dimension_numbers<[1], [0], [0], [1], [0, 0, 1, 1], [], []>} : vector<8x128xf32>, vector<128x128xf32>, vector<8x128xf32> -> vector<8x128xf32>
    %cst_29 = arith.constant dense<0.000000e+00> : vector<128xf32>
    %84 = vector.multi_reduction <add>, %83, %cst_29 [0] : vector<8x128xf32> to vector<128xf32>
    %85 = vector.shape_cast %84 : vector<128xf32> to vector<1x128xf32>
    %cst_30 = arith.constant 8.000000e+00 : f32
    %86 = vector.broadcast %cst_30 : f32 to vector<1x128xf32>
    %87 = arith.divf %85, %86 : vector<1x128xf32>
    %88 = vector.broadcast %87 : vector<1x128xf32> to vector<8x128xf32>
    %89 = arith.subf %83, %88 : vector<8x128xf32>
    %90 = arith.mulf %89, %89 : vector<8x128xf32>
    %cst_31 = arith.constant dense<0.000000e+00> : vector<128xf32>
    %91 = vector.multi_reduction <add>, %90, %cst_31 [0] : vector<8x128xf32> to vector<128xf32>
    %92 = vector.shape_cast %91 : vector<128xf32> to vector<1x128xf32>
    %cst_32 = arith.constant 8.000000e+00 : f32
    %93 = vector.broadcast %cst_32 : f32 to vector<1x128xf32>
    %94 = arith.divf %92, %93 : vector<1x128xf32>
    %95 = vector.broadcast %87 : vector<1x128xf32> to vector<8x128xf32>
    %96 = arith.subf %83, %95 : vector<8x128xf32>
    %cst_33 = arith.constant 9.99999974E-6 : f32
    %97 = vector.broadcast %cst_33 : f32 to vector<1x128xf32>
    %98 = arith.addf %94, %97 : vector<1x128xf32>
    %99 = math.rsqrt %98 : vector<1x128xf32>
    %100 = vector.broadcast %99 : vector<1x128xf32> to vector<8x128xf32>
    %101 = arith.mulf %96, %100 : vector<8x128xf32>
    %cst_34 = arith.constant 0.000000e+00 : f32
    %102 = vector.broadcast %cst_34 : f32 to vector<8x128xf32>
    %103 = arith.maximumf %101, %102 : vector<8x128xf32>
    %c1_35 = arith.constant 1 : index
    %c0_36 = arith.constant 0 : index
    %c0_37 = arith.constant 0 : index
    %104 = vector.load %arg3[%c1_35, %c0_36, %c0_37] : memref<2x128x128xbf16, #tpu.memory_space<vmem>>, vector<1x128x128xbf16>
    %105 = vector.shape_cast %104 : vector<1x128x128xbf16> to vector<128x128xbf16>
    %106 = arith.truncf %103 : vector<8x128xf32> to vector<8x128xbf16>
    %cst_38 = arith.constant dense<0.000000e+00> : vector<8x128xf32>
    %107 = tpu.matmul %106, %105, %cst_38 {dimension_numbers = #tpu.dot_dimension_numbers<[1], [0], [0], [1], [0, 0, 1, 1], [], []>} : vector<8x128xbf16>, vector<128x128xbf16>, vector<8x128xf32> -> vector<8x128xf32>
    %cst_39 = arith.constant dense<0.000000e+00> : vector<8x128xf32>
    %108 = tpu.matmul %107, %35, %cst_39 {dimension_numbers = #tpu.dot_dimension_numbers<[1], [0], [0], [1], [0, 0, 1, 1], [], []>} : vector<8x128xf32>, vector<128x128xf32>, vector<8x128xf32> -> vector<8x128xf32>
    %cst_40 = arith.constant dense<0.000000e+00> : vector<128xf32>
    %109 = vector.multi_reduction <add>, %108, %cst_40 [0] : vector<8x128xf32> to vector<128xf32>
    %110 = vector.shape_cast %109 : vector<128xf32> to vector<1x128xf32>
    %cst_41 = arith.constant 8.000000e+00 : f32
    %111 = vector.broadcast %cst_41 : f32 to vector<1x128xf32>
    %112 = arith.divf %110, %111 : vector<1x128xf32>
    %113 = vector.broadcast %112 : vector<1x128xf32> to vector<8x128xf32>
    %114 = arith.subf %108, %113 : vector<8x128xf32>
    %115 = arith.mulf %114, %114 : vector<8x128xf32>
    %cst_42 = arith.constant dense<0.000000e+00> : vector<128xf32>
    %116 = vector.multi_reduction <add>, %115, %cst_42 [0] : vector<8x128xf32> to vector<128xf32>
    %117 = vector.shape_cast %116 : vector<128xf32> to vector<1x128xf32>
    %cst_43 = arith.constant 8.000000e+00 : f32
    %118 = vector.broadcast %cst_43 : f32 to vector<1x128xf32>
    %119 = arith.divf %117, %118 : vector<1x128xf32>
    %120 = vector.broadcast %112 : vector<1x128xf32> to vector<8x128xf32>
    %121 = arith.subf %108, %120 : vector<8x128xf32>
    %cst_44 = arith.constant 9.99999974E-6 : f32
    %122 = vector.broadcast %cst_44 : f32 to vector<1x128xf32>
    %123 = arith.addf %119, %122 : vector<1x128xf32>
    %124 = math.rsqrt %123 : vector<1x128xf32>
    %125 = vector.broadcast %124 : vector<1x128xf32> to vector<8x128xf32>
    %126 = arith.mulf %121, %125 : vector<8x128xf32>
    %cst_45 = arith.constant 0.000000e+00 : f32
    %127 = vector.broadcast %cst_45 : f32 to vector<8x128xf32>
    %128 = arith.maximumf %126, %127 : vector<8x128xf32>
    %c0_46 = arith.constant 0 : index
    %c0_47 = arith.constant 0 : index
    %129 = vector.load %arg4[%c0_46, %c0_47] : memref<128x128xbf16, #tpu.memory_space<vmem>>, vector<128x128xbf16>
    %130 = arith.truncf %128 : vector<8x128xf32> to vector<8x128xbf16>
    %cst_48 = arith.constant dense<0.000000e+00> : vector<8x128xf32>
    %131 = tpu.matmul %130, %129, %cst_48 {dimension_numbers = #tpu.dot_dimension_numbers<[1], [0], [0], [1], [0, 0, 1, 1], [], []>} : vector<8x128xbf16>, vector<128x128xbf16>, vector<8x128xf32> -> vector<8x128xf32>
    %cst_49 = arith.constant dense<0.000000e+00> : vector<8x128xf32>
    %132 = tpu.matmul %131, %71, %cst_49 {dimension_numbers = #tpu.dot_dimension_numbers<[1], [0], [0], [1], [0, 0, 1, 1], [], []>} : vector<8x128xf32>, vector<128x128xf32>, vector<8x128xf32> -> vector<8x128xf32>
    %c0_50 = arith.constant 0 : index
    %c0_51 = arith.constant 0 : index
    %133 = vector.load %arg5[%c0_50, %c0_51] : memref<8x128xf32, #tpu.memory_space<vmem>>, vector<8x128xf32>
    tpu.vector_store %arg5[%c0_50, %c0_51], %132 {strides = array<i32>} : memref<8x128xf32, #tpu.memory_space<vmem>>, vector<8x128xf32>,
    return
  }
}

</mosaic_0001>

<llo_original>
// kernel: hhn_forward.1
$region0: #{hhn_forward.1}
  #allocation0 [shape = 'u32[]', space=smem, size = 0x4, offset = 0x4, fixed_abs, tag = 'smem constant byte address 0x4 - core index']
  #allocation1 [shape = 'u32[72,128]{1,0:T(1,128)}', space=vmem, size = 0x9000, scoped, tag = 'internal scratch']
  %s0 = inlined_call_operand.vmem [shape: f32[3], index: 0, kind: input, shape index: {}]
  %s1 = inlined_call_operand.vmem [shape: f32[8,9216], index: 1, kind: input, shape index: {}]
  %s2 = inlined_call_operand.hbm [shape: bf16[9216,128], index: 2, kind: input, shape index: {}]
  %s3 = inlined_call_operand.hbm [shape: bf16[2,128,128], index: 3, kind: input, shape index: {}]
  %s4 = inlined_call_operand.hbm [shape: bf16[128,128], index: 4, kind: input, shape index: {}]
  %s5 = inlined_call_operand.hbm [shape: f32[8,128], index: 5, kind: output, shape index: {}]
  %s6 = sld [smem:[#allocation0]]
  $region46: #{hhn_forward.1} parent=0
    _
  %s8 = ssub.s32 1, %s6
  %s9 = scalar_select 0, %s8, %s6
  $region1: #{hhn_forward.1} parent=0
    #allocation2 [shape = 'u8[512]{0}', space=smem, size = 0x200, scoped, tag = 'input window, operand 0, single buffered']
    #allocation3 [shape = 's32[1]{0}', space=sflag, size = 0x4, scoped, tag = 'scoped memory for hhn_forward.1']
    #allocation4 [shape = 's32[1]{0}', space=sflag, size = 0x4, scoped, tag = 'scoped memory for hhn_forward.1']
    #allocation5 [shape = 's32[1]{0}', space=sflag, size = 0x4, scoped, tag = 'scoped memory for hhn_forward.1']
    #allocation6 [shape = 'u8[2359296]{0}', space=vmem, size = 0x240000, scoped, tag = 'input window, operand 2, single buffered']
    #allocation7 [shape = 'u8[65536]{0}', space=vmem, size = 0x10000, scoped, tag = 'input window, operand 3, single buffered']
    #allocation8 [shape = 's32[1]{0}', space=sflag, size = 0x4, scoped, tag = 'scoped memory for hhn_forward.1']
    #allocation9 [shape = 'u8[32768]{0}', space=vmem, size = 0x8000, scoped, tag = 'input window, operand 4, single buffered']
    #allocation10 [shape = 'u8[4096]{0}', space=vmem, size = 0x1000, scoped, tag = 'output window, operand 0, single buffered']
    %10 = vsyncpa [#allocation5], 0
    %11 = vsyncpa [#allocation3], 0
    %12 = vsyncpa [#allocation8], 0
    %13 = vsyncpa [#allocation4], 0
    // Predicated region
    $region2: #{hhn_forward.1} parent=1 // pred_check
      _
    $region3: #{hhn_forward.1} parent=1 // pred_check_branch
      %15 = sbr.rel (0) target = $region5
    $region4: #{hhn_forward.1} parent=1 // pred_region
      %17 = vsyncadd [#allocation5], 0
      %s19 = sshll.u32 %s0, 4
      %s20 = int_to_ptr.vmem [resolvable:$true] %s19
      %22 = dma.vmem_to_smem %s20, 16, [#allocation2], [#allocation5]
    $region5: #{hhn_forward.1} parent=1 // pred_fallthru
      _
    // Predicated region
    $region6: #{hhn_forward.1} parent=1 // pred_check
      _
    $region7: #{hhn_forward.1} parent=1 // pred_check_branch
      %24 = sbr.rel (0) target = $region9
    $region8: #{hhn_forward.1} parent=1 // pred_region
      _
    $region9: #{hhn_forward.1} parent=1 // pred_fallthru
      _
    // Predicated region
    $region10: #{hhn_forward.1} parent=1 // pred_check
      _
    $region11: #{hhn_forward.1} parent=1 // pred_check_branch
      %26 = sbr.rel (0) target = $region13
    $region12: #{hhn_forward.1} parent=1 // pred_region
      %28 = vsyncadd [#allocation3], 0
      %s29 = sshll.u32 %s2, 4
      %s30 = int_to_ptr.hbm [resolvable:$true] %s29
      %s31 = sshll.u32 [#allocation6], 4
      %s32 = int_to_ptr.vmem [resolvable:$true] %s31
      %37 = dma.hbm_to_vmem [thread:$0]  %s30, 73728, %s32, [#allocation3], 64, 64, 4
    $region13: #{hhn_forward.1} parent=1 // pred_fallthru
      _
    // Predicated region
    $region14: #{hhn_forward.1} parent=1 // pred_check
      _
    $region15: #{hhn_forward.1} parent=1 // pred_check_branch
      %39 = sbr.rel (0) target = $region17
    $region16: #{hhn_forward.1} parent=1 // pred_region
      %41 = vsyncadd [#allocation8], 0
      %s42 = sshll.u32 %s3, 4
      %s43 = int_to_ptr.hbm [resolvable:$true] %s42
      %s44 = sshll.u32 [#allocation7], 4
      %s45 = int_to_ptr.vmem [resolvable:$true] %s44
      %50 = dma.hbm_to_vmem [thread:$0]  %s43, 2048, %s45, [#allocation8], 64, 64, 4
    $region17: #{hhn_forward.1} parent=1 // pred_fallthru
      _
    // Predicated region
    $region18: #{hhn_forward.1} parent=1 // pred_check
      _
    $region19: #{hhn_forward.1} parent=1 // pred_check_branch
      %52 = sbr.rel (0) target = $region21
    $region20: #{hhn_forward.1} parent=1 // pred_region
      %54 = vsyncadd [#allocation8], 0
      %s55 = sshll.u32 %s4, 4
      %s56 = int_to_ptr.hbm [resolvable:$true] %s55
      %s57 = sshll.u32 [#allocation9], 4
      %s58 = int_to_ptr.vmem [resolvable:$true] %s57
      %63 = dma.hbm_to_vmem [thread:$0]  %s56, 1024, %s58, [#allocation8], 64, 64, 4
    $region21: #{hhn_forward.1} parent=1 // pred_fallthru
      _
    // Predicated region
    $region22: #{hhn_forward.1} parent=1 // pred_check
      _
    $region23: #{hhn_forward.1} parent=1 // pred_check_branch
      %65 = sbr.rel (0) target = $region25
    $region24: #{hhn_forward.1} parent=1 // pred_region
      %67 = dma.done [#allocation5], 16
    $region25: #{hhn_forward.1} parent=1 // pred_fallthru
      _
    // Predicated region
    $region26: #{hhn_forward.1} parent=1 // pred_check
      _
    $region27: #{hhn_forward.1} parent=1 // pred_check_branch
      %69 = sbr.rel (0) target = $region29
    $region28: #{hhn_forward.1} parent=1 // pred_region
      %71 = dma.done [#allocation3], 73728
    $region29: #{hhn_forward.1} parent=1 // pred_fallthru
      _
    // Predicated region
    $region30: #{hhn_forward.1} parent=1 // pred_check
      _
    $region31: #{hhn_forward.1} parent=1 // pred_check_branch
      %73 = sbr.rel (0) target = $region33
    $region32: #{hhn_forward.1} parent=1 // pred_region
      %75 = dma.done [#allocation8], 2048
    $region33: #{hhn_forward.1} parent=1 // pred_fallthru
      _
    // Predicated region
    $region34: #{hhn_forward.1} parent=1 // pred_check
      _
    $region35: #{hhn_forward.1} parent=1 // pred_check_branch
      %77 = sbr.rel (0) target = $region37
    $region36: #{hhn_forward.1} parent=1 // pred_region
      %79 = dma.done [#allocation8], 1024
    $region37: #{hhn_forward.1} parent=1 // pred_fallthru
      _
    %80 = sfence
    %v81 = vlaneseq
    %v82 = vshrl.u32 %v81, 7
    %v83 = vadd.s32 %v82, 8
    %v84 = vadd.s32 %v82, 16
    %v85 = vadd.s32 %v82, 24
    %v86 = vadd.s32 %v82, 32
    %v87 = vadd.s32 %v82, 40
    %v88 = vadd.s32 %v82, 48
    %v89 = vadd.s32 %v82, 56
    %v90 = vadd.s32 %v82, 64
    %v91 = vadd.s32 %v82, 72
    %v92 = vadd.s32 %v82, 80
    %v93 = vadd.s32 %v82, 88
    %v94 = vadd.s32 %v82, 96
    %v95 = vadd.s32 %v82, 104
    %v96 = vadd.s32 %v82, 112
    %v97 = vadd.s32 %v82, 120
    %v98 = vlaneseq
    %v99 = vand.u32 %v98, 127
    %vm100 = vcmp.eq.s32.totalorder %v82, %v99
    %vm101 = vcmp.eq.s32.totalorder %v83, %v99
    %vm102 = vcmp.eq.s32.totalorder %v84, %v99
    %vm103 = vcmp.eq.s32.totalorder %v85, %v99
    %vm104 = vcmp.eq.s32.totalorder %v86, %v99
    %vm105 = vcmp.eq.s32.totalorder %v87, %v99
    %vm106 = vcmp.eq.s32.totalorder %v88, %v99
    %vm107 = vcmp.eq.s32.totalorder %v89, %v99
    %vm108 = vcmp.eq.s32.totalorder %v90, %v99
    %vm109 = vcmp.eq.s32.totalorder %v91, %v99
    %vm110 = vcmp.eq.s32.totalorder %v92, %v99
    %vm111 = vcmp.eq.s32.totalorder %v93, %v99
    %vm112 = vcmp.eq.s32.totalorder %v94, %v99
    %vm113 = vcmp.eq.s32.totalorder %v95, %v99
    %vm114 = vcmp.eq.s32.totalorder %v96, %v99
    %vm115 = vcmp.eq.s32.totalorder %v97, %v99
    %vm116 = vcmp.lt.s32.totalorder %v99, 32
    %vm117 = vmand %vm100, %vm116
    %vm118 = vmand %vm101, %vm116
    %vm119 = vmand %vm102, %vm116
    %vm120 = vmand %vm103, %vm116
    %vm121 = vmand %vm104, %vm116
    %vm122 = vmand %vm105, %vm116
    %vm123 = vmand %vm106, %vm116
    %vm124 = vmand %vm107, %vm116
    %vm125 = vmand %vm108, %vm116
    %vm126 = vmand %vm109, %vm116
    %vm127 = vmand %vm110, %vm116
    %vm128 = vmand %vm111, %vm116
    %vm129 = vmand %vm112, %vm116
    %vm130 = vmand %vm113, %vm116
    %vm131 = vmand %vm114, %vm116
    %vm132 = vmand %vm115, %vm116
    %s133 = sld [smem:[#allocation2]]
    %v134 = vstv %s133
    %v135 = vsel %vm117, %v134, 0.0
    %v136 = vsel %vm118, %v134, 0.0
    %v137 = vsel %vm119, %v134, 0.0
    %v138 = vsel %vm120, %v134, 0.0
    %v139 = vsel %vm121, %v134, 0.0
    %v140 = vsel %vm122, %v134, 0.0
    %v141 = vsel %vm123, %v134, 0.0
    %v142 = vsel %vm124, %v134, 0.0
    %v143 = vsel %vm125, %v134, 0.0
    %v144 = vsel %vm126, %v134, 0.0
    %v145 = vsel %vm127, %v134, 0.0
    %v146 = vsel %vm128, %v134, 0.0
    %v147 = vsel %vm129, %v134, 0.0
    %v148 = vsel %vm130, %v134, 0.0
    %v149 = vsel %vm131, %v134, 0.0
    %v150 = vsel %vm132, %v134, 0.0
    %v151 = vadd.f32 %v135, 0.0
    %v152 = vadd.f32 %v136, 0.0
    %v153 = vadd.f32 %v137, 0.0
    %v154 = vadd.f32 %v138, 0.0
    %v155 = vadd.f32 %v139, 0.0
    %v156 = vadd.f32 %v140, 0.0
    %v157 = vadd.f32 %v141, 0.0
    %v158 = vadd.f32 %v142, 0.0
    %v159 = vadd.f32 %v143, 0.0
    %v160 = vadd.f32 %v144, 0.0
    %v161 = vadd.f32 %v145, 0.0
    %v162 = vadd.f32 %v146, 0.0
    %v163 = vadd.f32 %v147, 0.0
    %v164 = vadd.f32 %v148, 0.0
    %v165 = vadd.f32 %v149, 0.0
    %v166 = vadd.f32 %v150, 0.0
    %v167 = vadd.s32 %v99, 32
    %vm168 = vcmp.eq.s32.totalorder %v82, %v167
    %vm169 = vcmp.eq.s32.totalorder %v83, %v167
    %vm170 = vcmp.eq.s32.totalorder %v84, %v167
    %vm171 = vcmp.eq.s32.totalorder %v85, %v167
    %vm172 = vcmp.eq.s32.totalorder %v86, %v167
    %vm173 = vcmp.eq.s32.totalorder %v87, %v167
    %vm174 = vcmp.eq.s32.totalorder %v88, %v167
    %vm175 = vcmp.eq.s32.totalorder %v89, %v167
    %vm176 = vcmp.eq.s32.totalorder %v90, %v167
    %vm177 = vcmp.eq.s32.totalorder %v91, %v167
    %vm178 = vcmp.eq.s32.totalorder %v92, %v167
    %vm179 = vcmp.eq.s32.totalorder %v93, %v167
    %vm180 = vcmp.eq.s32.totalorder %v94, %v167
    %vm181 = vcmp.eq.s32.totalorder %v95, %v167
    %vm182 = vcmp.eq.s32.totalorder %v96, %v167
    %vm183 = vcmp.eq.s32.totalorder %v97, %v167
    %vm184 = vmand %vm168, %vm116
    %vm185 = vmand %vm169, %vm116
    %vm186 = vmand %vm170, %vm116
    %vm187 = vmand %vm171, %vm116
    %vm188 = vmand %vm172, %vm116
    %vm189 = vmand %vm173, %vm116
    %vm190 = vmand %vm174, %vm116
    %vm191 = vmand %vm175, %vm116
    %vm192 = vmand %vm176, %vm116
    %vm193 = vmand %vm177, %vm116
    %vm194 = vmand %vm178, %vm116
    %vm195 = vmand %vm179, %vm116
    %vm196 = vmand %vm180, %vm116
    %vm197 = vmand %vm181, %vm116
    %vm198 = vmand %vm182, %vm116
    %vm199 = vmand %vm183, %vm116
    %s200 = sld [smem:[#allocation2 + $0x1]]
    %v201 = vstv %s200
    %v202 = vsel %vm184, %v201, 0.0
    %v203 = vsel %vm185, %v201, 0.0
    %v204 = vsel %vm186, %v201, 0.0
    %v205 = vsel %vm187, %v201, 0.0
    %v206 = vsel %vm188, %v201, 0.0
    %v207 = vsel %vm189, %v201, 0.0
    %v208 = vsel %vm190, %v201, 0.0
    %v209 = vsel %vm191, %v201, 0.0
    %v210 = vsel %vm192, %v201, 0.0
    %v211 = vsel %vm193, %v201, 0.0
    %v212 = vsel %vm194, %v201, 0.0
    %v213 = vsel %vm195, %v201, 0.0
    %v214 = vsel %vm196, %v201, 0.0
    %v215 = vsel %vm197, %v201, 0.0
    %v216 = vsel %vm198, %v201, 0.0
    %v217 = vsel %vm199, %v201, 0.0
    %v218 = vadd.f32 %v151, %v202
    %v219 = vadd.f32 %v152, %v203
    %v220 = vadd.f32 %v153, %v204
    %v221 = vadd.f32 %v154, %v205
    %v222 = vadd.f32 %v155, %v206
    %v223 = vadd.f32 %v156, %v207
    %v224 = vadd.f32 %v157, %v208
    %v225 = vadd.f32 %v158, %v209
    %v226 = vadd.f32 %v159, %v210
    %v227 = vadd.f32 %v160, %v211
    %v228 = vadd.f32 %v161, %v212
    %v229 = vadd.f32 %v162, %v213
    %v230 = vadd.f32 %v163, %v214
    %v231 = vadd.f32 %v164, %v215
    %v232 = vadd.f32 %v165, %v216
    %v233 = vadd.f32 %v166, %v217
    %v234 = vadd.s32 %v99, 64
    %vm235 = vcmp.eq.s32.totalorder %v82, %v234
    %vm236 = vcmp.eq.s32.totalorder %v83, %v234
    %vm237 = vcmp.eq.s32.totalorder %v84, %v234
    %vm238 = vcmp.eq.s32.totalorder %v85, %v234
    %vm239 = vcmp.eq.s32.totalorder %v86, %v234
    %vm240 = vcmp.eq.s32.totalorder %v87, %v234
    %vm241 = vcmp.eq.s32.totalorder %v88, %v234
    %vm242 = vcmp.eq.s32.totalorder %v89, %v234
    %vm243 = vcmp.eq.s32.totalorder %v90, %v234
    %vm244 = vcmp.eq.s32.totalorder %v91, %v234
    %vm245 = vcmp.eq.s32.totalorder %v92, %v234
    %vm246 = vcmp.eq.s32.totalorder %v93, %v234
    %vm247 = vcmp.eq.s32.totalorder %v94, %v234
    %vm248 = vcmp.eq.s32.totalorder %v95, %v234
    %vm249 = vcmp.eq.s32.totalorder %v96, %v234
    %vm250 = vcmp.eq.s32.totalorder %v97, %v234
    %vm251 = vmand %vm235, %vm116
    %vm252 = vmand %vm236, %vm116
    %vm253 = vmand %vm237, %vm116
    %vm254 = vmand %vm238, %vm116
    %vm255 = vmand %vm239, %vm116
    %vm256 = vmand %vm240, %vm116
    %vm257 = vmand %vm241, %vm116
    %vm258 = vmand %vm242, %vm116
    %vm259 = vmand %vm243, %vm116
    %vm260 = vmand %vm244, %vm116
    %vm261 = vmand %vm245, %vm116
    %vm262 = vmand %vm246, %vm116
    %vm263 = vmand %vm247, %vm116
    %vm264 = vmand %vm248, %vm116
    %vm265 = vmand %vm249, %vm116
    %vm266 = vmand %vm250, %vm116
    %s267 = sld [smem:[#allocation2 + $0x2]]
    %v268 = vstv %s267
    %v269 = vsel %vm251, %v268, 0.0
    %v270 = vsel %vm252, %v268, 0.0
    %v271 = vsel %vm253, %v268, 0.0
    %v272 = vsel %vm254, %v268, 0.0
    %v273 = vsel %vm255, %v268, 0.0
    %v274 = vsel %vm256, %v268, 0.0
    %v275 = vsel %vm257, %v268, 0.0
    %v276 = vsel %vm258, %v268, 0.0
    %v277 = vsel %vm259, %v268, 0.0
    %v278 = vsel %vm260, %v268, 0.0
    %v279 = vsel %vm261, %v268, 0.0
    %v280 = vsel %vm262, %v268, 0.0
    %v281 = vsel %vm263, %v268, 0.0
    %v282 = vsel %vm264, %v268, 0.0
    %v283 = vsel %vm265, %v268, 0.0
    %v284 = vsel %vm266, %v268, 0.0
    %v285 = vadd.f32 %v218, %v269
    %v286 = vadd.f32 %v219, %v270
    %v287 = vadd.f32 %v220, %v271
    %v288 = vadd.f32 %v221, %v272
    %v289 = vadd.f32 %v222, %v273
    %v290 = vadd.f32 %v223, %v274
    %v291 = vadd.f32 %v224, %v275
    %v292 = vadd.f32 %v225, %v276
    %v293 = vadd.f32 %v226, %v277
    %v294 = vadd.f32 %v227, %v278
    %v295 = vadd.f32 %v228, %v279
    %v296 = vadd.f32 %v229, %v280
    %v297 = vadd.f32 %v230, %v281
    %v298 = vadd.f32 %v231, %v282
    %v299 = vadd.f32 %v232, %v283
    %v300 = vadd.f32 %v233, %v284
    %vm301 = vcmp.lt.s32.totalorder %v99, 10
    %vm302 = vmand %vm100, %vm301
    %vm303 = vmand %vm101, %vm301
    %vm304 = vmand %vm102, %vm301
    %vm305 = vmand %vm103, %vm301
    %vm306 = vmand %vm104, %vm301
    %vm307 = vmand %vm105, %vm301
    %vm308 = vmand %vm106, %vm301
    %vm309 = vmand %vm107, %vm301
    %vm310 = vmand %vm108, %vm301
    %vm311 = vmand %vm109, %vm301
    %vm312 = vmand %vm110, %vm301
    %vm313 = vmand %vm111, %vm301
    %vm314 = vmand %vm112, %vm301
    %vm315 = vmand %vm113, %vm301
    %vm316 = vmand %vm114, %vm301
    %vm317 = vmand %vm115, %vm301
    %v318 = vsel %vm302, %v134, 0.0
    %v319 = vsel %vm303, %v134, 0.0
    %v320 = vsel %vm304, %v134, 0.0
    %v321 = vsel %vm305, %v134, 0.0
    %v322 = vsel %vm306, %v134, 0.0
    %v323 = vsel %vm307, %v134, 0.0
    %v324 = vsel %vm308, %v134, 0.0
    %v325 = vsel %vm309, %v134, 0.0
    %v326 = vsel %vm310, %v134, 0.0
    %v327 = vsel %vm311, %v134, 0.0
    %v328 = vsel %vm312, %v134, 0.0
    %v329 = vsel %vm313, %v134, 0.0
    %v330 = vsel %vm314, %v134, 0.0
    %v331 = vsel %vm315, %v134, 0.0
    %v332 = vsel %vm316, %v134, 0.0
    %v333 = vsel %vm317, %v134, 0.0
    %v334 = vadd.f32 %v318, 0.0
    %v335 = vadd.f32 %v319, 0.0
    %v336 = vadd.f32 %v320, 0.0
    %v337 = vadd.f32 %v321, 0.0
    %v338 = vadd.f32 %v322, 0.0
    %v339 = vadd.f32 %v323, 0.0
    %v340 = vadd.f32 %v324, 0.0
    %v341 = vadd.f32 %v325, 0.0
    %v342 = vadd.f32 %v326, 0.0
    %v343 = vadd.f32 %v327, 0.0
    %v344 = vadd.f32 %v328, 0.0
    %v345 = vadd.f32 %v329, 0.0
    %v346 = vadd.f32 %v330, 0.0
    %v347 = vadd.f32 %v331, 0.0
    %v348 = vadd.f32 %v332, 0.0
    %v349 = vadd.f32 %v333, 0.0
    %v350 = vadd.s32 %v99, 10
    %vm351 = vcmp.eq.s32.totalorder %v82, %v350
    %vm352 = vcmp.eq.s32.totalorder %v83, %v350
    %vm353 = vcmp.eq.s32.totalorder %v84, %v350
    %vm354 = vcmp.eq.s32.totalorder %v85, %v350
    %vm355 = vcmp.eq.s32.totalorder %v86, %v350
    %vm356 = vcmp.eq.s32.totalorder %v87, %v350
    %vm357 = vcmp.eq.s32.totalorder %v88, %v350
    %vm358 = vcmp.eq.s32.totalorder %v89, %v350
    %vm359 = vcmp.eq.s32.totalorder %v90, %v350
    %vm360 = vcmp.eq.s32.totalorder %v91, %v350
    %vm361 = vcmp.eq.s32.totalorder %v92, %v350
    %vm362 = vcmp.eq.s32.totalorder %v93, %v350
    %vm363 = vcmp.eq.s32.totalorder %v94, %v350
    %vm364 = vcmp.eq.s32.totalorder %v95, %v350
    %vm365 = vcmp.eq.s32.totalorder %v96, %v350
    %vm366 = vcmp.eq.s32.totalorder %v97, %v350
    %vm367 = vmand %vm351, %vm301
    %vm368 = vmand %vm352, %vm301
    %vm369 = vmand %vm353, %vm301
    %vm370 = vmand %vm354, %vm301
    %vm371 = vmand %vm355, %vm301
    %vm372 = vmand %vm356, %vm301
    %vm373 = vmand %vm357, %vm301
    %vm374 = vmand %vm358, %vm301
    %vm375 = vmand %vm359, %vm301
    %vm376 = vmand %vm360, %vm301
    %vm377 = vmand %vm361, %vm301
    %vm378 = vmand %vm362, %vm301
    %vm379 = vmand %vm363, %vm301
    %vm380 = vmand %vm364, %vm301
    %vm381 = vmand %vm365, %vm301
    %vm382 = vmand %vm366, %vm301
    %v383 = vsel %vm367, %v201, 0.0
    %v384 = vsel %vm368, %v201, 0.0
    %v385 = vsel %vm369, %v201, 0.0
    %v386 = vsel %vm370, %v201, 0.0
    %v387 = vsel %vm371, %v201, 0.0
    %v388 = vsel %vm372, %v201, 0.0
    %v389 = vsel %vm373, %v201, 0.0
    %v390 = vsel %vm374, %v201, 0.0
    %v391 = vsel %vm375, %v201, 0.0
    %v392 = vsel %vm376, %v201, 0.0
    %v393 = vsel %vm377, %v201, 0.0
    %v394 = vsel %vm378, %v201, 0.0
    %v395 = vsel %vm379, %v201, 0.0
    %v396 = vsel %vm380, %v201, 0.0
    %v397 = vsel %vm381, %v201, 0.0
    %v398 = vsel %vm382, %v201, 0.0
    %v399 = vadd.f32 %v334, %v383
    %v400 = vadd.f32 %v335, %v384
    %v401 = vadd.f32 %v336, %v385
    %v402 = vadd.f32 %v337, %v386
    %v403 = vadd.f32 %v338, %v387
    %v404 = vadd.f32 %v339, %v388
    %v405 = vadd.f32 %v340, %v389
    %v406 = vadd.f32 %v341, %v390
    %v407 = vadd.f32 %v342, %v391
    %v408 = vadd.f32 %v343, %v392
    %v409 = vadd.f32 %v344, %v393
    %v410 = vadd.f32 %v345, %v394
    %v411 = vadd.f32 %v346, %v395
    %v412 = vadd.f32 %v347, %v396
    %v413 = vadd.f32 %v348, %v397
    %v414 = vadd.f32 %v349, %v398
    %v415 = vadd.s32 %v99, 20
    %vm416 = vcmp.eq.s32.totalorder %v82, %v415
    %vm417 = vcmp.eq.s32.totalorder %v83, %v415
    %vm418 = vcmp.eq.s32.totalorder %v84, %v415
    %vm419 = vcmp.eq.s32.totalorder %v85, %v415
    %vm420 = vcmp.eq.s32.totalorder %v86, %v415
    %vm421 = vcmp.eq.s32.totalorder %v87, %v415
    %vm422 = vcmp.eq.s32.totalorder %v88, %v415
    %vm423 = vcmp.eq.s32.totalorder %v89, %v415
    %vm424 = vcmp.eq.s32.totalorder %v90, %v415
    %vm425 = vcmp.eq.s32.totalorder %v91, %v415
    %vm426 = vcmp.eq.s32.totalorder %v92, %v415
    %vm427 = vcmp.eq.s32.totalorder %v93, %v415
    %vm428 = vcmp.eq.s32.totalorder %v94, %v415
    %vm429 = vcmp.eq.s32.totalorder %v95, %v415
    %vm430 = vcmp.eq.s32.totalorder %v96, %v415
    %vm431 = vcmp.eq.s32.totalorder %v97, %v415
    %vm432 = vmand %vm416, %vm301
    %vm433 = vmand %vm417, %vm301
    %vm434 = vmand %vm418, %vm301
    %vm435 = vmand %vm419, %vm301
    %vm436 = vmand %vm420, %vm301
    %vm437 = vmand %vm421, %vm301
    %vm438 = vmand %vm422, %vm301
    %vm439 = vmand %vm423, %vm301
    %vm440 = vmand %vm424, %vm301
    %vm441 = vmand %vm425, %vm301
    %vm442 = vmand %vm426, %vm301
    %vm443 = vmand %vm427, %vm301
    %vm444 = vmand %vm428, %vm301
    %vm445 = vmand %vm429, %vm301
    %vm446 = vmand %vm430, %vm301
    %vm447 = vmand %vm431, %vm301
    %v448 = vsel %vm432, %v268, 0.0
    %v449 = vsel %vm433, %v268, 0.0
    %v450 = vsel %vm434, %v268, 0.0
    %v451 = vsel %vm435, %v268, 0.0
    %v452 = vsel %vm436, %v268, 0.0
    %v453 = vsel %vm437, %v268, 0.0
    %v454 = vsel %vm438, %v268, 0.0
    %v455 = vsel %vm439, %v268, 0.0
    %v456 = vsel %vm440, %v268, 0.0
    %v457 = vsel %vm441, %v268, 0.0
    %v458 = vsel %vm442, %v268, 0.0
    %v459 = vsel %vm443, %v268, 0.0
    %v460 = vsel %vm444, %v268, 0.0
    %v461 = vsel %vm445, %v268, 0.0
    %v462 = vsel %vm446, %v268, 0.0
    %v463 = vsel %vm447, %v268, 0.0
    %v464 = vadd.f32 %v399, %v448
    %v465 = vadd.f32 %v400, %v449
    %v466 = vadd.f32 %v401, %v450
    %v467 = vadd.f32 %v402, %v451
    %v468 = vadd.f32 %v403, %v452
    %v469 = vadd.f32 %v404, %v453
    %v470 = vadd.f32 %v405, %v454
    %v471 = vadd.f32 %v406, %v455
    %v472 = vadd.f32 %v407, %v456
    %v473 = vadd.f32 %v408, %v457
    %v474 = vadd.f32 %v409, %v458
    %v475 = vadd.f32 %v410, %v459
    %v476 = vadd.f32 %v411, %v460
    %v477 = vadd.f32 %v412, %v461
    %v478 = vadd.f32 %v413, %v462
    %v479 = vadd.f32 %v414, %v463
    %v480 = vld [vmem:[%s1] sm:$0xff]
    %v481 = vld [vmem:[%s1 + $0x8] sm:$0xff]
    %v482 = vld [vmem:[%s1 + $0x10] sm:$0xff]
    %v483 = vld [vmem:[%s1 + $0x18] sm:$0xff]
    %v484 = vld [vmem:[%s1 + $0x20] sm:$0xff]
    %v485 = vld [vmem:[%s1 + $0x28] sm:$0xff]
    %v486 = vld [vmem:[%s1 + $0x30] sm:$0xff]
    %v487 = vld [vmem:[%s1 + $0x38] sm:$0xff]
    %v488 = vld [vmem:[%s1 + $0x40] sm:$0xff]
    %v489 = vld [vmem:[%s1 + $0x48] sm:$0xff]
    %v490 = vld [vmem:[%s1 + $0x50] sm:$0xff]
    %v491 = vld [vmem:[%s1 + $0x58] sm:$0xff]
    %v492 = vld [vmem:[%s1 + $0x60] sm:$0xff]
    %v493 = vld [vmem:[%s1 + $0x68] sm:$0xff]
    %v494 = vld [vmem:[%s1 + $0x70] sm:$0xff]
    %v495 = vld [vmem:[%s1 + $0x78] sm:$0xff]
    %v496 = vld [vmem:[%s1 + $0x80] sm:$0xff]
    %v497 = vld [vmem:[%s1 + $0x88] sm:$0xff]
    %v498 = vld [vmem:[%s1 + $0x90] sm:$0xff]
    %v499 = vld [vmem:[%s1 + $0x98] sm:$0xff]
    %v500 = vld [vmem:[%s1 + $0xa0] sm:$0xff]
    %v501 = vld [vmem:[%s1 + $0xa8] sm:$0xff]
    %v502 = vld [vmem:[%s1 + $0xb0] sm:$0xff]
    %v503 = vld [vmem:[%s1 + $0xb8] sm:$0xff]
    %v504 = vld [vmem:[%s1 + $0xc0] sm:$0xff]
    %v505 = vld [vmem:[%s1 + $0xc8] sm:$0xff]
    %v506 = vld [vmem:[%s1 + $0xd0] sm:$0xff]
    %v507 = vld [vmem:[%s1 + $0xd8] sm:$0xff]
    %v508 = vld [vmem:[%s1 + $0xe0] sm:$0xff]
    %v509 = vld [vmem:[%s1 + $0xe8] sm:$0xff]
    %v510 = vld [vmem:[%s1 + $0xf0] sm:$0xff]
    %v511 = vld [vmem:[%s1 + $0xf8] sm:$0xff]
    %v512 = vld [vmem:[%s1 + $0x100] sm:$0xff]
    %v513 = vld [vmem:[%s1 + $0x108] sm:$0xff]
    %v514 = vld [vmem:[%s1 + $0x110] sm:$0xff]
    %v515 = vld [vmem:[%s1 + $0x118] sm:$0xff]
    %v516 = vld [vmem:[%s1 + $0x120] sm:$0xff]
    %v517 = vld [vmem:[%s1 + $0x128] sm:$0xff]
    %v518 = vld [vmem:[%s1 + $0x130] sm:$0xff]
    %v519 = vld [vmem:[%s1 + $0x138] sm:$0xff]
    %v520 = vld [vmem:[%s1 + $0x140] sm:$0xff]
    %v521 = vld [vmem:[%s1 + $0x148] sm:$0xff]
    %v522 = vld [vmem:[%s1 + $0x150] sm:$0xff]
    %v523 = vld [vmem:[%s1 + $0x158] sm:$0xff]
    %v524 = vld [vmem:[%s1 + $0x160] sm:$0xff]
    %v525 = vld [vmem:[%s1 + $0x168] sm:$0xff]
    %v526 = vld [vmem:[%s1 + $0x170] sm:$0xff]
    %v527 = vld [vmem:[%s1 + $0x178] sm:$0xff]
    %v528 = vld [vmem:[%s1 + $0x180] sm:$0xff]
    %v529 = vld [vmem:[%s1 + $0x188] sm:$0xff]
    %v530 = vld [vmem:[%s1 + $0x190] sm:$0xff]
    %v531 = vld [vmem:[%s1 + $0x198] sm:$0xff]
    %v532 = vld [vmem:[%s1 + $0x1a0] sm:$0xff]
    %v533 = vld [vmem:[%s1 + $0x1a8] sm:$0xff]
    %v534 = vld [vmem:[%s1 + $0x1b0] sm:$0xff]
    %v535 = vld [vmem:[%s1 + $0x1b8] sm:$0xff]
    %v536 = vld [vmem:[%s1 + $0x1c0] sm:$0xff]
    %v537 = vld [vmem:[%s1 + $0x1c8] sm:$0xff]
    %v538 = vld [vmem:[%s1 + $0x1d0] sm:$0xff]
    %v539 = vld [vmem:[%s1 + $0x1d8] sm:$0xff]
    %v540 = vld [vmem:[%s1 + $0x1e0] sm:$0xff]
    %v541 = vld [vmem:[%s1 + $0x1e8] sm:$0xff]
    %v542 = vld [vmem:[%s1 + $0x1f0] sm:$0xff]
    %v543 = vld [vmem:[%s1 + $0x1f8] sm:$0xff]
    %v544 = vld [vmem:[%s1 + $0x200] sm:$0xff]
    %v545 = vld [vmem:[%s1 + $0x208] sm:$0xff]
    %v546 = vld [vmem:[%s1 + $0x210] sm:$0xff]
    %v547 = vld [vmem:[%s1 + $0x218] sm:$0xff]
    %v548 = vld [vmem:[%s1 + $0x220] sm:$0xff]
    %v549 = vld [vmem:[%s1 + $0x228] sm:$0xff]
    %v550 = vld [vmem:[%s1 + $0x230] sm:$0xff]
    %v551 = vld [vmem:[%s1 + $0x238] sm:$0xff]
    %v552 = vld [vmem:[#allocation6] sm:$0xf]
    %v553 = vld [vmem:[#allocation6 + $0x4] sm:$0xf]
    %v554 = vld [vmem:[#allocation6 + $0x8] sm:$0xf]
    %v555 = vld [vmem:[#allocation6 + $0xc] sm:$0xf]
    %v556 = vld [vmem:[#allocation6 + $0x10] sm:$0xf]
    %v557 = vld [vmem:[#allocation6 + $0x14] sm:$0xf]
    %v558 = vld [vmem:[#allocation6 + $0x18] sm:$0xf]
    %v559 = vld [vmem:[#allocation6 + $0x1c] sm:$0xf]
    %v560 = vld [vmem:[#allocation6 + $0x20] sm:$0xf]
    %v561 = vld [vmem:[#allocation6 + $0x24] sm:$0xf]
    %v562 = vld [vmem:[#allocation6 + $0x28] sm:$0xf]
    %v563 = vld [vmem:[#allocation6 + $0x2c] sm:$0xf]
    %v564 = vld [vmem:[#allocation6 + $0x30] sm:$0xf]
    %v565 = vld [vmem:[#allocation6 + $0x34] sm:$0xf]
    %v566 = vld [vmem:[#allocation6 + $0x38] sm:$0xf]
    %v567 = vld [vmem:[#allocation6 + $0x3c] sm:$0xf]
    %v568 = vld [vmem:[#allocation6 + $0x40] sm:$0xf]
    %v569 = vld [vmem:[#allocation6 + $0x44] sm:$0xf]
    %v570 = vld [vmem:[#allocation6 + $0x48] sm:$0xf]
    %v571 = vld [vmem:[#allocation6 + $0x4c] sm:$0xf]
    %v572 = vld [vmem:[#allocation6 + $0x50] sm:$0xf]
    %v573 = vld [vmem:[#allocation6 + $0x54] sm:$0xf]
    %v574 = vld [vmem:[#allocation6 + $0x58] sm:$0xf]
    %v575 = vld [vmem:[#allocation6 + $0x5c] sm:$0xf]
    %v576 = vld [vmem:[#allocation6 + $0x60] sm:$0xf]
    %v577 = vld [vmem:[#allocation6 + $0x64] sm:$0xf]
    %v578 = vld [vmem:[#allocation6 + $0x68] sm:$0xf]
    %v579 = vld [vmem:[#allocation6 + $0x6c] sm:$0xf]
    %v580 = vld [vmem:[#allocation6 + $0x70] sm:$0xf]
    %v581 = vld [vmem:[#allocation6 + $0x74] sm:$0xf]
    %v582 = vld [vmem:[#allocation6 + $0x78] sm:$0xf]
    %v583 = vld [vmem:[#allocation6 + $0x7c] sm:$0xf]
    %v584 = vld [vmem:[#allocation6 + $0x80] sm:$0xf]
    %v585 = vld [vmem:[#allocation6 + $0x84] sm:$0xf]
    %v586 = vld [vmem:[#allocation6 + $0x88] sm:$0xf]
    %v587 = vld [vmem:[#allocation6 + $0x8c] sm:$0xf]
    %v588 = vld [vmem:[#allocation6 + $0x90] sm:$0xf]
    %v589 = vld [vmem:[#allocation6 + $0x94] sm:$0xf]
    %v590 = vld [vmem:[#allocation6 + $0x98] sm:$0xf]
    %v591 = vld [vmem:[#allocation6 + $0x9c] sm:$0xf]
    %v592 = vld [vmem:[#allocation6 + $0xa0] sm:$0xf]
    %v593 = vld [vmem:[#allocation6 + $0xa4] sm:$0xf]
    %v594 = vld [vmem:[#allocation6 + $0xa8] sm:$0xf]
    %v595 = vld [vmem:[#allocation6 + $0xac] sm:$0xf]
    %v596 = vld [vmem:[#allocation6 + $0xb0] sm:$0xf]
    %v597 = vld [vmem:[#allocation6 + $0xb4] sm:$0xf]
    %v598 = vld [vmem:[#allocation6 + $0xb8] sm:$0xf]
    %v599 = vld [vmem:[#allocation6 + $0xbc] sm:$0xf]
    %v600 = vld [vmem:[#allocation6 + $0xc0] sm:$0xf]
    %v601 = vld [vmem:[#allocation6 + $0xc4] sm:$0xf]
    %v602 = vld [vmem:[#allocation6 + $0xc8] sm:$0xf]
    %v603 = vld [vmem:[#allocation6 + $0xcc] sm:$0xf]
    %v604 = vld [vmem:[#allocation6 + $0xd0] sm:$0xf]
    %v605 = vld [vmem:[#allocation6 + $0xd4] sm:$0xf]
    %v606 = vld [vmem:[#allocation6 + $0xd8] sm:$0xf]
    %v607 = vld [vmem:[#allocation6 + $0xdc] sm:$0xf]
    %v608 = vld [vmem:[#allocation6 + $0xe0] sm:$0xf]
    %v609 = vld [vmem:[#allocation6 + $0xe4] sm:$0xf]
    %v610 = vld [vmem:[#allocation6 + $0xe8] sm:$0xf]
    %v611 = vld [vmem:[#allocation6 + $0xec] sm:$0xf]
    %v612 = vld [vmem:[#allocation6 + $0xf0] sm:$0xf]
    %v613 = vld [vmem:[#allocation6 + $0xf4] sm:$0xf]
    %v614 = vld [vmem:[#allocation6 + $0xf8] sm:$0xf]
    %v615 = vld [vmem:[#allocation6 + $0xfc] sm:$0xf]
    %v616 = vld [vmem:[#allocation6 + $0x100] sm:$0xf]
    %v617 = vld [vmem:[#allocation6 + $0x104] sm:$0xf]
    %v618 = vld [vmem:[#allocation6 + $0x108] sm:$0xf]
    %v619 = vld [vmem:[#allocation6 + $0x10c] sm:$0xf]
    %v620 = vld [vmem:[#allocation6 + $0x110] sm:$0xf]
    %v621 = vld [vmem:[#allocation6 + $0x114] sm:$0xf]
    %v622 = vld [vmem:[#allocation6 + $0x118] sm:$0xf]
    %v623 = vld [vmem:[#allocation6 + $0x11c] sm:$0xf]
    %v624 = vld [vmem:[#allocation6 + $0x120] sm:$0xf]
    %v625 = vld [vmem:[#allocation6 + $0x124] sm:$0xf]
    %v626 = vld [vmem:[#allocation6 + $0x128] sm:$0xf]
    %v627 = vld [vmem:[#allocation6 + $0x12c] sm:$0xf]
    %v628 = vld [vmem:[#allocation6 + $0x130] sm:$0xf]
    %v629 = vld [vmem:[#allocation6 + $0x134] sm:$0xf]
    %v630 = vld [vmem:[#allocation6 + $0x138] sm:$0xf]
    %v631 = vld [vmem:[#allocation6 + $0x13c] sm:$0xf]
    %v632 = vld [vmem:[#allocation6 + $0x140] sm:$0xf]
    %v633 = vld [vmem:[#allocation6 + $0x144] sm:$0xf]
    %v634 = vld [vmem:[#allocation6 + $0x148] sm:$0xf]
    %v635 = vld [vmem:[#allocation6 + $0x14c] sm:$0xf]
    %v636 = vld [vmem:[#allocation6 + $0x150] sm:$0xf]
    %v637 = vld [vmem:[#allocation6 + $0x154] sm:$0xf]
    %v638 = vld [vmem:[#allocation6 + $0x158] sm:$0xf]
    %v639 = vld [vmem:[#allocation6 + $0x15c] sm:$0xf]
    %v640 = vld [vmem:[#allocation6 + $0x160] sm:$0xf]
    %v641 = vld [vmem:[#allocation6 + $0x164] sm:$0xf]
    %v642 = vld [vmem:[#allocation6 + $0x168] sm:$0xf]
    %v643 = vld [vmem:[#allocation6 + $0x16c] sm:$0xf]
    %v644 = vld [vmem:[#allocation6 + $0x170] sm:$0xf]
    %v645 = vld [vmem:[#allocation6 + $0x174] sm:$0xf]
    %v646 = vld [vmem:[#allocation6 + $0x178] sm:$0xf]
    %v647 = vld [vmem:[#allocation6 + $0x17c] sm:$0xf]
    %v648 = vld [vmem:[#allocation6 + $0x180] sm:$0xf]
    %v649 = vld [vmem:[#allocation6 + $0x184] sm:$0xf]
    %v650 = vld [vmem:[#allocation6 + $0x188] sm:$0xf]
    %v651 = vld [vmem:[#allocation6 + $0x18c] sm:$0xf]
    %v652 = vld [vmem:[#allocation6 + $0x190] sm:$0xf]
    %v653 = vld [vmem:[#allocation6 + $0x194] sm:$0xf]
    %v654 = vld [vmem:[#allocation6 + $0x198] sm:$0xf]
    %v655 = vld [vmem:[#allocation6 + $0x19c] sm:$0xf]
    %v656 = vld [vmem:[#allocation6 + $0x1a0] sm:$0xf]
    %v657 = vld [vmem:[#allocation6 + $0x1a4] sm:$0xf]
    %v658 = vld [vmem:[#allocation6 + $0x1a8] sm:$0xf]
    %v659 = vld [vmem:[#allocation6 + $0x1ac] sm:$0xf]
    %v660 = vld [vmem:[#allocation6 + $0x1b0] sm:$0xf]
    %v661 = vld [vmem:[#allocation6 + $0x1b4] sm:$0xf]
    %v662 = vld [vmem:[#allocation6 + $0x1b8] sm:$0xf]
    %v663 = vld [vmem:[#allocation6 + $0x1bc] sm:$0xf]
    %v664 = vld [vmem:[#allocation6 + $0x1c0] sm:$0xf]
    %v665 = vld [vmem:[#allocation6 + $0x1c4] sm:$0xf]
    %v666 = vld [vmem:[#allocation6 + $0x1c8] sm:$0xf]
    %v667 = vld [vmem:[#allocation6 + $0x1cc] sm:$0xf]
    %v668 = vld [vmem:[#allocation6 + $0x1d0] sm:$0xf]
    %v669 = vld [vmem:[#allocation6 + $0x1d4] sm:$0xf]
    %v670 = vld [vmem:[#allocation6 + $0x1d8] sm:$0xf]
    %v671 = vld [vmem:[#allocation6 + $0x1dc] sm:$0xf]
    %v672 = vld [vmem:[#allocation6 + $0x1e0] sm:$0xf]
    %v673 = vld [vmem:[#allocation6 + $0x1e4] sm:$0xf]
    %v674 = vld [vmem:[#allocation6 + $0x1e8] sm:$0xf]
    %v675 = vld [vmem:[#allocation6 + $0x1ec] sm:$0xf]
    %v676 = vld [vmem:[#allocation6 + $0x1f0] sm:$0xf]
    %v677 = vld [vmem:[#allocation6 + $0x1f4] sm:$0xf]
    %v678 = vld [vmem:[#allocation6 + $0x1f8] sm:$0xf]
    %v679 = vld [vmem:[#allocation6 + $0x1fc] sm:$0xf]
    %v680 = vld [vmem:[#allocation6 + $0x200] sm:$0xf]
    %v681 = vld [vmem:[#allocation6 + $0x204] sm:$0xf]
    %v682 = vld [vmem:[#allocation6 + $0x208] sm:$0xf]
    %v683 = vld [vmem:[#allocation6 + $0x20c] sm:$0xf]
    %v684 = vld [vmem:[#allocation6 + $0x210] sm:$0xf]
    %v685 = vld [vmem:[#allocation6 + $0x214] sm:$0xf]
    %v686 = vld [vmem:[#allocation6 + $0x218] sm:$0xf]
    %v687 = vld [vmem:[#allocation6 + $0x21c] sm:$0xf]
    %v688 = vld [vmem:[#allocation6 + $0x220] sm:$0xf]
    %v689 = vld [vmem:[#allocation6 + $0x224] sm:$0xf]
    %v690 = vld [vmem:[#allocation6 + $0x228] sm:$0xf]
    %v691 = vld [vmem:[#allocation6 + $0x22c] sm:$0xf]
    %v692 = vld [vmem:[#allocation6 + $0x230] sm:$0xf]
    %v693 = vld [vmem:[#allocation6 + $0x234] sm:$0xf]
    %v694 = vld [vmem:[#allocation6 + $0x238] sm:$0xf]
    %v695 = vld [vmem:[#allocation6 + $0x23c] sm:$0xf]
    %v696 = vld [vmem:[#allocation6 + $0x240] sm:$0xf]
    %v697 = vld [vmem:[#allocation6 + $0x244] sm:$0xf]
    %v698 = vld [vmem:[#allocation6 + $0x248] sm:$0xf]
    %v699 = vld [vmem:[#allocation6 + $0x24c] sm:$0xf]
    %v700 = vld [vmem:[#allocation6 + $0x250] sm:$0xf]
    %v701 = vld [vmem:[#allocation6 + $0x254] sm:$0xf]
    %v702 = vld [vmem:[#allocation6 + $0x258] sm:$0xf]
    %v703 = vld [vmem:[#allocation6 + $0x25c] sm:$0xf]
    %v704 = vld [vmem:[#allocation6 + $0x260] sm:$0xf]
    %v705 = vld [vmem:[#allocation6 + $0x264] sm:$0xf]
    %v706 = vld [vmem:[#allocation6 + $0x268] sm:$0xf]
    %v707 = vld [vmem:[#allocation6 + $0x26c] sm:$0xf]
    %v708 = vld [vmem:[#allocation6 + $0x270] sm:$0xf]
    %v709 = vld [vmem:[#allocation6 + $0x274] sm:$0xf]
    %v710 = vld [vmem:[#allocation6 + $0x278] sm:$0xf]
    %v711 = vld [vmem:[#allocation6 + $0x27c] sm:$0xf]
    %v712 = vld [vmem:[#allocation6 + $0x280] sm:$0xf]
    %v713 = vld [vmem:[#allocation6 + $0x284] sm:$0xf]
    %v714 = vld [vmem:[#allocation6 + $0x288] sm:$0xf]
    %v715 = vld [vmem:[#allocation6 + $0x28c] sm:$0xf]
    %v716 = vld [vmem:[#allocation6 + $0x290] sm:$0xf]
    %v717 = vld [vmem:[#allocation6 + $0x294] sm:$0xf]
    %v718 = vld [vmem:[#allocation6 + $0x298] sm:$0xf]
    %v719 = vld [vmem:[#allocation6 + $0x29c] sm:$0xf]
    %v720 = vld [vmem:[#allocation6 + $0x2a0] sm:$0xf]
    %v721 = vld [vmem:[#allocation6 + $0x2a4] sm:$0xf]
    %v722 = vld [vmem:[#allocation6 + $0x2a8] sm:$0xf]
    %v723 = vld [vmem:[#allocation6 + $0x2ac] sm:$0xf]
    %v724 = vld [vmem:[#allocation6 + $0x2b0] sm:$0xf]
    %v725 = vld [vmem:[#allocation6 + $0x2b4] sm:$0xf]
    %v726 = vld [vmem:[#allocation6 + $0x2b8] sm:$0xf]
    %v727 = vld [vmem:[#allocation6 + $0x2bc] sm:$0xf]
    %v728 = vld [vmem:[#allocation6 + $0x2c0] sm:$0xf]
    %v729 = vld [vmem:[#allocation6 + $0x2c4] sm:$0xf]
    %v730 = vld [vmem:[#allocation6 + $0x2c8] sm:$0xf]
    %v731 = vld [vmem:[#allocation6 + $0x2cc] sm:$0xf]
    %v732 = vld [vmem:[#allocation6 + $0x2d0] sm:$0xf]
    %v733 = vld [vmem:[#allocation6 + $0x2d4] sm:$0xf]
    %v734 = vld [vmem:[#allocation6 + $0x2d8] sm:$0xf]
    %v735 = vld [vmem:[#allocation6 + $0x2dc] sm:$0xf]
    %v736 = vld [vmem:[#allocation6 + $0x2e0] sm:$0xf]
    %v737 = vld [vmem:[#allocation6 + $0x2e4] sm:$0xf]
    %v738 = vld [vmem:[#allocation6 + $0x2e8] sm:$0xf]
    %v739 = vld [vmem:[#allocation6 + $0x2ec] sm:$0xf]
    %v740 = vld [vmem:[#allocation6 + $0x2f0] sm:$0xf]
    %v741 = vld [vmem:[#allocation6 + $0x2f4] sm:$0xf]
    %v742 = vld [vmem:[#allocation6 + $0x2f8] sm:$0xf]
    %v743 = vld [vmem:[#allocation6 + $0x2fc] sm:$0xf]
    %v744 = vld [vmem:[#allocation6 + $0x300] sm:$0xf]
    %v745 = vld [vmem:[#allocation6 + $0x304] sm:$0xf]
    %v746 = vld [vmem:[#allocation6 + $0x308] sm:$0xf]
    %v747 = vld [vmem:[#allocation6 + $0x30c] sm:$0xf]
    %v748 = vld [vmem:[#allocation6 + $0x310] sm:$0xf]
    %v749 = vld [vmem:[#allocation6 + $0x314] sm:$0xf]
    %v750 = vld [vmem:[#allocation6 + $0x318] sm:$0xf]
    %v751 = vld [vmem:[#allocation6 + $0x31c] sm:$0xf]
    %v752 = vld [vmem:[#allocation6 + $0x320] sm:$0xf]
    %v753 = vld [vmem:[#allocation6 + $0x324] sm:$0xf]
    %v754 = vld [vmem:[#allocation6 + $0x328] sm:$0xf]
    %v755 = vld [vmem:[#allocation6 + $0x32c] sm:$0xf]
    %v756 = vld [vmem:[#allocation6 + $0x330] sm:$0xf]
    %v757 = vld [vmem:[#allocation6 + $0x334] sm:$0xf]
    %v758 = vld [vmem:[#allocation6 + $0x338] sm:$0xf]
    %v759 = vld [vmem:[#allocation6 + $0x33c] sm:$0xf]
    %v760 = vld [vmem:[#allocation6 + $0x340] sm:$0xf]
    %v761 = vld [vmem:[#allocation6 + $0x344] sm:$0xf]
    %v762 = vld [vmem:[#allocation6 + $0x348] sm:$0xf]
    %v763 = vld [vmem:[#allocation6 + $0x34c] sm:$0xf]
    %v764 = vld [vmem:[#allocation6 + $0x350] sm:$0xf]
    %v765 = vld [vmem:[#allocation6 + $0x354] sm:$0xf]
    %v766 = vld [vmem:[#allocation6 + $0x358] sm:$0xf]
    %v767 = vld [vmem:[#allocation6 + $0x35c] sm:$0xf]
    %v768 = vld [vmem:[#allocation6 + $0x360] sm:$0xf]
    %v769 = vld [vmem:[#allocation6 + $0x364] sm:$0xf]
    %v770 = vld [vmem:[#allocation6 + $0x368] sm:$0xf]
    %v771 = vld [vmem:[#allocation6 + $0x36c] sm:$0xf]
    %v772 = vld [vmem:[#allocation6 + $0x370] sm:$0xf]
    %v773 = vld [vmem:[#allocation6 + $0x374] sm:$0xf]
    %v774 = vld [vmem:[#allocation6 + $0x378] sm:$0xf]
    %v775 = vld [vmem:[#allocation6 + $0x37c] sm:$0xf]
    %v776 = vld [vmem:[#allocation6 + $0x380] sm:$0xf]
    %v777 = vld [vmem:[#allocation6 + $0x384] sm:$0xf]
    %v778 = vld [vmem:[#allocation6 + $0x388] sm:$0xf]
    %v779 = vld [vmem:[#allocation6 + $0x38c] sm:$0xf]
    %v780 = vld [vmem:[#allocation6 + $0x390] sm:$0xf]
    %v781 = vld [vmem:[#allocation6 + $0x394] sm:$0xf]
    %v782 = vld [vmem:[#allocation6 + $0x398] sm:$0xf]
    %v783 = vld [vmem:[#allocation6 + $0x39c] sm:$0xf]
    %v784 = vld [vmem:[#allocation6 + $0x3a0] sm:$0xf]
    %v785 = vld [vmem:[#allocation6 + $0x3a4] sm:$0xf]
    %v786 = vld [vmem:[#allocation6 + $0x3a8] sm:$0xf]
    %v787 = vld [vmem:[#allocation6 + $0x3ac] sm:$0xf]
    %v788 = vld [vmem:[#allocation6 + $0x3b0] sm:$0xf]
    %v789 = vld [vmem:[#allocation6 + $0x3b4] sm:$0xf]
    %v790 = vld [vmem:[#allocation6 + $0x3b8] sm:$0xf]
    %v791 = vld [vmem:[#allocation6 + $0x3bc] sm:$0xf]
    %v792 = vld [vmem:[#allocation6 + $0x3c0] sm:$0xf]
    %v793 = vld [vmem:[#allocation6 + $0x3c4] sm:$0xf]
    %v794 = vld [vmem:[#allocation6 + $0x3c8] sm:$0xf]
    %v795 = vld [vmem:[#allocation6 + $0x3cc] sm:$0xf]
    %v796 = vld [vmem:[#allocation6 + $0x3d0] sm:$0xf]
    %v797 = vld [vmem:[#allocation6 + $0x3d4] sm:$0xf]
    %v798 = vld [vmem:[#allocation6 + $0x3d8] sm:$0xf]
    %v799 = vld [vmem:[#allocation6 + $0x3dc] sm:$0xf]
    %v800 = vld [vmem:[#allocation6 + $0x3e0] sm:$0xf]
    %v801 = vld [vmem:[#allocation6 + $0x3e4] sm:$0xf]
    %v802 = vld [vmem:[#allocation6 + $0x3e8] sm:$0xf]
    %v803 = vld [vmem:[#allocation6 + $0x3ec] sm:$0xf]
    %v804 = vld [vmem:[#allocation6 + $0x3f0] sm:$0xf]
    %v805 = vld [vmem:[#allocation6 + $0x3f4] sm:$0xf]
    %v806 = vld [vmem:[#allocation6 + $0x3f8] sm:$0xf]
    %v807 = vld [vmem:[#allocation6 + $0x3fc] sm:$0xf]
    %v808 = vld [vmem:[#allocation6 + $0x400] sm:$0xf]
    %v809 = vld [vmem:[#allocation6 + $0x404] sm:$0xf]
    %v810 = vld [vmem:[#allocation6 + $0x408] sm:$0xf]
    %v811 = vld [vmem:[#allocation6 + $0x40c] sm:$0xf]
    %v812 = vld [vmem:[#allocation6 + $0x410] sm:$0xf]
    %v813 = vld [vmem:[#allocation6 + $0x414] sm:$0xf]
    %v814 = vld [vmem:[#allocation6 + $0x418] sm:$0xf]
    %v815 = vld [vmem:[#allocation6 + $0x41c] sm:$0xf]
    %v816 = vld [vmem:[#allocation6 + $0x420] sm:$0xf]
    %v817 = vld [vmem:[#allocation6 + $0x424] sm:$0xf]
    %v818 = vld [vmem:[#allocation6 + $0x428] sm:$0xf]
    %v819 = vld [vmem:[#allocation6 + $0x42c] sm:$0xf]
    %v820 = vld [vmem:[#allocation6 + $0x430] sm:$0xf]
    %v821 = vld [vmem:[#allocation6 + $0x434] sm:$0xf]
    %v822 = vld [vmem:[#allocation6 + $0x438] sm:$0xf]
    %v823 = vld [vmem:[#allocation6 + $0x43c] sm:$0xf]
    %v824 = vld [vmem:[#allocation6 + $0x440] sm:$0xf]
    %v825 = vld [vmem:[#allocation6 + $0x444] sm:$0xf]
    %v826 = vld [vmem:[#allocation6 + $0x448] sm:$0xf]
    %v827 = vld [vmem:[#allocation6 + $0x44c] sm:$0xf]
    %v828 = vld [vmem:[#allocation6 + $0x450] sm:$0xf]
    %v829 = vld [vmem:[#allocation6 + $0x454] sm:$0xf]
    %v830 = vld [vmem:[#allocation6 + $0x458] sm:$0xf]
    %v831 = vld [vmem:[#allocation6 + $0x45c] sm:$0xf]
    %v832 = vld [vmem:[#allocation6 + $0x460] sm:$0xf]
    %v833 = vld [vmem:[#allocation6 + $0x464] sm:$0xf]
    %v834 = vld [vmem:[#allocation6 + $0x468] sm:$0xf]
    %v835 = vld [vmem:[#allocation6 + $0x46c] sm:$0xf]
    %v836 = vld [vmem:[#allocation6 + $0x470] sm:$0xf]
    %v837 = vld [vmem:[#allocation6 + $0x474] sm:$0xf]
    %v838 = vld [vmem:[#allocation6 + $0x478] sm:$0xf]
    %v839 = vld [vmem:[#allocation6 + $0x47c] sm:$0xf]
    %v840 = vld [vmem:[#allocation6 + $0x480] sm:$0xf]
    %v841 = vld [vmem:[#allocation6 + $0x484] sm:$0xf]
    %v842 = vld [vmem:[#allocation6 + $0x488] sm:$0xf]
    %v843 = vld [vmem:[#allocation6 + $0x48c] sm:$0xf]
    %v844 = vld [vmem:[#allocation6 + $0x490] sm:$0xf]
    %v845 = vld [vmem:[#allocation6 + $0x494] sm:$0xf]
    %v846 = vld [vmem:[#allocation6 + $0x498] sm:$0xf]
    %v847 = vld [vmem:[#allocation6 + $0x49c] sm:$0xf]
    %v848 = vld [vmem:[#allocation6 + $0x4a0] sm:$0xf]
    %v849 = vld [vmem:[#allocation6 + $0x4a4] sm:$0xf]
    %v850 = vld [vmem:[#allocation6 + $0x4a8] sm:$0xf]
    %v851 = vld [vmem:[#allocation6 + $0x4ac] sm:$0xf]
    %v852 = vld [vmem:[#allocation6 + $0x4b0] sm:$0xf]
    %v853 = vld [vmem:[#allocation6 + $0x4b4] sm:$0xf]
    %v854 = vld [vmem:[#allocation6 + $0x4b8] sm:$0xf]
    %v855 = vld [vmem:[#allocation6 + $0x4bc] sm:$0xf]
    %v856 = vld [vmem:[#allocation6 + $0x4c0] sm:$0xf]
    %v857 = vld [vmem:[#allocation6 + $0x4c4] sm:$0xf]
    %v858 = vld [vmem:[#allocation6 + $0x4c8] sm:$0xf]
    %v859 = vld [vmem:[#allocation6 + $0x4cc] sm:$0xf]
    %v860 = vld [vmem:[#allocation6 + $0x4d0] sm:$0xf]
    %v861 = vld [vmem:[#allocation6 + $0x4d4] sm:$0xf]
    %v862 = vld [vmem:[#allocation6 + $0x4d8] sm:$0xf]
    %v863 = vld [vmem:[#allocation6 + $0x4dc] sm:$0xf]
    %v864 = vld [vmem:[#allocation6 + $0x4e0] sm:$0xf]
    %v865 = vld [vmem:[#allocation6 + $0x4e4] sm:$0xf]
    %v866 = vld [vmem:[#allocation6 + $0x4e8] sm:$0xf]
    %v867 = vld [vmem:[#allocation6 + $0x4ec] sm:$0xf]
    %v868 = vld [vmem:[#allocation6 + $0x4f0] sm:$0xf]
    %v869 = vld [vmem:[#allocation6 + $0x4f4] sm:$0xf]
    %v870 = vld [vmem:[#allocation6 + $0x4f8] sm:$0xf]
    %v871 = vld [vmem:[#allocation6 + $0x4fc] sm:$0xf]
    %v872 = vld [vmem:[#allocation6 + $0x500] sm:$0xf]
    %v873 = vld [vmem:[#allocation6 + $0x504] sm:$0xf]
    %v874 = vld [vmem:[#allocation6 + $0x508] sm:$0xf]
    %v875 = vld [vmem:[#allocation6 + $0x50c] sm:$0xf]
    %v876 = vld [vmem:[#allocation6 + $0x510] sm:$0xf]
    %v877 = vld [vmem:[#allocation6 + $0x514] sm:$0xf]
    %v878 = vld [vmem:[#allocation6 + $0x518] sm:$0xf]
    %v879 = vld [vmem:[#allocation6 + $0x51c] sm:$0xf]
    %v880 = vld [vmem:[#allocation6 + $0x520] sm:$0xf]
    %v881 = vld [vmem:[#allocation6 + $0x524] sm:$0xf]
    %v882 = vld [vmem:[#allocation6 + $0x528] sm:$0xf]
    %v883 = vld [vmem:[#allocation6 + $0x52c] sm:$0xf]
    %v884 = vld [vmem:[#allocation6 + $0x530] sm:$0xf]
    %v885 = vld [vmem:[#allocation6 + $0x534] sm:$0xf]
    %v886 = vld [vmem:[#allocation6 + $0x538] sm:$0xf]
    %v887 = vld [vmem:[#allocation6 + $0x53c] sm:$0xf]
    %v888 = vld [vmem:[#allocation6 + $0x540] sm:$0xf]
    %v889 = vld [vmem:[#allocation6 + $0x544] sm:$0xf]
    %v890 = vld [vmem:[#allocation6 + $0x548] sm:$0xf]
    %v891 = vld [vmem:[#allocation6 + $0x54c] sm:$0xf]
    %v892 = vld [vmem:[#allocation6 + $0x550] sm:$0xf]
    %v893 = vld [vmem:[#allocation6 + $0x554] sm:$0xf]
    %v894 = vld [vmem:[#allocation6 + $0x558] sm:$0xf]
    %v895 = vld [vmem:[#allocation6 + $0x55c] sm:$0xf]
    %v896 = vld [vmem:[#allocation6 + $0x560] sm:$0xf]
    %v897 = vld [vmem:[#allocation6 + $0x564] sm:$0xf]
    %v898 = vld [vmem:[#allocation6 + $0x568] sm:$0xf]
    %v899 = vld [vmem:[#allocation6 + $0x56c] sm:$0xf]
    %v900 = vld [vmem:[#allocation6 + $0x570] sm:$0xf]
    %v901 = vld [vmem:[#allocation6 + $0x574] sm:$0xf]
    %v902 = vld [vmem:[#allocation6 + $0x578] sm:$0xf]
    %v903 = vld [vmem:[#allocation6 + $0x57c] sm:$0xf]
    %v904 = vld [vmem:[#allocation6 + $0x580] sm:$0xf]
    %v905 = vld [vmem:[#allocation6 + $0x584] sm:$0xf]
    %v906 = vld [vmem:[#allocation6 + $0x588] sm:$0xf]
    %v907 = vld [vmem:[#allocation6 + $0x58c] sm:$0xf]
    %v908 = vld [vmem:[#allocation6 + $0x590] sm:$0xf]
    %v909 = vld [vmem:[#allocation6 + $0x594] sm:$0xf]
    %v910 = vld [vmem:[#allocation6 + $0x598] sm:$0xf]
    %v911 = vld [vmem:[#allocation6 + $0x59c] sm:$0xf]
    %v912 = vld [vmem:[#allocation6 + $0x5a0] sm:$0xf]
    %v913 = vld [vmem:[#allocation6 + $0x5a4] sm:$0xf]
    %v914 = vld [vmem:[#allocation6 + $0x5a8] sm:$0xf]
    %v915 = vld [vmem:[#allocation6 + $0x5ac] sm:$0xf]
    %v916 = vld [vmem:[#allocation6 + $0x5b0] sm:$0xf]
    %v917 = vld [vmem:[#allocation6 + $0x5b4] sm:$0xf]
    %v918 = vld [vmem:[#allocation6 + $0x5b8] sm:$0xf]
    %v919 = vld [vmem:[#allocation6 + $0x5bc] sm:$0xf]
    %v920 = vld [vmem:[#allocation6 + $0x5c0] sm:$0xf]
    %v921 = vld [vmem:[#allocation6 + $0x5c4] sm:$0xf]
    %v922 = vld [vmem:[#allocation6 + $0x5c8] sm:$0xf]
    %v923 = vld [vmem:[#allocation6 + $0x5cc] sm:$0xf]
    %v924 = vld [vmem:[#allocation6 + $0x5d0] sm:$0xf]
    %v925 = vld [vmem:[#allocation6 + $0x5d4] sm:$0xf]
    %v926 = vld [vmem:[#allocation6 + $0x5d8] sm:$0xf]
    %v927 = vld [vmem:[#allocation6 + $0x5dc] sm:$0xf]
    %v928 = vld [vmem:[#allocation6 + $0x5e0] sm:$0xf]
    %v929 = vld [vmem:[#allocation6 + $0x5e4] sm:$0xf]
    %v930 = vld [vmem:[#allocation6 + $0x5e8] sm:$0xf]
    %v931 = vld [vmem:[#allocation6 + $0x5ec] sm:$0xf]
    %v932 = vld [vmem:[#allocation6 + $0x5f0] sm:$0xf]
    %v933 = vld [vmem:[#allocation6 + $0x5f4] sm:$0xf]
    %v934 = vld [vmem:[#allocation6 + $0x5f8] sm:$0xf]
    %v935 = vld [vmem:[#allocation6 + $0x5fc] sm:$0xf]
    %v936 = vld [vmem:[#allocation6 + $0x600] sm:$0xf]
    %v937 = vld [vmem:[#allocation6 + $0x604] sm:$0xf]
    %v938 = vld [vmem:[#allocation6 + $0x608] sm:$0xf]
    %v939 = vld [vmem:[#allocation6 + $0x60c] sm:$0xf]
    %v940 = vld [vmem:[#allocation6 + $0x610] sm:$0xf]
    %v941 = vld [vmem:[#allocation6 + $0x614] sm:$0xf]
    %v942 = vld [vmem:[#allocation6 + $0x618] sm:$0xf]
    %v943 = vld [vmem:[#allocation6 + $0x61c] sm:$0xf]
    %v944 = vld [vmem:[#allocation6 + $0x620] sm:$0xf]
    %v945 = vld [vmem:[#allocation6 + $0x624] sm:$0xf]
    %v946 = vld [vmem:[#allocation6 + $0x628] sm:$0xf]
    %v947 = vld [vmem:[#allocation6 + $0x62c] sm:$0xf]
    %v948 = vld [vmem:[#allocation6 + $0x630] sm:$0xf]
    %v949 = vld [vmem:[#allocation6 + $0x634] sm:$0xf]
    %v950 = vld [vmem:[#allocation6 + $0x638] sm:$0xf]
    %v951 = vld [vmem:[#allocation6 + $0x63c] sm:$0xf]
    %v952 = vld [vmem:[#allocation6 + $0x640] sm:$0xf]
    %v953 = vld [vmem:[#allocation6 + $0x644] sm:$0xf]
    %v954 = vld [vmem:[#allocation6 + $0x648] sm:$0xf]
    %v955 = vld [vmem:[#allocation6 + $0x64c] sm:$0xf]
    %v956 = vld [vmem:[#allocation6 + $0x650] sm:$0xf]
    %v957 = vld [vmem:[#allocation6 + $0x654] sm:$0xf]
    %v958 = vld [vmem:[#allocation6 + $0x658] sm:$0xf]
    %v959 = vld [vmem:[#allocation6 + $0x65c] sm:$0xf]
    %v960 = vld [vmem:[#allocation6 + $0x660] sm:$0xf]
    %v961 = vld [vmem:[#allocation6 + $0x664] sm:$0xf]
    %v962 = vld [vmem:[#allocation6 + $0x668] sm:$0xf]
    %v963 = vld [vmem:[#allocation6 + $0x66c] sm:$0xf]
    %v964 = vld [vmem:[#allocation6 + $0x670] sm:$0xf]
    %v965 = vld [vmem:[#allocation6 + $0x674] sm:$0xf]
    %v966 = vld [vmem:[#allocation6 + $0x678] sm:$0xf]
    %v967 = vld [vmem:[#allocation6 + $0x67c] sm:$0xf]
    %v968 = vld [vmem:[#allocation6 + $0x680] sm:$0xf]
    %v969 = vld [vmem:[#allocation6 + $0x684] sm:$0xf]
    %v970 = vld [vmem:[#allocation6 + $0x688] sm:$0xf]
    %v971 = vld [vmem:[#allocation6 + $0x68c] sm:$0xf]
    %v972 = vld [vmem:[#allocation6 + $0x690] sm:$0xf]
    %v973 = vld [vmem:[#allocation6 + $0x694] sm:$0xf]
    %v974 = vld [vmem:[#allocation6 + $0x698] sm:$0xf]
    %v975 = vld [vmem:[#allocation6 + $0x69c] sm:$0xf]
    %v976 = vld [vmem:[#allocation6 + $0x6a0] sm:$0xf]
    %v977 = vld [vmem:[#allocation6 + $0x6a4] sm:$0xf]
    %v978 = vld [vmem:[#allocation6 + $0x6a8] sm:$0xf]
    %v979 = vld [vmem:[#allocation6 + $0x6ac] sm:$0xf]
    %v980 = vld [vmem:[#allocation6 + $0x6b0] sm:$0xf]
    %v981 = vld [vmem:[#allocation6 + $0x6b4] sm:$0xf]
    %v982 = vld [vmem:[#allocation6 + $0x6b8] sm:$0xf]
    %v983 = vld [vmem:[#allocation6 + $0x6bc] sm:$0xf]
    %v984 = vld [vmem:[#allocation6 + $0x6c0] sm:$0xf]
    %v985 = vld [vmem:[#allocation6 + $0x6c4] sm:$0xf]
    %v986 = vld [vmem:[#allocation6 + $0x6c8] sm:$0xf]
    %v987 = vld [vmem:[#allocation6 + $0x6cc] sm:$0xf]
    %v988 = vld [vmem:[#allocation6 + $0x6d0] sm:$0xf]
    %v989 = vld [vmem:[#allocation6 + $0x6d4] sm:$0xf]
    %v990 = vld [vmem:[#allocation6 + $0x6d8] sm:$0xf]
    %v991 = vld [vmem:[#allocation6 + $0x6dc] sm:$0xf]
    %v992 = vld [vmem:[#allocation6 + $0x6e0] sm:$0xf]
    %v993 = vld [vmem:[#allocation6 + $0x6e4] sm:$0xf]
    %v994 = vld [vmem:[#allocation6 + $0x6e8] sm:$0xf]
    %v995 = vld [vmem:[#allocation6 + $0x6ec] sm:$0xf]
    %v996 = vld [vmem:[#allocation6 + $0x6f0] sm:$0xf]
    %v997 = vld [vmem:[#allocation6 + $0x6f4] sm:$0xf]
    %v998 = vld [vmem:[#allocation6 + $0x6f8] sm:$0xf]
    %v999 = vld [vmem:[#allocation6 + $0x6fc] sm:$0xf]
    %v1000 = vld [vmem:[#allocation6 + $0x700] sm:$0xf]
    %v1001 = vld [vmem:[#allocation6 + $0x704] sm:$0xf]
    %v1002 = vld [vmem:[#allocation6 + $0x708] sm:$0xf]
    %v1003 = vld [vmem:[#allocation6 + $0x70c] sm:$0xf]
    %v1004 = vld [vmem:[#allocation6 + $0x710] sm:$0xf]
    %v1005 = vld [vmem:[#allocation6 + $0x714] sm:$0xf]
    %v1006 = vld [vmem:[#allocation6 + $0x718] sm:$0xf]
    %v1007 = vld [vmem:[#allocation6 + $0x71c] sm:$0xf]
    %v1008 = vld [vmem:[#allocation6 + $0x720] sm:$0xf]
    %v1009 = vld [vmem:[#allocation6 + $0x724] sm:$0xf]
    %v1010 = vld [vmem:[#allocation6 + $0x728] sm:$0xf]
    %v1011 = vld [vmem:[#allocation6 + $0x72c] sm:$0xf]
    %v1012 = vld [vmem:[#allocation6 + $0x730] sm:$0xf]
    %v1013 = vld [vmem:[#allocation6 + $0x734] sm:$0xf]
    %v1014 = vld [vmem:[#allocation6 + $0x738] sm:$0xf]
    %v1015 = vld [vmem:[#allocation6 + $0x73c] sm:$0xf]
    %v1016 = vld [vmem:[#allocation6 + $0x740] sm:$0xf]
    %v1017 = vld [vmem:[#allocation6 + $0x744] sm:$0xf]
    %v1018 = vld [vmem:[#allocation6 + $0x748] sm:$0xf]
    %v1019 = vld [vmem:[#allocation6 + $0x74c] sm:$0xf]
    %v1020 = vld [vmem:[#allocation6 + $0x750] sm:$0xf]
    %v1021 = vld [vmem:[#allocation6 + $0x754] sm:$0xf]
    %v1022 = vld [vmem:[#allocation6 + $0x758] sm:$0xf]
    %v1023 = vld [vmem:[#allocation6 + $0x75c] sm:$0xf]
    %v1024 = vld [vmem:[#allocation6 + $0x760] sm:$0xf]
    %v1025 = vld [vmem:[#allocation6 + $0x764] sm:$0xf]
    %v1026 = vld [vmem:[#allocation6 + $0x768] sm:$0xf]
    %v1027 = vld [vmem:[#allocation6 + $0x76c] sm:$0xf]
    %v1028 = vld [vmem:[#allocation6 + $0x770] sm:$0xf]
    %v1029 = vld [vmem:[#allocation6 + $0x774] sm:$0xf]
    %v1030 = vld [vmem:[#allocation6 + $0x778] sm:$0xf]
    %v1031 = vld [vmem:[#allocation6 + $0x77c] sm:$0xf]
    %v1032 = vld [vmem:[#allocation6 + $0x780] sm:$0xf]
    %v1033 = vld [vmem:[#allocation6 + $0x784] sm:$0xf]
    %v1034 = vld [vmem:[#allocation6 + $0x788] sm:$0xf]
    %v1035 = vld [vmem:[#allocation6 + $0x78c] sm:$0xf]
    %v1036 = vld [vmem:[#allocation6 + $0x790] sm:$0xf]
    %v1037 = vld [vmem:[#allocation6 + $0x794] sm:$0xf]
    %v1038 = vld [vmem:[#allocation6 + $0x798] sm:$0xf]
    %v1039 = vld [vmem:[#allocation6 + $0x79c] sm:$0xf]
    %v1040 = vld [vmem:[#allocation6 + $0x7a0] sm:$0xf]
    %v1041 = vld [vmem:[#allocation6 + $0x7a4] sm:$0xf]
    %v1042 = vld [vmem:[#allocation6 + $0x7a8] sm:$0xf]
    %v1043 = vld [vmem:[#allocation6 + $0x7ac] sm:$0xf]
    %v1044 = vld [vmem:[#allocation6 + $0x7b0] sm:$0xf]
    %v1045 = vld [vmem:[#allocation6 + $0x7b4] sm:$0xf]
    %v1046 = vld [vmem:[#allocation6 + $0x7b8] sm:$0xf]
    %v1047 = vld [vmem:[#allocation6 + $0x7bc] sm:$0xf]
    %v1048 = vld [vmem:[#allocation6 + $0x7c0] sm:$0xf]
    %v1049 = vld [vmem:[#allocation6 + $0x7c4] sm:$0xf]
    %v1050 = vld [vmem:[#allocation6 + $0x7c8] sm:$0xf]
    %v1051 = vld [vmem:[#allocation6 + $0x7cc] sm:$0xf]
    %v1052 = vld [vmem:[#allocation6 + $0x7d0] sm:$0xf]
    %v1053 = vld [vmem:[#allocation6 + $0x7d4] sm:$0xf]
    %v1054 = vld [vmem:[#allocation6 + $0x7d8] sm:$0xf]
    %v1055 = vld [vmem:[#allocation6 + $0x7dc] sm:$0xf]
    %v1056 = vld [vmem:[#allocation6 + $0x7e0] sm:$0xf]
    %v1057 = vld [vmem:[#allocation6 + $0x7e4] sm:$0xf]
    %v1058 = vld [vmem:[#allocation6 + $0x7e8] sm:$0xf]
    %v1059 = vld [vmem:[#allocation6 + $0x7ec] sm:$0xf]
    %v1060 = vld [vmem:[#allocation6 + $0x7f0] sm:$0xf]
    %v1061 = vld [vmem:[#allocation6 + $0x7f4] sm:$0xf]
    %v1062 = vld [vmem:[#allocation6 + $0x7f8] sm:$0xf]
    %v1063 = vld [vmem:[#allocation6 + $0x7fc] sm:$0xf]
    %v1064 = vld [vmem:[#allocation6 + $0x800] sm:$0xf]
    %v1065 = vld [vmem:[#allocation6 + $0x804] sm:$0xf]
    %v1066 = vld [vmem:[#allocation6 + $0x808] sm:$0xf]
    %v1067 = vld [vmem:[#allocation6 + $0x80c] sm:$0xf]
    %v1068 = vld [vmem:[#allocation6 + $0x810] sm:$0xf]
    %v1069 = vld [vmem:[#allocation6 + $0x814] sm:$0xf]
    %v1070 = vld [vmem:[#allocation6 + $0x818] sm:$0xf]
    %v1071 = vld [vmem:[#allocation6 + $0x81c] sm:$0xf]
    %v1072 = vld [vmem:[#allocation6 + $0x820] sm:$0xf]
    %v1073 = vld [vmem:[#allocation6 + $0x824] sm:$0xf]
    %v1074 = vld [vmem:[#allocation6 + $0x828] sm:$0xf]
    %v1075 = vld [vmem:[#allocation6 + $0x82c] sm:$0xf]
    %v1076 = vld [vmem:[#allocation6 + $0x830] sm:$0xf]
    %v1077 = vld [vmem:[#allocation6 + $0x834] sm:$0xf]
    %v1078 = vld [vmem:[#allocation6 + $0x838] sm:$0xf]
    %v1079 = vld [vmem:[#allocation6 + $0x83c] sm:$0xf]
    %v1080 = vld [vmem:[#allocation6 + $0x840] sm:$0xf]
    %v1081 = vld [vmem:[#allocation6 + $0x844] sm:$0xf]
    %v1082 = vld [vmem:[#allocation6 + $0x848] sm:$0xf]
    %v1083 = vld [vmem:[#allocation6 + $0x84c] sm:$0xf]
    %v1084 = vld [vmem:[#allocation6 + $0x850] sm:$0xf]
    %v1085 = vld [vmem:[#allocation6 + $0x854] sm:$0xf]
    %v1086 = vld [vmem:[#allocation6 + $0x858] sm:$0xf]
    %v1087 = vld [vmem:[#allocation6 + $0x85c] sm:$0xf]
    %v1088 = vld [vmem:[#allocation6 + $0x860] sm:$0xf]
    %v1089 = vld [vmem:[#allocation6 + $0x864] sm:$0xf]
    %v1090 = vld [vmem:[#allocation6 + $0x868] sm:$0xf]
    %v1091 = vld [vmem:[#allocation6 + $0x86c] sm:$0xf]
    %v1092 = vld [vmem:[#allocation6 + $0x870] sm:$0xf]
    %v1093 = vld [vmem:[#allocation6 + $0x874] sm:$0xf]
    %v1094 = vld [vmem:[#allocation6 + $0x878] sm:$0xf]
    %v1095 = vld [vmem:[#allocation6 + $0x87c] sm:$0xf]
    %v1096 = vld [vmem:[#allocation6 + $0x880] sm:$0xf]
    %v1097 = vld [vmem:[#allocation6 + $0x884] sm:$0xf]
    %v1098 = vld [vmem:[#allocation6 + $0x888] sm:$0xf]
    %v1099 = vld [vmem:[#allocation6 + $0x88c] sm:$0xf]
    %v1100 = vld [vmem:[#allocation6 + $0x890] sm:$0xf]
    %v1101 = vld [vmem:[#allocation6 + $0x894] sm:$0xf]
    %v1102 = vld [vmem:[#allocation6 + $0x898] sm:$0xf]
    %v1103 = vld [vmem:[#allocation6 + $0x89c] sm:$0xf]
    %v1104 = vld [vmem:[#allocation6 + $0x8a0] sm:$0xf]
    %v1105 = vld [vmem:[#allocation6 + $0x8a4] sm:$0xf]
    %v1106 = vld [vmem:[#allocation6 + $0x8a8] sm:$0xf]
    %v1107 = vld [vmem:[#allocation6 + $0x8ac] sm:$0xf]
    %v1108 = vld [vmem:[#allocation6 + $0x8b0] sm:$0xf]
    %v1109 = vld [vmem:[#allocation6 + $0x8b4] sm:$0xf]
    %v1110 = vld [vmem:[#allocation6 + $0x8b8] sm:$0xf]
    %v1111 = vld [vmem:[#allocation6 + $0x8bc] sm:$0xf]
    %v1112 = vld [vmem:[#allocation6 + $0x8c0] sm:$0xf]
    %v1113 = vld [vmem:[#allocation6 + $0x8c4] sm:$0xf]
    %v1114 = vld [vmem:[#allocation6 + $0x8c8] sm:$0xf]
    %v1115 = vld [vmem:[#allocation6 + $0x8cc] sm:$0xf]
    %v1116 = vld [vmem:[#allocation6 + $0x8d0] sm:$0xf]
    %v1117 = vld [vmem:[#allocation6 + $0x8d4] sm:$0xf]
    %v1118 = vld [vmem:[#allocation6 + $0x8d8] sm:$0xf]
    %v1119 = vld [vmem:[#allocation6 + $0x8dc] sm:$0xf]
    %v1120 = vld [vmem:[#allocation6 + $0x8e0] sm:$0xf]
    %v1121 = vld [vmem:[#allocation6 + $0x8e4] sm:$0xf]
    %v1122 = vld [vmem:[#allocation6 + $0x8e8] sm:$0xf]
    %v1123 = vld [vmem:[#allocation6 + $0x8ec] sm:$0xf]
    %v1124 = vld [vmem:[#allocation6 + $0x8f0] sm:$0xf]
    %v1125 = vld [vmem:[#allocation6 + $0x8f4] sm:$0xf]
    %v1126 = vld [vmem:[#allocation6 + $0x8f8] sm:$0xf]
    %v1127 = vld [vmem:[#allocation6 + $0x8fc] sm:$0xf]
    %v1128 = vld [vmem:[#allocation6 + $0x900] sm:$0xf]
    %v1129 = vld [vmem:[#allocation6 + $0x904] sm:$0xf]
    %v1130 = vld [vmem:[#allocation6 + $0x908] sm:$0xf]
    %v1131 = vld [vmem:[#allocation6 + $0x90c] sm:$0xf]
    %v1132 = vld [vmem:[#allocation6 + $0x910] sm:$0xf]
    %v1133 = vld [vmem:[#allocation6 + $0x914] sm:$0xf]
    %v1134 = vld [vmem:[#allocation6 + $0x918] sm:$0xf]
    %v1135 = vld [vmem:[#allocation6 + $0x91c] sm:$0xf]
    %v1136 = vld [vmem:[#allocation6 + $0x920] sm:$0xf]
    %v1137 = vld [vmem:[#allocation6 + $0x924] sm:$0xf]
    %v1138 = vld [vmem:[#allocation6 + $0x928] sm:$0xf]
    %v1139 = vld [vmem:[#allocation6 + $0x92c] sm:$0xf]
    %v1140 = vld [vmem:[#allocation6 + $0x930] sm:$0xf]
    %v1141 = vld [vmem:[#allocation6 + $0x934] sm:$0xf]
    %v1142 = vld [vmem:[#allocation6 + $0x938] sm:$0xf]
    %v1143 = vld [vmem:[#allocation6 + $0x93c] sm:$0xf]
    %v1144 = vld [vmem:[#allocation6 + $0x940] sm:$0xf]
    %v1145 = vld [vmem:[#allocation6 + $0x944] sm:$0xf]
    %v1146 = vld [vmem:[#allocation6 + $0x948] sm:$0xf]
    %v1147 = vld [vmem:[#allocation6 + $0x94c] sm:$0xf]
    %v1148 = vld [vmem:[#allocation6 + $0x950] sm:$0xf]
    %v1149 = vld [vmem:[#allocation6 + $0x954] sm:$0xf]
    %v1150 = vld [vmem:[#allocation6 + $0x958] sm:$0xf]
    %v1151 = vld [vmem:[#allocation6 + $0x95c] sm:$0xf]
    %v1152 = vld [vmem:[#allocation6 + $0x960] sm:$0xf]
    %v1153 = vld [vmem:[#allocation6 + $0x964] sm:$0xf]
    %v1154 = vld [vmem:[#allocation6 + $0x968] sm:$0xf]
    %v1155 = vld [vmem:[#allocation6 + $0x96c] sm:$0xf]
    %v1156 = vld [vmem:[#allocation6 + $0x970] sm:$0xf]
    %v1157 = vld [vmem:[#allocation6 + $0x974] sm:$0xf]
    %v1158 = vld [vmem:[#allocation6 + $0x978] sm:$0xf]
    %v1159 = vld [vmem:[#allocation6 + $0x97c] sm:$0xf]
    %v1160 = vld [vmem:[#allocation6 + $0x980] sm:$0xf]
    %v1161 = vld [vmem:[#allocation6 + $0x984] sm:$0xf]
    %v1162 = vld [vmem:[#allocation6 + $0x988] sm:$0xf]
    %v1163 = vld [vmem:[#allocation6 + $0x98c] sm:$0xf]
    %v1164 = vld [vmem:[#allocation6 + $0x990] sm:$0xf]
    %v1165 = vld [vmem:[#allocation6 + $0x994] sm:$0xf]
    %v1166 = vld [vmem:[#allocation6 + $0x998] sm:$0xf]
    %v1167 = vld [vmem:[#allocation6 + $0x99c] sm:$0xf]
    %v1168 = vld [vmem:[#allocation6 + $0x9a0] sm:$0xf]
    %v1169 = vld [vmem:[#allocation6 + $0x9a4] sm:$0xf]
    %v1170 = vld [vmem:[#allocation6 + $0x9a8] sm:$0xf]
    %v1171 = vld [vmem:[#allocation6 + $0x9ac] sm:$0xf]
    %v1172 = vld [vmem:[#allocation6 + $0x9b0] sm:$0xf]
    %v1173 = vld [vmem:[#allocation6 + $0x9b4] sm:$0xf]
    %v1174 = vld [vmem:[#allocation6 + $0x9b8] sm:$0xf]
    %v1175 = vld [vmem:[#allocation6 + $0x9bc] sm:$0xf]
    %v1176 = vld [vmem:[#allocation6 + $0x9c0] sm:$0xf]
    %v1177 = vld [vmem:[#allocation6 + $0x9c4] sm:$0xf]
    %v1178 = vld [vmem:[#allocation6 + $0x9c8] sm:$0xf]
    %v1179 = vld [vmem:[#allocation6 + $0x9cc] sm:$0xf]
    %v1180 = vld [vmem:[#allocation6 + $0x9d0] sm:$0xf]
    %v1181 = vld [vmem:[#allocation6 + $0x9d4] sm:$0xf]
    %v1182 = vld [vmem:[#allocation6 + $0x9d8] sm:$0xf]
    %v1183 = vld [vmem:[#allocation6 + $0x9dc] sm:$0xf]
    %v1184 = vld [vmem:[#allocation6 + $0x9e0] sm:$0xf]
    %v1185 = vld [vmem:[#allocation6 + $0x9e4] sm:$0xf]
    %v1186 = vld [vmem:[#allocation6 + $0x9e8] sm:$0xf]
    %v1187 = vld [vmem:[#allocation6 + $0x9ec] sm:$0xf]
    %v1188 = vld [vmem:[#allocation6 + $0x9f0] sm:$0xf]
    %v1189 = vld [vmem:[#allocation6 + $0x9f4] sm:$0xf]
    %v1190 = vld [vmem:[#allocation6 + $0x9f8] sm:$0xf]
    %v1191 = vld [vmem:[#allocation6 + $0x9fc] sm:$0xf]
    %v1192 = vld [vmem:[#allocation6 + $0xa00] sm:$0xf]
    %v1193 = vld [vmem:[#allocation6 + $0xa04] sm:$0xf]
    %v1194 = vld [vmem:[#allocation6 + $0xa08] sm:$0xf]
    %v1195 = vld [vmem:[#allocation6 + $0xa0c] sm:$0xf]
    %v1196 = vld [vmem:[#allocation6 + $0xa10] sm:$0xf]
    %v1197 = vld [vmem:[#allocation6 + $0xa14] sm:$0xf]
    %v1198 = vld [vmem:[#allocation6 + $0xa18] sm:$0xf]
    %v1199 = vld [vmem:[#allocation6 + $0xa1c] sm:$0xf]
    %v1200 = vld [vmem:[#allocation6 + $0xa20] sm:$0xf]
    %v1201 = vld [vmem:[#allocation6 + $0xa24] sm:$0xf]
    %v1202 = vld [vmem:[#allocation6 + $0xa28] sm:$0xf]
    %v1203 = vld [vmem:[#allocation6 + $0xa2c] sm:$0xf]
    %v1204 = vld [vmem:[#allocation6 + $0xa30] sm:$0xf]
    %v1205 = vld [vmem:[#allocation6 + $0xa34] sm:$0xf]
    %v1206 = vld [vmem:[#allocation6 + $0xa38] sm:$0xf]
    %v1207 = vld [vmem:[#allocation6 + $0xa3c] sm:$0xf]
    %v1208 = vld [vmem:[#allocation6 + $0xa40] sm:$0xf]
    %v1209 = vld [vmem:[#allocation6 + $0xa44] sm:$0xf]
    %v1210 = vld [vmem:[#allocation6 + $0xa48] sm:$0xf]
    %v1211 = vld [vmem:[#allocation6 + $0xa4c] sm:$0xf]
    %v1212 = vld [vmem:[#allocation6 + $0xa50] sm:$0xf]
    %v1213 = vld [vmem:[#allocation6 + $0xa54] sm:$0xf]
    %v1214 = vld [vmem:[#allocation6 + $0xa58] sm:$0xf]
    %v1215 = vld [vmem:[#allocation6 + $0xa5c] sm:$0xf]
    %v1216 = vld [vmem:[#allocation6 + $0xa60] sm:$0xf]
    %v1217 = vld [vmem:[#allocation6 + $0xa64] sm:$0xf]
    %v1218 = vld [vmem:[#allocation6 + $0xa68] sm:$0xf]
    %v1219 = vld [vmem:[#allocation6 + $0xa6c] sm:$0xf]
    %v1220 = vld [vmem:[#allocation6 + $0xa70] sm:$0xf]
    %v1221 = vld [vmem:[#allocation6 + $0xa74] sm:$0xf]
    %v1222 = vld [vmem:[#allocation6 + $0xa78] sm:$0xf]
    %v1223 = vld [vmem:[#allocation6 + $0xa7c] sm:$0xf]
    %v1224 = vld [vmem:[#allocation6 + $0xa80] sm:$0xf]
    %v1225 = vld [vmem:[#allocation6 + $0xa84] sm:$0xf]
    %v1226 = vld [vmem:[#allocation6 + $0xa88] sm:$0xf]
    %v1227 = vld [vmem:[#allocation6 + $0xa8c] sm:$0xf]
    %v1228 = vld [vmem:[#allocation6 + $0xa90] sm:$0xf]
    %v1229 = vld [vmem:[#allocation6 + $0xa94] sm:$0xf]
    %v1230 = vld [vmem:[#allocation6 + $0xa98] sm:$0xf]
    %v1231 = vld [vmem:[#allocation6 + $0xa9c] sm:$0xf]
    %v1232 = vld [vmem:[#allocation6 + $0xaa0] sm:$0xf]
    %v1233 = vld [vmem:[#allocation6 + $0xaa4] sm:$0xf]
    %v1234 = vld [vmem:[#allocation6 + $0xaa8] sm:$0xf]
    %v1235 = vld [vmem:[#allocation6 + $0xaac] sm:$0xf]
    %v1236 = vld [vmem:[#allocation6 + $0xab0] sm:$0xf]
    %v1237 = vld [vmem:[#allocation6 + $0xab4] sm:$0xf]
    %v1238 = vld [vmem:[#allocation6 + $0xab8] sm:$0xf]
    %v1239 = vld [vmem:[#allocation6 + $0xabc] sm:$0xf]
    %v1240 = vld [vmem:[#allocation6 + $0xac0] sm:$0xf]
    %v1241 = vld [vmem:[#allocation6 + $0xac4] sm:$0xf]
    %v1242 = vld [vmem:[#allocation6 + $0xac8] sm:$0xf]
    %v1243 = vld [vmem:[#allocation6 + $0xacc] sm:$0xf]
    %v1244 = vld [vmem:[#allocation6 + $0xad0] sm:$0xf]
    %v1245 = vld [vmem:[#allocation6 + $0xad4] sm:$0xf]
    %v1246 = vld [vmem:[#allocation6 + $0xad8] sm:$0xf]
    %v1247 = vld [vmem:[#allocation6 + $0xadc] sm:$0xf]
    %v1248 = vld [vmem:[#allocation6 + $0xae0] sm:$0xf]
    %v1249 = vld [vmem:[#allocation6 + $0xae4] sm:$0xf]
    %v1250 = vld [vmem:[#allocation6 + $0xae8] sm:$0xf]
    %v1251 = vld [vmem:[#allocation6 + $0xaec] sm:$0xf]
    %v1252 = vld [vmem:[#allocation6 + $0xaf0] sm:$0xf]
    %v1253 = vld [vmem:[#allocation6 + $0xaf4] sm:$0xf]
    %v1254 = vld [vmem:[#allocation6 + $0xaf8] sm:$0xf]
    %v1255 = vld [vmem:[#allocation6 + $0xafc] sm:$0xf]
    %v1256 = vld [vmem:[#allocation6 + $0xb00] sm:$0xf]
    %v1257 = vld [vmem:[#allocation6 + $0xb04] sm:$0xf]
    %v1258 = vld [vmem:[#allocation6 + $0xb08] sm:$0xf]
    %v1259 = vld [vmem:[#allocation6 + $0xb0c] sm:$0xf]
    %v1260 = vld [vmem:[#allocation6 + $0xb10] sm:$0xf]
    %v1261 = vld [vmem:[#allocation6 + $0xb14] sm:$0xf]
    %v1262 = vld [vmem:[#allocation6 + $0xb18] sm:$0xf]
    %v1263 = vld [vmem:[#allocation6 + $0xb1c] sm:$0xf]
    %v1264 = vld [vmem:[#allocation6 + $0xb20] sm:$0xf]
    %v1265 = vld [vmem:[#allocation6 + $0xb24] sm:$0xf]
    %v1266 = vld [vmem:[#allocation6 + $0xb28] sm:$0xf]
    %v1267 = vld [vmem:[#allocation6 + $0xb2c] sm:$0xf]
    %v1268 = vld [vmem:[#allocation6 + $0xb30] sm:$0xf]
    %v1269 = vld [vmem:[#allocation6 + $0xb34] sm:$0xf]
    %v1270 = vld [vmem:[#allocation6 + $0xb38] sm:$0xf]
    %v1271 = vld [vmem:[#allocation6 + $0xb3c] sm:$0xf]
    %v1272 = vld [vmem:[#allocation6 + $0xb40] sm:$0xf]
    %v1273 = vld [vmem:[#allocation6 + $0xb44] sm:$0xf]
    %v1274 = vld [vmem:[#allocation6 + $0xb48] sm:$0xf]
    %v1275 = vld [vmem:[#allocation6 + $0xb4c] sm:$0xf]
    %v1276 = vld [vmem:[#allocation6 + $0xb50] sm:$0xf]
    %v1277 = vld [vmem:[#allocation6 + $0xb54] sm:$0xf]
    %v1278 = vld [vmem:[#allocation6 + $0xb58] sm:$0xf]
    %v1279 = vld [vmem:[#allocation6 + $0xb5c] sm:$0xf]
    %v1280 = vld [vmem:[#allocation6 + $0xb60] sm:$0xf]
    %v1281 = vld [vmem:[#allocation6 + $0xb64] sm:$0xf]
    %v1282 = vld [vmem:[#allocation6 + $0xb68] sm:$0xf]
    %v1283 = vld [vmem:[#allocation6 + $0xb6c] sm:$0xf]
    %v1284 = vld [vmem:[#allocation6 + $0xb70] sm:$0xf]
    %v1285 = vld [vmem:[#allocation6 + $0xb74] sm:$0xf]
    %v1286 = vld [vmem:[#allocation6 + $0xb78] sm:$0xf]
    %v1287 = vld [vmem:[#allocation6 + $0xb7c] sm:$0xf]
    %v1288 = vld [vmem:[#allocation6 + $0xb80] sm:$0xf]
    %v1289 = vld [vmem:[#allocation6 + $0xb84] sm:$0xf]
    %v1290 = vld [vmem:[#allocation6 + $0xb88] sm:$0xf]
    %v1291 = vld [vmem:[#allocation6 + $0xb8c] sm:$0xf]
    %v1292 = vld [vmem:[#allocation6 + $0xb90] sm:$0xf]
    %v1293 = vld [vmem:[#allocation6 + $0xb94] sm:$0xf]
    %v1294 = vld [vmem:[#allocation6 + $0xb98] sm:$0xf]
    %v1295 = vld [vmem:[#allocation6 + $0xb9c] sm:$0xf]
    %v1296 = vld [vmem:[#allocation6 + $0xba0] sm:$0xf]
    %v1297 = vld [vmem:[#allocation6 + $0xba4] sm:$0xf]
    %v1298 = vld [vmem:[#allocation6 + $0xba8] sm:$0xf]
    %v1299 = vld [vmem:[#allocation6 + $0xbac] sm:$0xf]
    %v1300 = vld [vmem:[#allocation6 + $0xbb0] sm:$0xf]
    %v1301 = vld [vmem:[#allocation6 + $0xbb4] sm:$0xf]
    %v1302 = vld [vmem:[#allocation6 + $0xbb8] sm:$0xf]
    %v1303 = vld [vmem:[#allocation6 + $0xbbc] sm:$0xf]
    %v1304 = vld [vmem:[#allocation6 + $0xbc0] sm:$0xf]
    %v1305 = vld [vmem:[#allocation6 + $0xbc4] sm:$0xf]
    %v1306 = vld [vmem:[#allocation6 + $0xbc8] sm:$0xf]
    %v1307 = vld [vmem:[#allocation6 + $0xbcc] sm:$0xf]
    %v1308 = vld [vmem:[#allocation6 + $0xbd0] sm:$0xf]
    %v1309 = vld [vmem:[#allocation6 + $0xbd4] sm:$0xf]
    %v1310 = vld [vmem:[#allocation6 + $0xbd8] sm:$0xf]
    %v1311 = vld [vmem:[#allocation6 + $0xbdc] sm:$0xf]
    %v1312 = vld [vmem:[#allocation6 + $0xbe0] sm:$0xf]
    %v1313 = vld [vmem:[#allocation6 + $0xbe4] sm:$0xf]
    %v1314 = vld [vmem:[#allocation6 + $0xbe8] sm:$0xf]
    %v1315 = vld [vmem:[#allocation6 + $0xbec] sm:$0xf]
    %v1316 = vld [vmem:[#allocation6 + $0xbf0] sm:$0xf]
    %v1317 = vld [vmem:[#allocation6 + $0xbf4] sm:$0xf]
    %v1318 = vld [vmem:[#allocation6 + $0xbf8] sm:$0xf]
    %v1319 = vld [vmem:[#allocation6 + $0xbfc] sm:$0xf]
    %v1320 = vld [vmem:[#allocation6 + $0xc00] sm:$0xf]
    %v1321 = vld [vmem:[#allocation6 + $0xc04] sm:$0xf]
    %v1322 = vld [vmem:[#allocation6 + $0xc08] sm:$0xf]
    %v1323 = vld [vmem:[#allocation6 + $0xc0c] sm:$0xf]
    %v1324 = vld [vmem:[#allocation6 + $0xc10] sm:$0xf]
    %v1325 = vld [vmem:[#allocation6 + $0xc14] sm:$0xf]
    %v1326 = vld [vmem:[#allocation6 + $0xc18] sm:$0xf]
    %v1327 = vld [vmem:[#allocation6 + $0xc1c] sm:$0xf]
    %v1328 = vld [vmem:[#allocation6 + $0xc20] sm:$0xf]
    %v1329 = vld [vmem:[#allocation6 + $0xc24] sm:$0xf]
    %v1330 = vld [vmem:[#allocation6 + $0xc28] sm:$0xf]
    %v1331 = vld [vmem:[#allocation6 + $0xc2c] sm:$0xf]
    %v1332 = vld [vmem:[#allocation6 + $0xc30] sm:$0xf]
    %v1333 = vld [vmem:[#allocation6 + $0xc34] sm:$0xf]
    %v1334 = vld [vmem:[#allocation6 + $0xc38] sm:$0xf]
    %v1335 = vld [vmem:[#allocation6 + $0xc3c] sm:$0xf]
    %v1336 = vld [vmem:[#allocation6 + $0xc40] sm:$0xf]
    %v1337 = vld [vmem:[#allocation6 + $0xc44] sm:$0xf]
    %v1338 = vld [vmem:[#allocation6 + $0xc48] sm:$0xf]
    %v1339 = vld [vmem:[#allocation6 + $0xc4c] sm:$0xf]
    %v1340 = vld [vmem:[#allocation6 + $0xc50] sm:$0xf]
    %v1341 = vld [vmem:[#allocation6 + $0xc54] sm:$0xf]
    %v1342 = vld [vmem:[#allocation6 + $0xc58] sm:$0xf]
    %v1343 = vld [vmem:[#allocation6 + $0xc5c] sm:$0xf]
    %v1344 = vld [vmem:[#allocation6 + $0xc60] sm:$0xf]
    %v1345 = vld [vmem:[#allocation6 + $0xc64] sm:$0xf]
    %v1346 = vld [vmem:[#allocation6 + $0xc68] sm:$0xf]
    %v1347 = vld [vmem:[#allocation6 + $0xc6c] sm:$0xf]
    %v1348 = vld [vmem:[#allocation6 + $0xc70] sm:$0xf]
    %v1349 = vld [vmem:[#allocation6 + $0xc74] sm:$0xf]
    %v1350 = vld [vmem:[#allocation6 + $0xc78] sm:$0xf]
    %v1351 = vld [vmem:[#allocation6 + $0xc7c] sm:$0xf]
    %v1352 = vld [vmem:[#allocation6 + $0xc80] sm:$0xf]
    %v1353 = vld [vmem:[#allocation6 + $0xc84] sm:$0xf]
    %v1354 = vld [vmem:[#allocation6 + $0xc88] sm:$0xf]
    %v1355 = vld [vmem:[#allocation6 + $0xc8c] sm:$0xf]
    %v1356 = vld [vmem:[#allocation6 + $0xc90] sm:$0xf]
    %v1357 = vld [vmem:[#allocation6 + $0xc94] sm:$0xf]
    %v1358 = vld [vmem:[#allocation6 + $0xc98] sm:$0xf]
    %v1359 = vld [vmem:[#allocation6 + $0xc9c] sm:$0xf]
    %v1360 = vld [vmem:[#allocation6 + $0xca0] sm:$0xf]
    %v1361 = vld [vmem:[#allocation6 + $0xca4] sm:$0xf]
    %v1362 = vld [vmem:[#allocation6 + $0xca8] sm:$0xf]
    %v1363 = vld [vmem:[#allocation6 + $0xcac] sm:$0xf]
    %v1364 = vld [vmem:[#allocation6 + $0xcb0] sm:$0xf]
    %v1365 = vld [vmem:[#allocation6 + $0xcb4] sm:$0xf]
    %v1366 = vld [vmem:[#allocation6 + $0xcb8] sm:$0xf]
    %v1367 = vld [vmem:[#allocation6 + $0xcbc] sm:$0xf]
    %v1368 = vld [vmem:[#allocation6 + $0xcc0] sm:$0xf]
    %v1369 = vld [vmem:[#allocation6 + $0xcc4] sm:$0xf]
    %v1370 = vld [vmem:[#allocation6 + $0xcc8] sm:$0xf]
    %v1371 = vld [vmem:[#allocation6 + $0xccc] sm:$0xf]
    %v1372 = vld [vmem:[#allocation6 + $0xcd0] sm:$0xf]
    %v1373 = vld [vmem:[#allocation6 + $0xcd4] sm:$0xf]
    %v1374 = vld [vmem:[#allocation6 + $0xcd8] sm:$0xf]
    %v1375 = vld [vmem:[#allocation6 + $0xcdc] sm:$0xf]
    %v1376 = vld [vmem:[#allocation6 + $0xce0] sm:$0xf]
    %v1377 = vld [vmem:[#allocation6 + $0xce4] sm:$0xf]
    %v1378 = vld [vmem:[#allocation6 + $0xce8] sm:$0xf]
    %v1379 = vld [vmem:[#allocation6 + $0xcec] sm:$0xf]
    %v1380 = vld [vmem:[#allocation6 + $0xcf0] sm:$0xf]
    %v1381 = vld [vmem:[#allocation6 + $0xcf4] sm:$0xf]
    %v1382 = vld [vmem:[#allocation6 + $0xcf8] sm:$0xf]
    %v1383 = vld [vmem:[#allocation6 + $0xcfc] sm:$0xf]
    %v1384 = vld [vmem:[#allocation6 + $0xd00] sm:$0xf]
    %v1385 = vld [vmem:[#allocation6 + $0xd04] sm:$0xf]
    %v1386 = vld [vmem:[#allocation6 + $0xd08] sm:$0xf]
    %v1387 = vld [vmem:[#allocation6 + $0xd0c] sm:$0xf]
    %v1388 = vld [vmem:[#allocation6 + $0xd10] sm:$0xf]
    %v1389 = vld [vmem:[#allocation6 + $0xd14] sm:$0xf]
    %v1390 = vld [vmem:[#allocation6 + $0xd18] sm:$0xf]
    %v1391 = vld [vmem:[#allocation6 + $0xd1c] sm:$0xf]
    %v1392 = vld [vmem:[#allocation6 + $0xd20] sm:$0xf]
    %v1393 = vld [vmem:[#allocation6 + $0xd24] sm:$0xf]
    %v1394 = vld [vmem:[#allocation6 + $0xd28] sm:$0xf]
    %v1395 = vld [vmem:[#allocation6 + $0xd2c] sm:$0xf]
    %v1396 = vld [vmem:[#allocation6 + $0xd30] sm:$0xf]
    %v1397 = vld [vmem:[#allocation6 + $0xd34] sm:$0xf]
    %v1398 = vld [vmem:[#allocation6 + $0xd38] sm:$0xf]
    %v1399 = vld [vmem:[#allocation6 + $0xd3c] sm:$0xf]
    %v1400 = vld [vmem:[#allocation6 + $0xd40] sm:$0xf]
    %v1401 = vld [vmem:[#allocation6 + $0xd44] sm:$0xf]
    %v1402 = vld [vmem:[#allocation6 + $0xd48] sm:$0xf]
    %v1403 = vld [vmem:[#allocation6 + $0xd4c] sm:$0xf]
    %v1404 = vld [vmem:[#allocation6 + $0xd50] sm:$0xf]
    %v1405 = vld [vmem:[#allocation6 + $0xd54] sm:$0xf]
    %v1406 = vld [vmem:[#allocation6 + $0xd58] sm:$0xf]
    %v1407 = vld [vmem:[#allocation6 + $0xd5c] sm:$0xf]
    %v1408 = vld [vmem:[#allocation6 + $0xd60] sm:$0xf]
    %v1409 = vld [vmem:[#allocation6 + $0xd64] sm:$0xf]
    %v1410 = vld [vmem:[#allocation6 + $0xd68] sm:$0xf]
    %v1411 = vld [vmem:[#allocation6 + $0xd6c] sm:$0xf]
    %v1412 = vld [vmem:[#allocation6 + $0xd70] sm:$0xf]
    %v1413 = vld [vmem:[#allocation6 + $0xd74] sm:$0xf]
    %v1414 = vld [vmem:[#allocation6 + $0xd78] sm:$0xf]
    %v1415 = vld [vmem:[#allocation6 + $0xd7c] sm:$0xf]
    %v1416 = vld [vmem:[#allocation6 + $0xd80] sm:$0xf]
    %v1417 = vld [vmem:[#allocation6 + $0xd84] sm:$0xf]
    %v1418 = vld [vmem:[#allocation6 + $0xd88] sm:$0xf]
    %v1419 = vld [vmem:[#allocation6 + $0xd8c] sm:$0xf]
    %v1420 = vld [vmem:[#allocation6 + $0xd90] sm:$0xf]
    %v1421 = vld [vmem:[#allocation6 + $0xd94] sm:$0xf]
    %v1422 = vld [vmem:[#allocation6 + $0xd98] sm:$0xf]
    %v1423 = vld [vmem:[#allocation6 + $0xd9c] sm:$0xf]
    %v1424 = vld [vmem:[#allocation6 + $0xda0] sm:$0xf]
    %v1425 = vld [vmem:[#allocation6 + $0xda4] sm:$0xf]
    %v1426 = vld [vmem:[#allocation6 + $0xda8] sm:$0xf]
    %v1427 = vld [vmem:[#allocation6 + $0xdac] sm:$0xf]
    %v1428 = vld [vmem:[#allocation6 + $0xdb0] sm:$0xf]
    %v1429 = vld [vmem:[#allocation6 + $0xdb4] sm:$0xf]
    %v1430 = vld [vmem:[#allocation6 + $0xdb8] sm:$0xf]
    %v1431 = vld [vmem:[#allocation6 + $0xdbc] sm:$0xf]
    %v1432 = vld [vmem:[#allocation6 + $0xdc0] sm:$0xf]
    %v1433 = vld [vmem:[#allocation6 + $0xdc4] sm:$0xf]
    %v1434 = vld [vmem:[#allocation6 + $0xdc8] sm:$0xf]
    %v1435 = vld [vmem:[#allocation6 + $0xdcc] sm:$0xf]
    %v1436 = vld [vmem:[#allocation6 + $0xdd0] sm:$0xf]
    %v1437 = vld [vmem:[#allocation6 + $0xdd4] sm:$0xf]
    %v1438 = vld [vmem:[#allocation6 + $0xdd8] sm:$0xf]
    %v1439 = vld [vmem:[#allocation6 + $0xddc] sm:$0xf]
    %v1440 = vld [vmem:[#allocation6 + $0xde0] sm:$0xf]
    %v1441 = vld [vmem:[#allocation6 + $0xde4] sm:$0xf]
    %v1442 = vld [vmem:[#allocation6 + $0xde8] sm:$0xf]
    %v1443 = vld [vmem:[#allocation6 + $0xdec] sm:$0xf]
    %v1444 = vld [vmem:[#allocation6 + $0xdf0] sm:$0xf]
    %v1445 = vld [vmem:[#allocation6 + $0xdf4] sm:$0xf]
    %v1446 = vld [vmem:[#allocation6 + $0xdf8] sm:$0xf]
    %v1447 = vld [vmem:[#allocation6 + $0xdfc] sm:$0xf]
    %v1448 = vld [vmem:[#allocation6 + $0xe00] sm:$0xf]
    %v1449 = vld [vmem:[#allocation6 + $0xe04] sm:$0xf]
    %v1450 = vld [vmem:[#allocation6 + $0xe08] sm:$0xf]
    %v1451 = vld [vmem:[#allocation6 + $0xe0c] sm:$0xf]
    %v1452 = vld [vmem:[#allocation6 + $0xe10] sm:$0xf]
    %v1453 = vld [vmem:[#allocation6 + $0xe14] sm:$0xf]
    %v1454 = vld [vmem:[#allocation6 + $0xe18] sm:$0xf]
    %v1455 = vld [vmem:[#allocation6 + $0xe1c] sm:$0xf]
    %v1456 = vld [vmem:[#allocation6 + $0xe20] sm:$0xf]
    %v1457 = vld [vmem:[#allocation6 + $0xe24] sm:$0xf]
    %v1458 = vld [vmem:[#allocation6 + $0xe28] sm:$0xf]
    %v1459 = vld [vmem:[#allocation6 + $0xe2c] sm:$0xf]
    %v1460 = vld [vmem:[#allocation6 + $0xe30] sm:$0xf]
    %v1461 = vld [vmem:[#allocation6 + $0xe34] sm:$0xf]
    %v1462 = vld [vmem:[#allocation6 + $0xe38] sm:$0xf]
    %v1463 = vld [vmem:[#allocation6 + $0xe3c] sm:$0xf]
    %v1464 = vld [vmem:[#allocation6 + $0xe40] sm:$0xf]
    %v1465 = vld [vmem:[#allocation6 + $0xe44] sm:$0xf]
    %v1466 = vld [vmem:[#allocation6 + $0xe48] sm:$0xf]
    %v1467 = vld [vmem:[#allocation6 + $0xe4c] sm:$0xf]
    %v1468 = vld [vmem:[#allocation6 + $0xe50] sm:$0xf]
    %v1469 = vld [vmem:[#allocation6 + $0xe54] sm:$0xf]
    %v1470 = vld [vmem:[#allocation6 + $0xe58] sm:$0xf]
    %v1471 = vld [vmem:[#allocation6 + $0xe5c] sm:$0xf]
    %v1472 = vld [vmem:[#allocation6 + $0xe60] sm:$0xf]
    %v1473 = vld [vmem:[#allocation6 + $0xe64] sm:$0xf]
    %v1474 = vld [vmem:[#allocation6 + $0xe68] sm:$0xf]
    %v1475 = vld [vmem:[#allocation6 + $0xe6c] sm:$0xf]
    %v1476 = vld [vmem:[#allocation6 + $0xe70] sm:$0xf]
    %v1477 = vld [vmem:[#allocation6 + $0xe74] sm:$0xf]
    %v1478 = vld [vmem:[#allocation6 + $0xe78] sm:$0xf]
    %v1479 = vld [vmem:[#allocation6 + $0xe7c] sm:$0xf]
    %v1480 = vld [vmem:[#allocation6 + $0xe80] sm:$0xf]
    %v1481 = vld [vmem:[#allocation6 + $0xe84] sm:$0xf]
    %v1482 = vld [vmem:[#allocation6 + $0xe88] sm:$0xf]
    %v1483 = vld [vmem:[#allocation6 + $0xe8c] sm:$0xf]
    %v1484 = vld [vmem:[#allocation6 + $0xe90] sm:$0xf]
    %v1485 = vld [vmem:[#allocation6 + $0xe94] sm:$0xf]
    %v1486 = vld [vmem:[#allocation6 + $0xe98] sm:$0xf]
    %v1487 = vld [vmem:[#allocation6 + $0xe9c] sm:$0xf]
    %v1488 = vld [vmem:[#allocation6 + $0xea0] sm:$0xf]
    %v1489 = vld [vmem:[#allocation6 + $0xea4] sm:$0xf]
    %v1490 = vld [vmem:[#allocation6 + $0xea8] sm:$0xf]
    %v1491 = vld [vmem:[#allocation6 + $0xeac] sm:$0xf]
    %v1492 = vld [vmem:[#allocation6 + $0xeb0] sm:$0xf]
    %v1493 = vld [vmem:[#allocation6 + $0xeb4] sm:$0xf]
    %v1494 = vld [vmem:[#allocation6 + $0xeb8] sm:$0xf]
    %v1495 = vld [vmem:[#allocation6 + $0xebc] sm:$0xf]
    %v1496 = vld [vmem:[#allocation6 + $0xec0] sm:$0xf]
    %v1497 = vld [vmem:[#allocation6 + $0xec4] sm:$0xf]
    %v1498 = vld [vmem:[#allocation6 + $0xec8] sm:$0xf]
    %v1499 = vld [vmem:[#allocation6 + $0xecc] sm:$0xf]
    %v1500 = vld [vmem:[#allocation6 + $0xed0] sm:$0xf]
    %v1501 = vld [vmem:[#allocation6 + $0xed4] sm:$0xf]
    %v1502 = vld [vmem:[#allocation6 + $0xed8] sm:$0xf]
    %v1503 = vld [vmem:[#allocation6 + $0xedc] sm:$0xf]
    %v1504 = vld [vmem:[#allocation6 + $0xee0] sm:$0xf]
    %v1505 = vld [vmem:[#allocation6 + $0xee4] sm:$0xf]
    %v1506 = vld [vmem:[#allocation6 + $0xee8] sm:$0xf]
    %v1507 = vld [vmem:[#allocation6 + $0xeec] sm:$0xf]
    %v1508 = vld [vmem:[#allocation6 + $0xef0] sm:$0xf]
    %v1509 = vld [vmem:[#allocation6 + $0xef4] sm:$0xf]
    %v1510 = vld [vmem:[#allocation6 + $0xef8] sm:$0xf]
    %v1511 = vld [vmem:[#allocation6 + $0xefc] sm:$0xf]
    %v1512 = vld [vmem:[#allocation6 + $0xf00] sm:$0xf]
    %v1513 = vld [vmem:[#allocation6 + $0xf04] sm:$0xf]
    %v1514 = vld [vmem:[#allocation6 + $0xf08] sm:$0xf]
    %v1515 = vld [vmem:[#allocation6 + $0xf0c] sm:$0xf]
    %v1516 = vld [vmem:[#allocation6 + $0xf10] sm:$0xf]
    %v1517 = vld [vmem:[#allocation6 + $0xf14] sm:$0xf]
    %v1518 = vld [vmem:[#allocation6 + $0xf18] sm:$0xf]
    %v1519 = vld [vmem:[#allocation6 + $0xf1c] sm:$0xf]
    %v1520 = vld [vmem:[#allocation6 + $0xf20] sm:$0xf]
    %v1521 = vld [vmem:[#allocation6 + $0xf24] sm:$0xf]
    %v1522 = vld [vmem:[#allocation6 + $0xf28] sm:$0xf]
    %v1523 = vld [vmem:[#allocation6 + $0xf2c] sm:$0xf]
    %v1524 = vld [vmem:[#allocation6 + $0xf30] sm:$0xf]
    %v1525 = vld [vmem:[#allocation6 + $0xf34] sm:$0xf]
    %v1526 = vld [vmem:[#allocation6 + $0xf38] sm:$0xf]
    %v1527 = vld [vmem:[#allocation6 + $0xf3c] sm:$0xf]
    %v1528 = vld [vmem:[#allocation6 + $0xf40] sm:$0xf]
    %v1529 = vld [vmem:[#allocation6 + $0xf44] sm:$0xf]
    %v1530 = vld [vmem:[#allocation6 + $0xf48] sm:$0xf]
    %v1531 = vld [vmem:[#allocation6 + $0xf4c] sm:$0xf]
    %v1532 = vld [vmem:[#allocation6 + $0xf50] sm:$0xf]
    %v1533 = vld [vmem:[#allocation6 + $0xf54] sm:$0xf]
    %v1534 = vld [vmem:[#allocation6 + $0xf58] sm:$0xf]
    %v1535 = vld [vmem:[#allocation6 + $0xf5c] sm:$0xf]
    %v1536 = vld [vmem:[#allocation6 + $0xf60] sm:$0xf]
    %v1537 = vld [vmem:[#allocation6 + $0xf64] sm:$0xf]
    %v1538 = vld [vmem:[#allocation6 + $0xf68] sm:$0xf]
    %v1539 = vld [vmem:[#allocation6 + $0xf6c] sm:$0xf]
    %v1540 = vld [vmem:[#allocation6 + $0xf70] sm:$0xf]
    %v1541 = vld [vmem:[#allocation6 + $0xf74] sm:$0xf]
    %v1542 = vld [vmem:[#allocation6 + $0xf78] sm:$0xf]
    %v1543 = vld [vmem:[#allocation6 + $0xf7c] sm:$0xf]
    %v1544 = vld [vmem:[#allocation6 + $0xf80] sm:$0xf]
    %v1545 = vld [vmem:[#allocation6 + $0xf84] sm:$0xf]
    %v1546 = vld [vmem:[#allocation6 + $0xf88] sm:$0xf]
    %v1547 = vld [vmem:[#allocation6 + $0xf8c] sm:$0xf]
    %v1548 = vld [vmem:[#allocation6 + $0xf90] sm:$0xf]
    %v1549 = vld [vmem:[#allocation6 + $0xf94] sm:$0xf]
    %v1550 = vld [vmem:[#allocation6 + $0xf98] sm:$0xf]
    %v1551 = vld [vmem:[#allocation6 + $0xf9c] sm:$0xf]
    %v1552 = vld [vmem:[#allocation6 + $0xfa0] sm:$0xf]
    %v1553 = vld [vmem:[#allocation6 + $0xfa4] sm:$0xf]
    %v1554 = vld [vmem:[#allocation6 + $0xfa8] sm:$0xf]
    %v1555 = vld [vmem:[#allocation6 + $0xfac] sm:$0xf]
    %v1556 = vld [vmem:[#allocation6 + $0xfb0] sm:$0xf]
    %v1557 = vld [vmem:[#allocation6 + $0xfb4] sm:$0xf]
    %v1558 = vld [vmem:[#allocation6 + $0xfb8] sm:$0xf]
    %v1559 = vld [vmem:[#allocation6 + $0xfbc] sm:$0xf]
    %v1560 = vld [vmem:[#allocation6 + $0xfc0] sm:$0xf]
    %v1561 = vld [vmem:[#allocation6 + $0xfc4] sm:$0xf]
    %v1562 = vld [vmem:[#allocation6 + $0xfc8] sm:$0xf]
    %v1563 = vld [vmem:[#allocation6 + $0xfcc] sm:$0xf]
    %v1564 = vld [vmem:[#allocation6 + $0xfd0] sm:$0xf]
    %v1565 = vld [vmem:[#allocation6 + $0xfd4] sm:$0xf]
    %v1566 = vld [vmem:[#allocation6 + $0xfd8] sm:$0xf]
    %v1567 = vld [vmem:[#allocation6 + $0xfdc] sm:$0xf]
    %v1568 = vld [vmem:[#allocation6 + $0xfe0] sm:$0xf]
    %v1569 = vld [vmem:[#allocation6 + $0xfe4] sm:$0xf]
    %v1570 = vld [vmem:[#allocation6 + $0xfe8] sm:$0xf]
    %v1571 = vld [vmem:[#allocation6 + $0xfec] sm:$0xf]
    %v1572 = vld [vmem:[#allocation6 + $0xff0] sm:$0xf]
    %v1573 = vld [vmem:[#allocation6 + $0xff4] sm:$0xf]
    %v1574 = vld [vmem:[#allocation6 + $0xff8] sm:$0xf]
    %v1575 = vld [vmem:[#allocation6 + $0xffc] sm:$0xf]
    %v1576 = vld [vmem:[#allocation6 + $0x1000] sm:$0xf]
    %v1577 = vld [vmem:[#allocation6 + $0x1004] sm:$0xf]
    %v1578 = vld [vmem:[#allocation6 + $0x1008] sm:$0xf]
    %v1579 = vld [vmem:[#allocation6 + $0x100c] sm:$0xf]
    %v1580 = vld [vmem:[#allocation6 + $0x1010] sm:$0xf]
    %v1581 = vld [vmem:[#allocation6 + $0x1014] sm:$0xf]
    %v1582 = vld [vmem:[#allocation6 + $0x1018] sm:$0xf]
    %v1583 = vld [vmem:[#allocation6 + $0x101c] sm:$0xf]
    %v1584 = vld [vmem:[#allocation6 + $0x1020] sm:$0xf]
    %v1585 = vld [vmem:[#allocation6 + $0x1024] sm:$0xf]
    %v1586 = vld [vmem:[#allocation6 + $0x1028] sm:$0xf]
    %v1587 = vld [vmem:[#allocation6 + $0x102c] sm:$0xf]
    %v1588 = vld [vmem:[#allocation6 + $0x1030] sm:$0xf]
    %v1589 = vld [vmem:[#allocation6 + $0x1034] sm:$0xf]
    %v1590 = vld [vmem:[#allocation6 + $0x1038] sm:$0xf]
    %v1591 = vld [vmem:[#allocation6 + $0x103c] sm:$0xf]
    %v1592 = vld [vmem:[#allocation6 + $0x1040] sm:$0xf]
    %v1593 = vld [vmem:[#allocation6 + $0x1044] sm:$0xf]
    %v1594 = vld [vmem:[#allocation6 + $0x1048] sm:$0xf]
    %v1595 = vld [vmem:[#allocation6 + $0x104c] sm:$0xf]
    %v1596 = vld [vmem:[#allocation6 + $0x1050] sm:$0xf]
    %v1597 = vld [vmem:[#allocation6 + $0x1054] sm:$0xf]
    %v1598 = vld [vmem:[#allocation6 + $0x1058] sm:$0xf]
    %v1599 = vld [vmem:[#allocation6 + $0x105c] sm:$0xf]
    %v1600 = vld [vmem:[#allocation6 + $0x1060] sm:$0xf]
    %v1601 = vld [vmem:[#allocation6 + $0x1064] sm:$0xf]
    %v1602 = vld [vmem:[#allocation6 + $0x1068] sm:$0xf]
    %v1603 = vld [vmem:[#allocation6 + $0x106c] sm:$0xf]
    %v1604 = vld [vmem:[#allocation6 + $0x1070] sm:$0xf]
    %v1605 = vld [vmem:[#allocation6 + $0x1074] sm:$0xf]
    %v1606 = vld [vmem:[#allocation6 + $0x1078] sm:$0xf]
    %v1607 = vld [vmem:[#allocation6 + $0x107c] sm:$0xf]
    %v1608 = vld [vmem:[#allocation6 + $0x1080] sm:$0xf]
    %v1609 = vld [vmem:[#allocation6 + $0x1084] sm:$0xf]
    %v1610 = vld [vmem:[#allocation6 + $0x1088] sm:$0xf]
    %v1611 = vld [vmem:[#allocation6 + $0x108c] sm:$0xf]
    %v1612 = vld [vmem:[#allocation6 + $0x1090] sm:$0xf]
    %v1613 = vld [vmem:[#allocation6 + $0x1094] sm:$0xf]
    %v1614 = vld [vmem:[#allocation6 + $0x1098] sm:$0xf]
    %v1615 = vld [vmem:[#allocation6 + $0x109c] sm:$0xf]
    %v1616 = vld [vmem:[#allocation6 + $0x10a0] sm:$0xf]
    %v1617 = vld [vmem:[#allocation6 + $0x10a4] sm:$0xf]
    %v1618 = vld [vmem:[#allocation6 + $0x10a8] sm:$0xf]
    %v1619 = vld [vmem:[#allocation6 + $0x10ac] sm:$0xf]
    %v1620 = vld [vmem:[#allocation6 + $0x10b0] sm:$0xf]
    %v1621 = vld [vmem:[#allocation6 + $0x10b4] sm:$0xf]
    %v1622 = vld [vmem:[#allocation6 + $0x10b8] sm:$0xf]
    %v1623 = vld [vmem:[#allocation6 + $0x10bc] sm:$0xf]
    %v1624 = vld [vmem:[#allocation6 + $0x10c0] sm:$0xf]
    %v1625 = vld [vmem:[#allocation6 + $0x10c4] sm:$0xf]
    %v1626 = vld [vmem:[#allocation6 + $0x10c8] sm:$0xf]
    %v1627 = vld [vmem:[#allocation6 + $0x10cc] sm:$0xf]
    %v1628 = vld [vmem:[#allocation6 + $0x10d0] sm:$0xf]
    %v1629 = vld [vmem:[#allocation6 + $0x10d4] sm:$0xf]
    %v1630 = vld [vmem:[#allocation6 + $0x10d8] sm:$0xf]
    %v1631 = vld [vmem:[#allocation6 + $0x10dc] sm:$0xf]
    %v1632 = vld [vmem:[#allocation6 + $0x10e0] sm:$0xf]
    %v1633 = vld [vmem:[#allocation6 + $0x10e4] sm:$0xf]
    %v1634 = vld [vmem:[#allocation6 + $0x10e8] sm:$0xf]
    %v1635 = vld [vmem:[#allocation6 + $0x10ec] sm:$0xf]
    %v1636 = vld [vmem:[#allocation6 + $0x10f0] sm:$0xf]
    %v1637 = vld [vmem:[#allocation6 + $0x10f4] sm:$0xf]
    %v1638 = vld [vmem:[#allocation6 + $0x10f8] sm:$0xf]
    %v1639 = vld [vmem:[#allocation6 + $0x10fc] sm:$0xf]
    %v1640 = vld [vmem:[#allocation6 + $0x1100] sm:$0xf]
    %v1641 = vld [vmem:[#allocation6 + $0x1104] sm:$0xf]
    %v1642 = vld [vmem:[#allocation6 + $0x1108] sm:$0xf]
    %v1643 = vld [vmem:[#allocation6 + $0x110c] sm:$0xf]
    %v1644 = vld [vmem:[#allocation6 + $0x1110] sm:$0xf]
    %v1645 = vld [vmem:[#allocation6 + $0x1114] sm:$0xf]
    %v1646 = vld [vmem:[#allocation6 + $0x1118] sm:$0xf]
    %v1647 = vld [vmem:[#allocation6 + $0x111c] sm:$0xf]
    %v1648 = vld [vmem:[#allocation6 + $0x1120] sm:$0xf]
    %v1649 = vld [vmem:[#allocation6 + $0x1124] sm:$0xf]
    %v1650 = vld [vmem:[#allocation6 + $0x1128] sm:$0xf]
    %v1651 = vld [vmem:[#allocation6 + $0x112c] sm:$0xf]
    %v1652 = vld [vmem:[#allocation6 + $0x1130] sm:$0xf]
    %v1653 = vld [vmem:[#allocation6 + $0x1134] sm:$0xf]
    %v1654 = vld [vmem:[#allocation6 + $0x1138] sm:$0xf]
    %v1655 = vld [vmem:[#allocation6 + $0x113c] sm:$0xf]
    %v1656 = vld [vmem:[#allocation6 + $0x1140] sm:$0xf]
    %v1657 = vld [vmem:[#allocation6 + $0x1144] sm:$0xf]
    %v1658 = vld [vmem:[#allocation6 + $0x1148] sm:$0xf]
    %v1659 = vld [vmem:[#allocation6 + $0x114c] sm:$0xf]
    %v1660 = vld [vmem:[#allocation6 + $0x1150] sm:$0xf]
    %v1661 = vld [vmem:[#allocation6 + $0x1154] sm:$0xf]
    %v1662 = vld [vmem:[#allocation6 + $0x1158] sm:$0xf]
    %v1663 = vld [vmem:[#allocation6 + $0x115c] sm:$0xf]
    %v1664 = vld [vmem:[#allocation6 + $0x1160] sm:$0xf]
    %v1665 = vld [vmem:[#allocation6 + $0x1164] sm:$0xf]
    %v1666 = vld [vmem:[#allocation6 + $0x1168] sm:$0xf]
    %v1667 = vld [vmem:[#allocation6 + $0x116c] sm:$0xf]
    %v1668 = vld [vmem:[#allocation6 + $0x1170] sm:$0xf]
    %v1669 = vld [vmem:[#allocation6 + $0x1174] sm:$0xf]
    %v1670 = vld [vmem:[#allocation6 + $0x1178] sm:$0xf]
    %v1671 = vld [vmem:[#allocation6 + $0x117c] sm:$0xf]
    %v1672 = vld [vmem:[#allocation6 + $0x1180] sm:$0xf]
    %v1673 = vld [vmem:[#allocation6 + $0x1184] sm:$0xf]
    %v1674 = vld [vmem:[#allocation6 + $0x1188] sm:$0xf]
    %v1675 = vld [vmem:[#allocation6 + $0x118c] sm:$0xf]
    %v1676 = vld [vmem:[#allocation6 + $0x1190] sm:$0xf]
    %v1677 = vld [vmem:[#allocation6 + $0x1194] sm:$0xf]
    %v1678 = vld [vmem:[#allocation6 + $0x1198] sm:$0xf]
    %v1679 = vld [vmem:[#allocation6 + $0x119c] sm:$0xf]
    %v1680 = vld [vmem:[#allocation6 + $0x11a0] sm:$0xf]
    %v1681 = vld [vmem:[#allocation6 + $0x11a4] sm:$0xf]
    %v1682 = vld [vmem:[#allocation6 + $0x11a8] sm:$0xf]
    %v1683 = vld [vmem:[#allocation6 + $0x11ac] sm:$0xf]
    %v1684 = vld [vmem:[#allocation6 + $0x11b0] sm:$0xf]
    %v1685 = vld [vmem:[#allocation6 + $0x11b4] sm:$0xf]
    %v1686 = vld [vmem:[#allocation6 + $0x11b8] sm:$0xf]
    %v1687 = vld [vmem:[#allocation6 + $0x11bc] sm:$0xf]
    %v1688 = vld [vmem:[#allocation6 + $0x11c0] sm:$0xf]
    %v1689 = vld [vmem:[#allocation6 + $0x11c4] sm:$0xf]
    %v1690 = vld [vmem:[#allocation6 + $0x11c8] sm:$0xf]
    %v1691 = vld [vmem:[#allocation6 + $0x11cc] sm:$0xf]
    %v1692 = vld [vmem:[#allocation6 + $0x11d0] sm:$0xf]
    %v1693 = vld [vmem:[#allocation6 + $0x11d4] sm:$0xf]
    %v1694 = vld [vmem:[#allocation6 + $0x11d8] sm:$0xf]
    %v1695 = vld [vmem:[#allocation6 + $0x11dc] sm:$0xf]
    %v1696 = vld [vmem:[#allocation6 + $0x11e0] sm:$0xf]
    %v1697 = vld [vmem:[#allocation6 + $0x11e4] sm:$0xf]
    %v1698 = vld [vmem:[#allocation6 + $0x11e8] sm:$0xf]
    %v1699 = vld [vmem:[#allocation6 + $0x11ec] sm:$0xf]
    %v1700 = vld [vmem:[#allocation6 + $0x11f0] sm:$0xf]
    %v1701 = vld [vmem:[#allocation6 + $0x11f4] sm:$0xf]
    %v1702 = vld [vmem:[#allocation6 + $0x11f8] sm:$0xf]
    %v1703 = vld [vmem:[#allocation6 + $0x11fc] sm:$0xf]
    %v1704 = vpack.c.bf16 %v480, %v480
    %v1705 = vpack.c.bf16 %v481, %v481
    %v1706 = vpack.c.bf16 %v482, %v482
    %v1707 = vpack.c.bf16 %v483, %v483
    %v1708 = vpack.c.bf16 %v484, %v484
    %v1709 = vpack.c.bf16 %v485, %v485
    %v1710 = vpack.c.bf16 %v486, %v486
    %v1711 = vpack.c.bf16 %v487, %v487
    %v1712 = vpack.c.bf16 %v488, %v488
    %v1713 = vpack.c.bf16 %v489, %v489
    %v1714 = vpack.c.bf16 %v490, %v490
    %v1715 = vpack.c.bf16 %v491, %v491
    %v1716 = vpack.c.bf16 %v492, %v492
    %v1717 = vpack.c.bf16 %v493, %v493
    %v1718 = vpack.c.bf16 %v494, %v494
    %v1719 = vpack.c.bf16 %v495, %v495
    %v1720 = vpack.c.bf16 %v496, %v496
    %v1721 = vpack.c.bf16 %v497, %v497
    %v1722 = vpack.c.bf16 %v498, %v498
    %v1723 = vpack.c.bf16 %v499, %v499
    %v1724 = vpack.c.bf16 %v500, %v500
    %v1725 = vpack.c.bf16 %v501, %v501
    %v1726 = vpack.c.bf16 %v502, %v502
    %v1727 = vpack.c.bf16 %v503, %v503
    %v1728 = vpack.c.bf16 %v504, %v504
    %v1729 = vpack.c.bf16 %v505, %v505
    %v1730 = vpack.c.bf16 %v506, %v506
    %v1731 = vpack.c.bf16 %v507, %v507
    %v1732 = vpack.c.bf16 %v508, %v508
    %v1733 = vpack.c.bf16 %v509, %v509
    %v1734 = vpack.c.bf16 %v510, %v510
    %v1735 = vpack.c.bf16 %v511, %v511
    %v1736 = vpack.c.bf16 %v512, %v512
    %v1737 = vpack.c.bf16 %v513, %v513
    %v1738 = vpack.c.bf16 %v514, %v514
    %v1739 = vpack.c.bf16 %v515, %v515
    %v1740 = vpack.c.bf16 %v516, %v516
    %v1741 = vpack.c.bf16 %v517, %v517
    %v1742 = vpack.c.bf16 %v518, %v518
    %v1743 = vpack.c.bf16 %v519, %v519
    %v1744 = vpack.c.bf16 %v520, %v520
    %v1745 = vpack.c.bf16 %v521, %v521
    %v1746 = vpack.c.bf16 %v522, %v522
    %v1747 = vpack.c.bf16 %v523, %v523
    %v1748 = vpack.c.bf16 %v524, %v524
    %v1749 = vpack.c.bf16 %v525, %v525
    %v1750 = vpack.c.bf16 %v526, %v526
    %v1751 = vpack.c.bf16 %v527, %v527
    %v1752 = vpack.c.bf16 %v528, %v528
    %v1753 = vpack.c.bf16 %v529, %v529
    %v1754 = vpack.c.bf16 %v530, %v530
    %v1755 = vpack.c.bf16 %v531, %v531
    %v1756 = vpack.c.bf16 %v532, %v532
    %v1757 = vpack.c.bf16 %v533, %v533
    %v1758 = vpack.c.bf16 %v534, %v534
    %v1759 = vpack.c.bf16 %v535, %v535
    %v1760 = vpack.c.bf16 %v536, %v536
    %v1761 = vpack.c.bf16 %v537, %v537
    %v1762 = vpack.c.bf16 %v538, %v538
    %v1763 = vpack.c.bf16 %v539, %v539
    %v1764 = vpack.c.bf16 %v540, %v540
    %v1765 = vpack.c.bf16 %v541, %v541
    %v1766 = vpack.c.bf16 %v542, %v542
    %v1767 = vpack.c.bf16 %v543, %v543
    %v1768 = vpack.c.bf16 %v544, %v544
    %v1769 = vpack.c.bf16 %v545, %v545
    %v1770 = vpack.c.bf16 %v546, %v546
    %v1771 = vpack.c.bf16 %v547, %v547
    %v1772 = vpack.c.bf16 %v548, %v548
    %v1773 = vpack.c.bf16 %v549, %v549
    %v1774 = vpack.c.bf16 %v550, %v550
    %v1775 = vpack.c.bf16 %v551, %v551
    %v2928 = vunpack.c.l.b16 %v552
    %v2929 = vunpack.c.l.b16 %v553
    %v2930 = vunpack.c.l.b16 %v554
    %v2931 = vunpack.c.l.b16 %v555
    %v2932 = vunpack.c.l.b16 %v556
    %v2933 = vunpack.c.l.b16 %v557
    %v2934 = vunpack.c.l.b16 %v558
    %v2935 = vunpack.c.l.b16 %v559
    %v2936 = vunpack.c.l.b16 %v560
    %v2937 = vunpack.c.l.b16 %v561
    %v2938 = vunpack.c.l.b16 %v562
    %v2939 = vunpack.c.l.b16 %v563
    %v2940 = vunpack.c.l.b16 %v564
    %v2941 = vunpack.c.l.b16 %v565
    %v2942 = vunpack.c.l.b16 %v566
    %v2943 = vunpack.c.l.b16 %v567
    %v2944 = vunpack.c.l.b16 %v568
    %v2945 = vunpack.c.l.b16 %v569
    %v2946 = vunpack.c.l.b16 %v570
    %v2947 = vunpack.c.l.b16 %v571
    %v2948 = vunpack.c.l.b16 %v572
    %v2949 = vunpack.c.l.b16 %v573
    %v2950 = vunpack.c.l.b16 %v574
    %v2951 = vunpack.c.l.b16 %v575
    %v2952 = vunpack.c.l.b16 %v576
    %v2953 = vunpack.c.l.b16 %v577
    %v2954 = vunpack.c.l.b16 %v578
    %v2955 = vunpack.c.l.b16 %v579
    %v2956 = vunpack.c.l.b16 %v580
    %v2957 = vunpack.c.l.b16 %v581
    %v2958 = vunpack.c.l.b16 %v582
    %v2959 = vunpack.c.l.b16 %v583
    %v2960 = vunpack.c.l.b16 %v584
    %v2961 = vunpack.c.l.b16 %v585
    %v2962 = vunpack.c.l.b16 %v586
    %v2963 = vunpack.c.l.b16 %v587
    %v2964 = vunpack.c.l.b16 %v588
    %v2965 = vunpack.c.l.b16 %v589
    %v2966 = vunpack.c.l.b16 %v590
    %v2967 = vunpack.c.l.b16 %v591
    %v2968 = vunpack.c.l.b16 %v592
    %v2969 = vunpack.c.l.b16 %v593
    %v2970 = vunpack.c.l.b16 %v594
    %v2971 = vunpack.c.l.b16 %v595
    %v2972 = vunpack.c.l.b16 %v596
    %v2973 = vunpack.c.l.b16 %v597
    %v2974 = vunpack.c.l.b16 %v598
    %v2975 = vunpack.c.l.b16 %v599
    %v2976 = vunpack.c.l.b16 %v600
    %v2977 = vunpack.c.l.b16 %v601
    %v2978 = vunpack.c.l.b16 %v602
    %v2979 = vunpack.c.l.b16 %v603
    %v2980 = vunpack.c.l.b16 %v604
    %v2981 = vunpack.c.l.b16 %v605
    %v2982 = vunpack.c.l.b16 %v606
    %v2983 = vunpack.c.l.b16 %v607
    %v2984 = vunpack.c.l.b16 %v608
    %v2985 = vunpack.c.l.b16 %v609
    %v2986 = vunpack.c.l.b16 %v610
    %v2987 = vunpack.c.l.b16 %v611
    %v2988 = vunpack.c.l.b16 %v612
    %v2989 = vunpack.c.l.b16 %v613
    %v2990 = vunpack.c.l.b16 %v614
    %v2991 = vunpack.c.l.b16 %v615
    %v2992 = vunpack.c.l.b16 %v616
    %v2993 = vunpack.c.l.b16 %v617
    %v2994 = vunpack.c.l.b16 %v618
    %v2995 = vunpack.c.l.b16 %v619
    %v2996 = vunpack.c.l.b16 %v620
    %v2997 = vunpack.c.l.b16 %v621
    %v2998 = vunpack.c.l.b16 %v622
    %v2999 = vunpack.c.l.b16 %v623
    %v3000 = vunpack.c.l.b16 %v624
    %v3001 = vunpack.c.l.b16 %v625
    %v3002 = vunpack.c.l.b16 %v626
    %v3003 = vunpack.c.l.b16 %v627
    %v3004 = vunpack.c.l.b16 %v628
    %v3005 = vunpack.c.l.b16 %v629
    %v3006 = vunpack.c.l.b16 %v630
    %v3007 = vunpack.c.l.b16 %v631
    %v3008 = vunpack.c.l.b16 %v632
    %v3009 = vunpack.c.l.b16 %v633
    %v3010 = vunpack.c.l.b16 %v634
    %v3011 = vunpack.c.l.b16 %v635
    %v3012 = vunpack.c.l.b16 %v636
    %v3013 = vunpack.c.l.b16 %v637
    %v3014 = vunpack.c.l.b16 %v638
    %v3015 = vunpack.c.l.b16 %v639
    %v3016 = vunpack.c.l.b16 %v640
    %v3017 = vunpack.c.l.b16 %v641
    %v3018 = vunpack.c.l.b16 %v642
    %v3019 = vunpack.c.l.b16 %v643
    %v3020 = vunpack.c.l.b16 %v644
    %v3021 = vunpack.c.l.b16 %v645
    %v3022 = vunpack.c.l.b16 %v646
    %v3023 = vunpack.c.l.b16 %v647
    %v3024 = vunpack.c.l.b16 %v648
    %v3025 = vunpack.c.l.b16 %v649
    %v3026 = vunpack.c.l.b16 %v650
    %v3027 = vunpack.c.l.b16 %v651
    %v3028 = vunpack.c.l.b16 %v652
    %v3029 = vunpack.c.l.b16 %v653
    %v3030 = vunpack.c.l.b16 %v654
    %v3031 = vunpack.c.l.b16 %v655
    %v3032 = vunpack.c.l.b16 %v656
    %v3033 = vunpack.c.l.b16 %v657
    %v3034 = vunpack.c.l.b16 %v658
    %v3035 = vunpack.c.l.b16 %v659
    %v3036 = vunpack.c.l.b16 %v660
    %v3037 = vunpack.c.l.b16 %v661
    %v3038 = vunpack.c.l.b16 %v662
    %v3039 = vunpack.c.l.b16 %v663
    %v3040 = vunpack.c.l.b16 %v664
    %v3041 = vunpack.c.l.b16 %v665
    %v3042 = vunpack.c.l.b16 %v666
    %v3043 = vunpack.c.l.b16 %v667
    %v3044 = vunpack.c.l.b16 %v668
    %v3045 = vunpack.c.l.b16 %v669
    %v3046 = vunpack.c.l.b16 %v670
    %v3047 = vunpack.c.l.b16 %v671
    %v3048 = vunpack.c.l.b16 %v672
    %v3049 = vunpack.c.l.b16 %v673
    %v3050 = vunpack.c.l.b16 %v674
    %v3051 = vunpack.c.l.b16 %v675
    %v3052 = vunpack.c.l.b16 %v676
    %v3053 = vunpack.c.l.b16 %v677
    %v3054 = vunpack.c.l.b16 %v678
    %v3055 = vunpack.c.l.b16 %v679
    %v3056 = vunpack.c.l.b16 %v680
    %v3057 = vunpack.c.l.b16 %v681
    %v3058 = vunpack.c.l.b16 %v682
    %v3059 = vunpack.c.l.b16 %v683
    %v3060 = vunpack.c.l.b16 %v684
    %v3061 = vunpack.c.l.b16 %v685
    %v3062 = vunpack.c.l.b16 %v686
    %v3063 = vunpack.c.l.b16 %v687
    %v3064 = vunpack.c.l.b16 %v688
    %v3065 = vunpack.c.l.b16 %v689
    %v3066 = vunpack.c.l.b16 %v690
    %v3067 = vunpack.c.l.b16 %v691
    %v3068 = vunpack.c.l.b16 %v692
    %v3069 = vunpack.c.l.b16 %v693
    %v3070 = vunpack.c.l.b16 %v694
    %v3071 = vunpack.c.l.b16 %v695
    %v3072 = vunpack.c.l.b16 %v696
    %v3073 = vunpack.c.l.b16 %v697
    %v3074 = vunpack.c.l.b16 %v698
    %v3075 = vunpack.c.l.b16 %v699
    %v3076 = vunpack.c.l.b16 %v700
    %v3077 = vunpack.c.l.b16 %v701
    %v3078 = vunpack.c.l.b16 %v702
    %v3079 = vunpack.c.l.b16 %v703
    %v3080 = vunpack.c.l.b16 %v704
    %v3081 = vunpack.c.l.b16 %v705
    %v3082 = vunpack.c.l.b16 %v706
    %v3083 = vunpack.c.l.b16 %v707
    %v3084 = vunpack.c.l.b16 %v708
    %v3085 = vunpack.c.l.b16 %v709
    %v3086 = vunpack.c.l.b16 %v710
    %v3087 = vunpack.c.l.b16 %v711
    %v3088 = vunpack.c.l.b16 %v712
    %v3089 = vunpack.c.l.b16 %v713
    %v3090 = vunpack.c.l.b16 %v714
    %v3091 = vunpack.c.l.b16 %v715
    %v3092 = vunpack.c.l.b16 %v716
    %v3093 = vunpack.c.l.b16 %v717
    %v3094 = vunpack.c.l.b16 %v718
    %v3095 = vunpack.c.l.b16 %v719
    %v3096 = vunpack.c.l.b16 %v720
    %v3097 = vunpack.c.l.b16 %v721
    %v3098 = vunpack.c.l.b16 %v722
    %v3099 = vunpack.c.l.b16 %v723
    %v3100 = vunpack.c.l.b16 %v724
    %v3101 = vunpack.c.l.b16 %v725
    %v3102 = vunpack.c.l.b16 %v726
    %v3103 = vunpack.c.l.b16 %v727
    %v3104 = vunpack.c.l.b16 %v728
    %v3105 = vunpack.c.l.b16 %v729
    %v3106 = vunpack.c.l.b16 %v730
    %v3107 = vunpack.c.l.b16 %v731
    %v3108 = vunpack.c.l.b16 %v732
    %v3109 = vunpack.c.l.b16 %v733
    %v3110 = vunpack.c.l.b16 %v734
    %v3111 = vunpack.c.l.b16 %v735
    %v3112 = vunpack.c.l.b16 %v736
    %v3113 = vunpack.c.l.b16 %v737
    %v3114 = vunpack.c.l.b16 %v738
    %v3115 = vunpack.c.l.b16 %v739
    %v3116 = vunpack.c.l.b16 %v740
    %v3117 = vunpack.c.l.b16 %v741
    %v3118 = vunpack.c.l.b16 %v742
    %v3119 = vunpack.c.l.b16 %v743
    %v3120 = vunpack.c.l.b16 %v744
    %v3121 = vunpack.c.l.b16 %v745
    %v3122 = vunpack.c.l.b16 %v746
    %v3123 = vunpack.c.l.b16 %v747
    %v3124 = vunpack.c.l.b16 %v748
    %v3125 = vunpack.c.l.b16 %v749
    %v3126 = vunpack.c.l.b16 %v750
    %v3127 = vunpack.c.l.b16 %v751
    %v3128 = vunpack.c.l.b16 %v752
    %v3129 = vunpack.c.l.b16 %v753
    %v3130 = vunpack.c.l.b16 %v754
    %v3131 = vunpack.c.l.b16 %v755
    %v3132 = vunpack.c.l.b16 %v756
    %v3133 = vunpack.c.l.b16 %v757
    %v3134 = vunpack.c.l.b16 %v758
    %v3135 = vunpack.c.l.b16 %v759
    %v3136 = vunpack.c.l.b16 %v760
    %v3137 = vunpack.c.l.b16 %v761
    %v3138 = vunpack.c.l.b16 %v762
    %v3139 = vunpack.c.l.b16 %v763
    %v3140 = vunpack.c.l.b16 %v764
    %v3141 = vunpack.c.l.b16 %v765
    %v3142 = vunpack.c.l.b16 %v766
    %v3143 = vunpack.c.l.b16 %v767
    %v3144 = vunpack.c.l.b16 %v768
    %v3145 = vunpack.c.l.b16 %v769
    %v3146 = vunpack.c.l.b16 %v770
    %v3147 = vunpack.c.l.b16 %v771
    %v3148 = vunpack.c.l.b16 %v772
    %v3149 = vunpack.c.l.b16 %v773
    %v3150 = vunpack.c.l.b16 %v774
    %v3151 = vunpack.c.l.b16 %v775
    %v3152 = vunpack.c.l.b16 %v776
    %v3153 = vunpack.c.l.b16 %v777
    %v3154 = vunpack.c.l.b16 %v778
    %v3155 = vunpack.c.l.b16 %v779
    %v3156 = vunpack.c.l.b16 %v780
    %v3157 = vunpack.c.l.b16 %v781
    %v3158 = vunpack.c.l.b16 %v782
    %v3159 = vunpack.c.l.b16 %v783
    %v3160 = vunpack.c.l.b16 %v784
    %v3161 = vunpack.c.l.b16 %v785
    %v3162 = vunpack.c.l.b16 %v786
    %v3163 = vunpack.c.l.b16 %v787
    %v3164 = vunpack.c.l.b16 %v788
    %v3165 = vunpack.c.l.b16 %v789
    %v3166 = vunpack.c.l.b16 %v790
    %v3167 = vunpack.c.l.b16 %v791
    %v3168 = vunpack.c.l.b16 %v792
    %v3169 = vunpack.c.l.b16 %v793
    %v3170 = vunpack.c.l.b16 %v794
    %v3171 = vunpack.c.l.b16 %v795
    %v3172 = vunpack.c.l.b16 %v796
    %v3173 = vunpack.c.l.b16 %v797
    %v3174 = vunpack.c.l.b16 %v798
    %v3175 = vunpack.c.l.b16 %v799
    %v3176 = vunpack.c.l.b16 %v800
    %v3177 = vunpack.c.l.b16 %v801
    %v3178 = vunpack.c.l.b16 %v802
    %v3179 = vunpack.c.l.b16 %v803
    %v3180 = vunpack.c.l.b16 %v804
    %v3181 = vunpack.c.l.b16 %v805
    %v3182 = vunpack.c.l.b16 %v806
    %v3183 = vunpack.c.l.b16 %v807
    %v3184 = vunpack.c.l.b16 %v808
    %v3185 = vunpack.c.l.b16 %v809
    %v3186 = vunpack.c.l.b16 %v810
    %v3187 = vunpack.c.l.b16 %v811
    %v3188 = vunpack.c.l.b16 %v812
    %v3189 = vunpack.c.l.b16 %v813
    %v3190 = vunpack.c.l.b16 %v814
    %v3191 = vunpack.c.l.b16 %v815
    %v3192 = vunpack.c.l.b16 %v816
    %v3193 = vunpack.c.l.b16 %v817
    %v3194 = vunpack.c.l.b16 %v818
    %v3195 = vunpack.c.l.b16 %v819
    %v3196 = vunpack.c.l.b16 %v820
    %v3197 = vunpack.c.l.b16 %v821
    %v3198 = vunpack.c.l.b16 %v822
    %v3199 = vunpack.c.l.b16 %v823
    %v3200 = vunpack.c.l.b16 %v824
    %v3201 = vunpack.c.l.b16 %v825
    %v3202 = vunpack.c.l.b16 %v826
    %v3203 = vunpack.c.l.b16 %v827
    %v3204 = vunpack.c.l.b16 %v828
    %v3205 = vunpack.c.l.b16 %v829
    %v3206 = vunpack.c.l.b16 %v830
    %v3207 = vunpack.c.l.b16 %v831
    %v3208 = vunpack.c.l.b16 %v832
    %v3209 = vunpack.c.l.b16 %v833
    %v3210 = vunpack.c.l.b16 %v834
    %v3211 = vunpack.c.l.b16 %v835
    %v3212 = vunpack.c.l.b16 %v836
    %v3213 = vunpack.c.l.b16 %v837
    %v3214 = vunpack.c.l.b16 %v838
    %v3215 = vunpack.c.l.b16 %v839
    %v3216 = vunpack.c.l.b16 %v840
    %v3217 = vunpack.c.l.b16 %v841
    %v3218 = vunpack.c.l.b16 %v842
    %v3219 = vunpack.c.l.b16 %v843
    %v3220 = vunpack.c.l.b16 %v844
    %v3221 = vunpack.c.l.b16 %v845
    %v3222 = vunpack.c.l.b16 %v846
    %v3223 = vunpack.c.l.b16 %v847
    %v3224 = vunpack.c.l.b16 %v848
    %v3225 = vunpack.c.l.b16 %v849
    %v3226 = vunpack.c.l.b16 %v850
    %v3227 = vunpack.c.l.b16 %v851
    %v3228 = vunpack.c.l.b16 %v852
    %v3229 = vunpack.c.l.b16 %v853
    %v3230 = vunpack.c.l.b16 %v854
    %v3231 = vunpack.c.l.b16 %v855
    %v3232 = vunpack.c.l.b16 %v856
    %v3233 = vunpack.c.l.b16 %v857
    %v3234 = vunpack.c.l.b16 %v858
    %v3235 = vunpack.c.l.b16 %v859
    %v3236 = vunpack.c.l.b16 %v860
    %v3237 = vunpack.c.l.b16 %v861
    %v3238 = vunpack.c.l.b16 %v862
    %v3239 = vunpack.c.l.b16 %v863
    %v3240 = vunpack.c.l.b16 %v864
    %v3241 = vunpack.c.l.b16 %v865
    %v3242 = vunpack.c.l.b16 %v866
    %v3243 = vunpack.c.l.b16 %v867
    %v3244 = vunpack.c.l.b16 %v868
    %v3245 = vunpack.c.l.b16 %v869
    %v3246 = vunpack.c.l.b16 %v870
    %v3247 = vunpack.c.l.b16 %v871
    %v3248 = vunpack.c.l.b16 %v872
    %v3249 = vunpack.c.l.b16 %v873
    %v3250 = vunpack.c.l.b16 %v874
    %v3251 = vunpack.c.l.b16 %v875
    %v3252 = vunpack.c.l.b16 %v876
    %v3253 = vunpack.c.l.b16 %v877
    %v3254 = vunpack.c.l.b16 %v878
    %v3255 = vunpack.c.l.b16 %v879
    %v3256 = vunpack.c.l.b16 %v880
    %v3257 = vunpack.c.l.b16 %v881
    %v3258 = vunpack.c.l.b16 %v882
    %v3259 = vunpack.c.l.b16 %v883
    %v3260 = vunpack.c.l.b16 %v884
    %v3261 = vunpack.c.l.b16 %v885
    %v3262 = vunpack.c.l.b16 %v886
    %v3263 = vunpack.c.l.b16 %v887
    %v3264 = vunpack.c.l.b16 %v888
    %v3265 = vunpack.c.l.b16 %v889
    %v3266 = vunpack.c.l.b16 %v890
    %v3267 = vunpack.c.l.b16 %v891
    %v3268 = vunpack.c.l.b16 %v892
    %v3269 = vunpack.c.l.b16 %v893
    %v3270 = vunpack.c.l.b16 %v894
    %v3271 = vunpack.c.l.b16 %v895
    %v3272 = vunpack.c.l.b16 %v896
    %v3273 = vunpack.c.l.b16 %v897
    %v3274 = vunpack.c.l.b16 %v898
    %v3275 = vunpack.c.l.b16 %v899
    %v3276 = vunpack.c.l.b16 %v900
    %v3277 = vunpack.c.l.b16 %v901
    %v3278 = vunpack.c.l.b16 %v902
    %v3279 = vunpack.c.l.b16 %v903
    %v3280 = vunpack.c.l.b16 %v904
    %v3281 = vunpack.c.l.b16 %v905
    %v3282 = vunpack.c.l.b16 %v906
    %v3283 = vunpack.c.l.b16 %v907
    %v3284 = vunpack.c.l.b16 %v908
    %v3285 = vunpack.c.l.b16 %v909
    %v3286 = vunpack.c.l.b16 %v910
    %v3287 = vunpack.c.l.b16 %v911
    %v3288 = vunpack.c.l.b16 %v912
    %v3289 = vunpack.c.l.b16 %v913
    %v3290 = vunpack.c.l.b16 %v914
    %v3291 = vunpack.c.l.b16 %v915
    %v3292 = vunpack.c.l.b16 %v916
    %v3293 = vunpack.c.l.b16 %v917
    %v3294 = vunpack.c.l.b16 %v918
    %v3295 = vunpack.c.l.b16 %v919
    %v3296 = vunpack.c.l.b16 %v920
    %v3297 = vunpack.c.l.b16 %v921
    %v3298 = vunpack.c.l.b16 %v922
    %v3299 = vunpack.c.l.b16 %v923
    %v3300 = vunpack.c.l.b16 %v924
    %v3301 = vunpack.c.l.b16 %v925
    %v3302 = vunpack.c.l.b16 %v926
    %v3303 = vunpack.c.l.b16 %v927
    %v3304 = vunpack.c.l.b16 %v928
    %v3305 = vunpack.c.l.b16 %v929
    %v3306 = vunpack.c.l.b16 %v930
    %v3307 = vunpack.c.l.b16 %v931
    %v3308 = vunpack.c.l.b16 %v932
    %v3309 = vunpack.c.l.b16 %v933
    %v3310 = vunpack.c.l.b16 %v934
    %v3311 = vunpack.c.l.b16 %v935
    %v3312 = vunpack.c.l.b16 %v936
    %v3313 = vunpack.c.l.b16 %v937
    %v3314 = vunpack.c.l.b16 %v938
    %v3315 = vunpack.c.l.b16 %v939
    %v3316 = vunpack.c.l.b16 %v940
    %v3317 = vunpack.c.l.b16 %v941
    %v3318 = vunpack.c.l.b16 %v942
    %v3319 = vunpack.c.l.b16 %v943
    %v3320 = vunpack.c.l.b16 %v944
    %v3321 = vunpack.c.l.b16 %v945
    %v3322 = vunpack.c.l.b16 %v946
    %v3323 = vunpack.c.l.b16 %v947
    %v3324 = vunpack.c.l.b16 %v948
    %v3325 = vunpack.c.l.b16 %v949
    %v3326 = vunpack.c.l.b16 %v950
    %v3327 = vunpack.c.l.b16 %v951
    %v3328 = vunpack.c.l.b16 %v952
    %v3329 = vunpack.c.l.b16 %v953
    %v3330 = vunpack.c.l.b16 %v954
    %v3331 = vunpack.c.l.b16 %v955
    %v3332 = vunpack.c.l.b16 %v956
    %v3333 = vunpack.c.l.b16 %v957
    %v3334 = vunpack.c.l.b16 %v958
    %v3335 = vunpack.c.l.b16 %v959
    %v3336 = vunpack.c.l.b16 %v960
    %v3337 = vunpack.c.l.b16 %v961
    %v3338 = vunpack.c.l.b16 %v962
    %v3339 = vunpack.c.l.b16 %v963
    %v3340 = vunpack.c.l.b16 %v964
    %v3341 = vunpack.c.l.b16 %v965
    %v3342 = vunpack.c.l.b16 %v966
    %v3343 = vunpack.c.l.b16 %v967
    %v3344 = vunpack.c.l.b16 %v968
    %v3345 = vunpack.c.l.b16 %v969
    %v3346 = vunpack.c.l.b16 %v970
    %v3347 = vunpack.c.l.b16 %v971
    %v3348 = vunpack.c.l.b16 %v972
    %v3349 = vunpack.c.l.b16 %v973
    %v3350 = vunpack.c.l.b16 %v974
    %v3351 = vunpack.c.l.b16 %v975
    %v3352 = vunpack.c.l.b16 %v976
    %v3353 = vunpack.c.l.b16 %v977
    %v3354 = vunpack.c.l.b16 %v978
    %v3355 = vunpack.c.l.b16 %v979
    %v3356 = vunpack.c.l.b16 %v980
    %v3357 = vunpack.c.l.b16 %v981
    %v3358 = vunpack.c.l.b16 %v982
    %v3359 = vunpack.c.l.b16 %v983
    %v3360 = vunpack.c.l.b16 %v984
    %v3361 = vunpack.c.l.b16 %v985
    %v3362 = vunpack.c.l.b16 %v986
    %v3363 = vunpack.c.l.b16 %v987
    %v3364 = vunpack.c.l.b16 %v988
    %v3365 = vunpack.c.l.b16 %v989
    %v3366 = vunpack.c.l.b16 %v990
    %v3367 = vunpack.c.l.b16 %v991
    %v3368 = vunpack.c.l.b16 %v992
    %v3369 = vunpack.c.l.b16 %v993
    %v3370 = vunpack.c.l.b16 %v994
    %v3371 = vunpack.c.l.b16 %v995
    %v3372 = vunpack.c.l.b16 %v996
    %v3373 = vunpack.c.l.b16 %v997
    %v3374 = vunpack.c.l.b16 %v998
    %v3375 = vunpack.c.l.b16 %v999
    %v3376 = vunpack.c.l.b16 %v1000
    %v3377 = vunpack.c.l.b16 %v1001
    %v3378 = vunpack.c.l.b16 %v1002
    %v3379 = vunpack.c.l.b16 %v1003
    %v3380 = vunpack.c.l.b16 %v1004
    %v3381 = vunpack.c.l.b16 %v1005
    %v3382 = vunpack.c.l.b16 %v1006
    %v3383 = vunpack.c.l.b16 %v1007
    %v3384 = vunpack.c.l.b16 %v1008
    %v3385 = vunpack.c.l.b16 %v1009
    %v3386 = vunpack.c.l.b16 %v1010
    %v3387 = vunpack.c.l.b16 %v1011
    %v3388 = vunpack.c.l.b16 %v1012
    %v3389 = vunpack.c.l.b16 %v1013
    %v3390 = vunpack.c.l.b16 %v1014
    %v3391 = vunpack.c.l.b16 %v1015
    %v3392 = vunpack.c.l.b16 %v1016
    %v3393 = vunpack.c.l.b16 %v1017
    %v3394 = vunpack.c.l.b16 %v1018
    %v3395 = vunpack.c.l.b16 %v1019
    %v3396 = vunpack.c.l.b16 %v1020
    %v3397 = vunpack.c.l.b16 %v1021
    %v3398 = vunpack.c.l.b16 %v1022
    %v3399 = vunpack.c.l.b16 %v1023
    %v3400 = vunpack.c.l.b16 %v1024
    %v3401 = vunpack.c.l.b16 %v1025
    %v3402 = vunpack.c.l.b16 %v1026
    %v3403 = vunpack.c.l.b16 %v1027
    %v3404 = vunpack.c.l.b16 %v1028
    %v3405 = vunpack.c.l.b16 %v1029
    %v3406 = vunpack.c.l.b16 %v1030
    %v3407 = vunpack.c.l.b16 %v1031
    %v3408 = vunpack.c.l.b16 %v1032
    %v3409 = vunpack.c.l.b16 %v1033
    %v3410 = vunpack.c.l.b16 %v1034
    %v3411 = vunpack.c.l.b16 %v1035
    %v3412 = vunpack.c.l.b16 %v1036
    %v3413 = vunpack.c.l.b16 %v1037
    %v3414 = vunpack.c.l.b16 %v1038
    %v3415 = vunpack.c.l.b16 %v1039
    %v3416 = vunpack.c.l.b16 %v1040
    %v3417 = vunpack.c.l.b16 %v1041
    %v3418 = vunpack.c.l.b16 %v1042
    %v3419 = vunpack.c.l.b16 %v1043
    %v3420 = vunpack.c.l.b16 %v1044
    %v3421 = vunpack.c.l.b16 %v1045
    %v3422 = vunpack.c.l.b16 %v1046
    %v3423 = vunpack.c.l.b16 %v1047
    %v3424 = vunpack.c.l.b16 %v1048
    %v3425 = vunpack.c.l.b16 %v1049
    %v3426 = vunpack.c.l.b16 %v1050
    %v3427 = vunpack.c.l.b16 %v1051
    %v3428 = vunpack.c.l.b16 %v1052
    %v3429 = vunpack.c.l.b16 %v1053
    %v3430 = vunpack.c.l.b16 %v1054
    %v3431 = vunpack.c.l.b16 %v1055
    %v3432 = vunpack.c.l.b16 %v1056
    %v3433 = vunpack.c.l.b16 %v1057
    %v3434 = vunpack.c.l.b16 %v1058
    %v3435 = vunpack.c.l.b16 %v1059
    %v3436 = vunpack.c.l.b16 %v1060
    %v3437 = vunpack.c.l.b16 %v1061
    %v3438 = vunpack.c.l.b16 %v1062
    %v3439 = vunpack.c.l.b16 %v1063
    %v3440 = vunpack.c.l.b16 %v1064
    %v3441 = vunpack.c.l.b16 %v1065
    %v3442 = vunpack.c.l.b16 %v1066
    %v3443 = vunpack.c.l.b16 %v1067
    %v3444 = vunpack.c.l.b16 %v1068
    %v3445 = vunpack.c.l.b16 %v1069
    %v3446 = vunpack.c.l.b16 %v1070
    %v3447 = vunpack.c.l.b16 %v1071
    %v3448 = vunpack.c.l.b16 %v1072
    %v3449 = vunpack.c.l.b16 %v1073
    %v3450 = vunpack.c.l.b16 %v1074
    %v3451 = vunpack.c.l.b16 %v1075
    %v3452 = vunpack.c.l.b16 %v1076
    %v3453 = vunpack.c.l.b16 %v1077
    %v3454 = vunpack.c.l.b16 %v1078
    %v3455 = vunpack.c.l.b16 %v1079
    %v3456 = vunpack.c.l.b16 %v1080
    %v3457 = vunpack.c.l.b16 %v1081
    %v3458 = vunpack.c.l.b16 %v1082
    %v3459 = vunpack.c.l.b16 %v1083
    %v3460 = vunpack.c.l.b16 %v1084
    %v3461 = vunpack.c.l.b16 %v1085
    %v3462 = vunpack.c.l.b16 %v1086
    %v3463 = vunpack.c.l.b16 %v1087
    %v3464 = vunpack.c.l.b16 %v1088
    %v3465 = vunpack.c.l.b16 %v1089
    %v3466 = vunpack.c.l.b16 %v1090
    %v3467 = vunpack.c.l.b16 %v1091
    %v3468 = vunpack.c.l.b16 %v1092
    %v3469 = vunpack.c.l.b16 %v1093
    %v3470 = vunpack.c.l.b16 %v1094
    %v3471 = vunpack.c.l.b16 %v1095
    %v3472 = vunpack.c.l.b16 %v1096
    %v3473 = vunpack.c.l.b16 %v1097
    %v3474 = vunpack.c.l.b16 %v1098
    %v3475 = vunpack.c.l.b16 %v1099
    %v3476 = vunpack.c.l.b16 %v1100
    %v3477 = vunpack.c.l.b16 %v1101
    %v3478 = vunpack.c.l.b16 %v1102
    %v3479 = vunpack.c.l.b16 %v1103
    %v3480 = vunpack.c.l.b16 %v1104
    %v3481 = vunpack.c.l.b16 %v1105
    %v3482 = vunpack.c.l.b16 %v1106
    %v3483 = vunpack.c.l.b16 %v1107
    %v3484 = vunpack.c.l.b16 %v1108
    %v3485 = vunpack.c.l.b16 %v1109
    %v3486 = vunpack.c.l.b16 %v1110
    %v3487 = vunpack.c.l.b16 %v1111
    %v3488 = vunpack.c.l.b16 %v1112
    %v3489 = vunpack.c.l.b16 %v1113
    %v3490 = vunpack.c.l.b16 %v1114
    %v3491 = vunpack.c.l.b16 %v1115
    %v3492 = vunpack.c.l.b16 %v1116
    %v3493 = vunpack.c.l.b16 %v1117
    %v3494 = vunpack.c.l.b16 %v1118
    %v3495 = vunpack.c.l.b16 %v1119
    %v3496 = vunpack.c.l.b16 %v1120
    %v3497 = vunpack.c.l.b16 %v1121
    %v3498 = vunpack.c.l.b16 %v1122
    %v3499 = vunpack.c.l.b16 %v1123
    %v3500 = vunpack.c.l.b16 %v1124
    %v3501 = vunpack.c.l.b16 %v1125
    %v3502 = vunpack.c.l.b16 %v1126
    %v3503 = vunpack.c.l.b16 %v1127
    %v3504 = vunpack.c.l.b16 %v1128
    %v3505 = vunpack.c.l.b16 %v1129
    %v3506 = vunpack.c.l.b16 %v1130
    %v3507 = vunpack.c.l.b16 %v1131
    %v3508 = vunpack.c.l.b16 %v1132
    %v3509 = vunpack.c.l.b16 %v1133
    %v3510 = vunpack.c.l.b16 %v1134
    %v3511 = vunpack.c.l.b16 %v1135
    %v3512 = vunpack.c.l.b16 %v1136
    %v3513 = vunpack.c.l.b16 %v1137
    %v3514 = vunpack.c.l.b16 %v1138
    %v3515 = vunpack.c.l.b16 %v1139
    %v3516 = vunpack.c.l.b16 %v1140
    %v3517 = vunpack.c.l.b16 %v1141
    %v3518 = vunpack.c.l.b16 %v1142
    %v3519 = vunpack.c.l.b16 %v1143
    %v3520 = vunpack.c.l.b16 %v1144
    %v3521 = vunpack.c.l.b16 %v1145
    %v3522 = vunpack.c.l.b16 %v1146
    %v3523 = vunpack.c.l.b16 %v1147
    %v3524 = vunpack.c.l.b16 %v1148
    %v3525 = vunpack.c.l.b16 %v1149
    %v3526 = vunpack.c.l.b16 %v1150
    %v3527 = vunpack.c.l.b16 %v1151
    %v3528 = vunpack.c.l.b16 %v1152
    %v3529 = vunpack.c.l.b16 %v1153
    %v3530 = vunpack.c.l.b16 %v1154
    %v3531 = vunpack.c.l.b16 %v1155
    %v3532 = vunpack.c.l.b16 %v1156
    %v3533 = vunpack.c.l.b16 %v1157
    %v3534 = vunpack.c.l.b16 %v1158
    %v3535 = vunpack.c.l.b16 %v1159
    %v3536 = vunpack.c.l.b16 %v1160
    %v3537 = vunpack.c.l.b16 %v1161
    %v3538 = vunpack.c.l.b16 %v1162
    %v3539 = vunpack.c.l.b16 %v1163
    %v3540 = vunpack.c.l.b16 %v1164
    %v3541 = vunpack.c.l.b16 %v1165
    %v3542 = vunpack.c.l.b16 %v1166
    %v3543 = vunpack.c.l.b16 %v1167
    %v3544 = vunpack.c.l.b16 %v1168
    %v3545 = vunpack.c.l.b16 %v1169
    %v3546 = vunpack.c.l.b16 %v1170
    %v3547 = vunpack.c.l.b16 %v1171
    %v3548 = vunpack.c.l.b16 %v1172
    %v3549 = vunpack.c.l.b16 %v1173
    %v3550 = vunpack.c.l.b16 %v1174
    %v3551 = vunpack.c.l.b16 %v1175
    %v3552 = vunpack.c.l.b16 %v1176
    %v3553 = vunpack.c.l.b16 %v1177
    %v3554 = vunpack.c.l.b16 %v1178
    %v3555 = vunpack.c.l.b16 %v1179
    %v3556 = vunpack.c.l.b16 %v1180
    %v3557 = vunpack.c.l.b16 %v1181
    %v3558 = vunpack.c.l.b16 %v1182
    %v3559 = vunpack.c.l.b16 %v1183
    %v3560 = vunpack.c.l.b16 %v1184
    %v3561 = vunpack.c.l.b16 %v1185
    %v3562 = vunpack.c.l.b16 %v1186
    %v3563 = vunpack.c.l.b16 %v1187
    %v3564 = vunpack.c.l.b16 %v1188
    %v3565 = vunpack.c.l.b16 %v1189
    %v3566 = vunpack.c.l.b16 %v1190
    %v3567 = vunpack.c.l.b16 %v1191
    %v3568 = vunpack.c.l.b16 %v1192
    %v3569 = vunpack.c.l.b16 %v1193
    %v3570 = vunpack.c.l.b16 %v1194
    %v3571 = vunpack.c.l.b16 %v1195
    %v3572 = vunpack.c.l.b16 %v1196
    %v3573 = vunpack.c.l.b16 %v1197
    %v3574 = vunpack.c.l.b16 %v1198
    %v3575 = vunpack.c.l.b16 %v1199
    %v3576 = vunpack.c.l.b16 %v1200
    %v3577 = vunpack.c.l.b16 %v1201
    %v3578 = vunpack.c.l.b16 %v1202
    %v3579 = vunpack.c.l.b16 %v1203
    %v3580 = vunpack.c.l.b16 %v1204
    %v3581 = vunpack.c.l.b16 %v1205
    %v3582 = vunpack.c.l.b16 %v1206
    %v3583 = vunpack.c.l.b16 %v1207
    %v3584 = vunpack.c.l.b16 %v1208
    %v3585 = vunpack.c.l.b16 %v1209
    %v3586 = vunpack.c.l.b16 %v1210
    %v3587 = vunpack.c.l.b16 %v1211
    %v3588 = vunpack.c.l.b16 %v1212
    %v3589 = vunpack.c.l.b16 %v1213
    %v3590 = vunpack.c.l.b16 %v1214
    %v3591 = vunpack.c.l.b16 %v1215
    %v3592 = vunpack.c.l.b16 %v1216
    %v3593 = vunpack.c.l.b16 %v1217
    %v3594 = vunpack.c.l.b16 %v1218
    %v3595 = vunpack.c.l.b16 %v1219
    %v3596 = vunpack.c.l.b16 %v1220
    %v3597 = vunpack.c.l.b16 %v1221
    %v3598 = vunpack.c.l.b16 %v1222
    %v3599 = vunpack.c.l.b16 %v1223
    %v3600 = vunpack.c.l.b16 %v1224
    %v3601 = vunpack.c.l.b16 %v1225
    %v3602 = vunpack.c.l.b16 %v1226
    %v3603 = vunpack.c.l.b16 %v1227
    %v3604 = vunpack.c.l.b16 %v1228
    %v3605 = vunpack.c.l.b16 %v1229
    %v3606 = vunpack.c.l.b16 %v1230
    %v3607 = vunpack.c.l.b16 %v1231
    %v3608 = vunpack.c.l.b16 %v1232
    %v3609 = vunpack.c.l.b16 %v1233
    %v3610 = vunpack.c.l.b16 %v1234
    %v3611 = vunpack.c.l.b16 %v1235
    %v3612 = vunpack.c.l.b16 %v1236
    %v3613 = vunpack.c.l.b16 %v1237
    %v3614 = vunpack.c.l.b16 %v1238
    %v3615 = vunpack.c.l.b16 %v1239
    %v3616 = vunpack.c.l.b16 %v1240
    %v3617 = vunpack.c.l.b16 %v1241
    %v3618 = vunpack.c.l.b16 %v1242
    %v3619 = vunpack.c.l.b16 %v1243
    %v3620 = vunpack.c.l.b16 %v1244
    %v3621 = vunpack.c.l.b16 %v1245
    %v3622 = vunpack.c.l.b16 %v1246
    %v3623 = vunpack.c.l.b16 %v1247
    %v3624 = vunpack.c.l.b16 %v1248
    %v3625 = vunpack.c.l.b16 %v1249
    %v3626 = vunpack.c.l.b16 %v1250
    %v3627 = vunpack.c.l.b16 %v1251
    %v3628 = vunpack.c.l.b16 %v1252
    %v3629 = vunpack.c.l.b16 %v1253
    %v3630 = vunpack.c.l.b16 %v1254
    %v3631 = vunpack.c.l.b16 %v1255
    %v3632 = vunpack.c.l.b16 %v1256
    %v3633 = vunpack.c.l.b16 %v1257
    %v3634 = vunpack.c.l.b16 %v1258
    %v3635 = vunpack.c.l.b16 %v1259
    %v3636 = vunpack.c.l.b16 %v1260
    %v3637 = vunpack.c.l.b16 %v1261
    %v3638 = vunpack.c.l.b16 %v1262
    %v3639 = vunpack.c.l.b16 %v1263
    %v3640 = vunpack.c.l.b16 %v1264
    %v3641 = vunpack.c.l.b16 %v1265
    %v3642 = vunpack.c.l.b16 %v1266
    %v3643 = vunpack.c.l.b16 %v1267
    %v3644 = vunpack.c.l.b16 %v1268
    %v3645 = vunpack.c.l.b16 %v1269
    %v3646 = vunpack.c.l.b16 %v1270
    %v3647 = vunpack.c.l.b16 %v1271
    %v3648 = vunpack.c.l.b16 %v1272
    %v3649 = vunpack.c.l.b16 %v1273
    %v3650 = vunpack.c.l.b16 %v1274
    %v3651 = vunpack.c.l.b16 %v1275
    %v3652 = vunpack.c.l.b16 %v1276
    %v3653 = vunpack.c.l.b16 %v1277
    %v3654 = vunpack.c.l.b16 %v1278
    %v3655 = vunpack.c.l.b16 %v1279
    %v3656 = vunpack.c.l.b16 %v1280
    %v3657 = vunpack.c.l.b16 %v1281
    %v3658 = vunpack.c.l.b16 %v1282
    %v3659 = vunpack.c.l.b16 %v1283
    %v3660 = vunpack.c.l.b16 %v1284
    %v3661 = vunpack.c.l.b16 %v1285
    %v3662 = vunpack.c.l.b16 %v1286
    %v3663 = vunpack.c.l.b16 %v1287
    %v3664 = vunpack.c.l.b16 %v1288
    %v3665 = vunpack.c.l.b16 %v1289
    %v3666 = vunpack.c.l.b16 %v1290
    %v3667 = vunpack.c.l.b16 %v1291
    %v3668 = vunpack.c.l.b16 %v1292
    %v3669 = vunpack.c.l.b16 %v1293
    %v3670 = vunpack.c.l.b16 %v1294
    %v3671 = vunpack.c.l.b16 %v1295
    %v3672 = vunpack.c.l.b16 %v1296
    %v3673 = vunpack.c.l.b16 %v1297
    %v3674 = vunpack.c.l.b16 %v1298
    %v3675 = vunpack.c.l.b16 %v1299
    %v3676 = vunpack.c.l.b16 %v1300
    %v3677 = vunpack.c.l.b16 %v1301
    %v3678 = vunpack.c.l.b16 %v1302
    %v3679 = vunpack.c.l.b16 %v1303
    %v3680 = vunpack.c.l.b16 %v1304
    %v3681 = vunpack.c.l.b16 %v1305
    %v3682 = vunpack.c.l.b16 %v1306
    %v3683 = vunpack.c.l.b16 %v1307
    %v3684 = vunpack.c.l.b16 %v1308
    %v3685 = vunpack.c.l.b16 %v1309
    %v3686 = vunpack.c.l.b16 %v1310
    %v3687 = vunpack.c.l.b16 %v1311
    %v3688 = vunpack.c.l.b16 %v1312
    %v3689 = vunpack.c.l.b16 %v1313
    %v3690 = vunpack.c.l.b16 %v1314
    %v3691 = vunpack.c.l.b16 %v1315
    %v3692 = vunpack.c.l.b16 %v1316
    %v3693 = vunpack.c.l.b16 %v1317
    %v3694 = vunpack.c.l.b16 %v1318
    %v3695 = vunpack.c.l.b16 %v1319
    %v3696 = vunpack.c.l.b16 %v1320
    %v3697 = vunpack.c.l.b16 %v1321
    %v3698 = vunpack.c.l.b16 %v1322
    %v3699 = vunpack.c.l.b16 %v1323
    %v3700 = vunpack.c.l.b16 %v1324
    %v3701 = vunpack.c.l.b16 %v1325
    %v3702 = vunpack.c.l.b16 %v1326
    %v3703 = vunpack.c.l.b16 %v1327
    %v3704 = vunpack.c.l.b16 %v1328
    %v3705 = vunpack.c.l.b16 %v1329
    %v3706 = vunpack.c.l.b16 %v1330
    %v3707 = vunpack.c.l.b16 %v1331
    %v3708 = vunpack.c.l.b16 %v1332
    %v3709 = vunpack.c.l.b16 %v1333
    %v3710 = vunpack.c.l.b16 %v1334
    %v3711 = vunpack.c.l.b16 %v1335
    %v3712 = vunpack.c.l.b16 %v1336
    %v3713 = vunpack.c.l.b16 %v1337
    %v3714 = vunpack.c.l.b16 %v1338
    %v3715 = vunpack.c.l.b16 %v1339
    %v3716 = vunpack.c.l.b16 %v1340
    %v3717 = vunpack.c.l.b16 %v1341
    %v3718 = vunpack.c.l.b16 %v1342
    %v3719 = vunpack.c.l.b16 %v1343
    %v3720 = vunpack.c.l.b16 %v1344
    %v3721 = vunpack.c.l.b16 %v1345
    %v3722 = vunpack.c.l.b16 %v1346
    %v3723 = vunpack.c.l.b16 %v1347
    %v3724 = vunpack.c.l.b16 %v1348
    %v3725 = vunpack.c.l.b16 %v1349
    %v3726 = vunpack.c.l.b16 %v1350
    %v3727 = vunpack.c.l.b16 %v1351
    %v3728 = vunpack.c.l.b16 %v1352
    %v3729 = vunpack.c.l.b16 %v1353
    %v3730 = vunpack.c.l.b16 %v1354
    %v3731 = vunpack.c.l.b16 %v1355
    %v3732 = vunpack.c.l.b16 %v1356
    %v3733 = vunpack.c.l.b16 %v1357
    %v3734 = vunpack.c.l.b16 %v1358
    %v3735 = vunpack.c.l.b16 %v1359
    %v3736 = vunpack.c.l.b16 %v1360
    %v3737 = vunpack.c.l.b16 %v1361
    %v3738 = vunpack.c.l.b16 %v1362
    %v3739 = vunpack.c.l.b16 %v1363
    %v3740 = vunpack.c.l.b16 %v1364
    %v3741 = vunpack.c.l.b16 %v1365
    %v3742 = vunpack.c.l.b16 %v1366
    %v3743 = vunpack.c.l.b16 %v1367
    %v3744 = vunpack.c.l.b16 %v1368
    %v3745 = vunpack.c.l.b16 %v1369
    %v3746 = vunpack.c.l.b16 %v1370
    %v3747 = vunpack.c.l.b16 %v1371
    %v3748 = vunpack.c.l.b16 %v1372
    %v3749 = vunpack.c.l.b16 %v1373
    %v3750 = vunpack.c.l.b16 %v1374
    %v3751 = vunpack.c.l.b16 %v1375
    %v3752 = vunpack.c.l.b16 %v1376
    %v3753 = vunpack.c.l.b16 %v1377
    %v3754 = vunpack.c.l.b16 %v1378
    %v3755 = vunpack.c.l.b16 %v1379
    %v3756 = vunpack.c.l.b16 %v1380
    %v3757 = vunpack.c.l.b16 %v1381
    %v3758 = vunpack.c.l.b16 %v1382
    %v3759 = vunpack.c.l.b16 %v1383
    %v3760 = vunpack.c.l.b16 %v1384
    %v3761 = vunpack.c.l.b16 %v1385
    %v3762 = vunpack.c.l.b16 %v1386
    %v3763 = vunpack.c.l.b16 %v1387
    %v3764 = vunpack.c.l.b16 %v1388
    %v3765 = vunpack.c.l.b16 %v1389
    %v3766 = vunpack.c.l.b16 %v1390
    %v3767 = vunpack.c.l.b16 %v1391
    %v3768 = vunpack.c.l.b16 %v1392
    %v3769 = vunpack.c.l.b16 %v1393
    %v3770 = vunpack.c.l.b16 %v1394
    %v3771 = vunpack.c.l.b16 %v1395
    %v3772 = vunpack.c.l.b16 %v1396
    %v3773 = vunpack.c.l.b16 %v1397
    %v3774 = vunpack.c.l.b16 %v1398
    %v3775 = vunpack.c.l.b16 %v1399
    %v3776 = vunpack.c.l.b16 %v1400
    %v3777 = vunpack.c.l.b16 %v1401
    %v3778 = vunpack.c.l.b16 %v1402
    %v3779 = vunpack.c.l.b16 %v1403
    %v3780 = vunpack.c.l.b16 %v1404
    %v3781 = vunpack.c.l.b16 %v1405
    %v3782 = vunpack.c.l.b16 %v1406
    %v3783 = vunpack.c.l.b16 %v1407
    %v3784 = vunpack.c.l.b16 %v1408
    %v3785 = vunpack.c.l.b16 %v1409
    %v3786 = vunpack.c.l.b16 %v1410
    %v3787 = vunpack.c.l.b16 %v1411
    %v3788 = vunpack.c.l.b16 %v1412
    %v3789 = vunpack.c.l.b16 %v1413
    %v3790 = vunpack.c.l.b16 %v1414
    %v3791 = vunpack.c.l.b16 %v1415
    %v3792 = vunpack.c.l.b16 %v1416
    %v3793 = vunpack.c.l.b16 %v1417
    %v3794 = vunpack.c.l.b16 %v1418
    %v3795 = vunpack.c.l.b16 %v1419
    %v3796 = vunpack.c.l.b16 %v1420
    %v3797 = vunpack.c.l.b16 %v1421
    %v3798 = vunpack.c.l.b16 %v1422
    %v3799 = vunpack.c.l.b16 %v1423
    %v3800 = vunpack.c.l.b16 %v1424
    %v3801 = vunpack.c.l.b16 %v1425
    %v3802 = vunpack.c.l.b16 %v1426
    %v3803 = vunpack.c.l.b16 %v1427
    %v3804 = vunpack.c.l.b16 %v1428
    %v3805 = vunpack.c.l.b16 %v1429
    %v3806 = vunpack.c.l.b16 %v1430
    %v3807 = vunpack.c.l.b16 %v1431
    %v3808 = vunpack.c.l.b16 %v1432
    %v3809 = vunpack.c.l.b16 %v1433
    %v3810 = vunpack.c.l.b16 %v1434
    %v3811 = vunpack.c.l.b16 %v1435
    %v3812 = vunpack.c.l.b16 %v1436
    %v3813 = vunpack.c.l.b16 %v1437
    %v3814 = vunpack.c.l.b16 %v1438
    %v3815 = vunpack.c.l.b16 %v1439
    %v3816 = vunpack.c.l.b16 %v1440
    %v3817 = vunpack.c.l.b16 %v1441
    %v3818 = vunpack.c.l.b16 %v1442
    %v3819 = vunpack.c.l.b16 %v1443
    %v3820 = vunpack.c.l.b16 %v1444
    %v3821 = vunpack.c.l.b16 %v1445
    %v3822 = vunpack.c.l.b16 %v1446
    %v3823 = vunpack.c.l.b16 %v1447
    %v3824 = vunpack.c.l.b16 %v1448
    %v3825 = vunpack.c.l.b16 %v1449
    %v3826 = vunpack.c.l.b16 %v1450
    %v3827 = vunpack.c.l.b16 %v1451
    %v3828 = vunpack.c.l.b16 %v1452
    %v3829 = vunpack.c.l.b16 %v1453
    %v3830 = vunpack.c.l.b16 %v1454
    %v3831 = vunpack.c.l.b16 %v1455
    %v3832 = vunpack.c.l.b16 %v1456
    %v3833 = vunpack.c.l.b16 %v1457
    %v3834 = vunpack.c.l.b16 %v1458
    %v3835 = vunpack.c.l.b16 %v1459
    %v3836 = vunpack.c.l.b16 %v1460
    %v3837 = vunpack.c.l.b16 %v1461
    %v3838 = vunpack.c.l.b16 %v1462
    %v3839 = vunpack.c.l.b16 %v1463
    %v3840 = vunpack.c.l.b16 %v1464
    %v3841 = vunpack.c.l.b16 %v1465
    %v3842 = vunpack.c.l.b16 %v1466
    %v3843 = vunpack.c.l.b16 %v1467
    %v3844 = vunpack.c.l.b16 %v1468
    %v3845 = vunpack.c.l.b16 %v1469
    %v3846 = vunpack.c.l.b16 %v1470
    %v3847 = vunpack.c.l.b16 %v1471
    %v3848 = vunpack.c.l.b16 %v1472
    %v3849 = vunpack.c.l.b16 %v1473
    %v3850 = vunpack.c.l.b16 %v1474
    %v3851 = vunpack.c.l.b16 %v1475
    %v3852 = vunpack.c.l.b16 %v1476
    %v3853 = vunpack.c.l.b16 %v1477
    %v3854 = vunpack.c.l.b16 %v1478
    %v3855 = vunpack.c.l.b16 %v1479
    %v3856 = vunpack.c.l.b16 %v1480
    %v3857 = vunpack.c.l.b16 %v1481
    %v3858 = vunpack.c.l.b16 %v1482
    %v3859 = vunpack.c.l.b16 %v1483
    %v3860 = vunpack.c.l.b16 %v1484
    %v3861 = vunpack.c.l.b16 %v1485
    %v3862 = vunpack.c.l.b16 %v1486
    %v3863 = vunpack.c.l.b16 %v1487
    %v3864 = vunpack.c.l.b16 %v1488
    %v3865 = vunpack.c.l.b16 %v1489
    %v3866 = vunpack.c.l.b16 %v1490
    %v3867 = vunpack.c.l.b16 %v1491
    %v3868 = vunpack.c.l.b16 %v1492
    %v3869 = vunpack.c.l.b16 %v1493
    %v3870 = vunpack.c.l.b16 %v1494
    %v3871 = vunpack.c.l.b16 %v1495
    %v3872 = vunpack.c.l.b16 %v1496
    %v3873 = vunpack.c.l.b16 %v1497
    %v3874 = vunpack.c.l.b16 %v1498
    %v3875 = vunpack.c.l.b16 %v1499
    %v3876 = vunpack.c.l.b16 %v1500
    %v3877 = vunpack.c.l.b16 %v1501
    %v3878 = vunpack.c.l.b16 %v1502
    %v3879 = vunpack.c.l.b16 %v1503
    %v3880 = vunpack.c.l.b16 %v1504
    %v3881 = vunpack.c.l.b16 %v1505
    %v3882 = vunpack.c.l.b16 %v1506
    %v3883 = vunpack.c.l.b16 %v1507
    %v3884 = vunpack.c.l.b16 %v1508
    %v3885 = vunpack.c.l.b16 %v1509
    %v3886 = vunpack.c.l.b16 %v1510
    %v3887 = vunpack.c.l.b16 %v1511
    %v3888 = vunpack.c.l.b16 %v1512
    %v3889 = vunpack.c.l.b16 %v1513
    %v3890 = vunpack.c.l.b16 %v1514
    %v3891 = vunpack.c.l.b16 %v1515
    %v3892 = vunpack.c.l.b16 %v1516
    %v3893 = vunpack.c.l.b16 %v1517
    %v3894 = vunpack.c.l.b16 %v1518
    %v3895 = vunpack.c.l.b16 %v1519
    %v3896 = vunpack.c.l.b16 %v1520
    %v3897 = vunpack.c.l.b16 %v1521
    %v3898 = vunpack.c.l.b16 %v1522
    %v3899 = vunpack.c.l.b16 %v1523
    %v3900 = vunpack.c.l.b16 %v1524
    %v3901 = vunpack.c.l.b16 %v1525
    %v3902 = vunpack.c.l.b16 %v1526
    %v3903 = vunpack.c.l.b16 %v1527
    %v3904 = vunpack.c.l.b16 %v1528
    %v3905 = vunpack.c.l.b16 %v1529
    %v3906 = vunpack.c.l.b16 %v1530
    %v3907 = vunpack.c.l.b16 %v1531
    %v3908 = vunpack.c.l.b16 %v1532
    %v3909 = vunpack.c.l.b16 %v1533
    %v3910 = vunpack.c.l.b16 %v1534
    %v3911 = vunpack.c.l.b16 %v1535
    %v3912 = vunpack.c.l.b16 %v1536
    %v3913 = vunpack.c.l.b16 %v1537
    %v3914 = vunpack.c.l.b16 %v1538
    %v3915 = vunpack.c.l.b16 %v1539
    %v3916 = vunpack.c.l.b16 %v1540
    %v3917 = vunpack.c.l.b16 %v1541
    %v3918 = vunpack.c.l.b16 %v1542
    %v3919 = vunpack.c.l.b16 %v1543
    %v3920 = vunpack.c.l.b16 %v1544
    %v3921 = vunpack.c.l.b16 %v1545
    %v3922 = vunpack.c.l.b16 %v1546
    %v3923 = vunpack.c.l.b16 %v1547
    %v3924 = vunpack.c.l.b16 %v1548
    %v3925 = vunpack.c.l.b16 %v1549
    %v3926 = vunpack.c.l.b16 %v1550
    %v3927 = vunpack.c.l.b16 %v1551
    %v3928 = vunpack.c.l.b16 %v1552
    %v3929 = vunpack.c.l.b16 %v1553
    %v3930 = vunpack.c.l.b16 %v1554
    %v3931 = vunpack.c.l.b16 %v1555
    %v3932 = vunpack.c.l.b16 %v1556
    %v3933 = vunpack.c.l.b16 %v1557
    %v3934 = vunpack.c.l.b16 %v1558
    %v3935 = vunpack.c.l.b16 %v1559
    %v3936 = vunpack.c.l.b16 %v1560
    %v3937 = vunpack.c.l.b16 %v1561
    %v3938 = vunpack.c.l.b16 %v1562
    %v3939 = vunpack.c.l.b16 %v1563
    %v3940 = vunpack.c.l.b16 %v1564
    %v3941 = vunpack.c.l.b16 %v1565
    %v3942 = vunpack.c.l.b16 %v1566
    %v3943 = vunpack.c.l.b16 %v1567
    %v3944 = vunpack.c.l.b16 %v1568
    %v3945 = vunpack.c.l.b16 %v1569
    %v3946 = vunpack.c.l.b16 %v1570
    %v3947 = vunpack.c.l.b16 %v1571
    %v3948 = vunpack.c.l.b16 %v1572
    %v3949 = vunpack.c.l.b16 %v1573
    %v3950 = vunpack.c.l.b16 %v1574
    %v3951 = vunpack.c.l.b16 %v1575
    %v3952 = vunpack.c.l.b16 %v1576
    %v3953 = vunpack.c.l.b16 %v1577
    %v3954 = vunpack.c.l.b16 %v1578
    %v3955 = vunpack.c.l.b16 %v1579
    %v3956 = vunpack.c.l.b16 %v1580
    %v3957 = vunpack.c.l.b16 %v1581
    %v3958 = vunpack.c.l.b16 %v1582
    %v3959 = vunpack.c.l.b16 %v1583
    %v3960 = vunpack.c.l.b16 %v1584
    %v3961 = vunpack.c.l.b16 %v1585
    %v3962 = vunpack.c.l.b16 %v1586
    %v3963 = vunpack.c.l.b16 %v1587
    %v3964 = vunpack.c.l.b16 %v1588
    %v3965 = vunpack.c.l.b16 %v1589
    %v3966 = vunpack.c.l.b16 %v1590
    %v3967 = vunpack.c.l.b16 %v1591
    %v3968 = vunpack.c.l.b16 %v1592
    %v3969 = vunpack.c.l.b16 %v1593
    %v3970 = vunpack.c.l.b16 %v1594
    %v3971 = vunpack.c.l.b16 %v1595
    %v3972 = vunpack.c.l.b16 %v1596
    %v3973 = vunpack.c.l.b16 %v1597
    %v3974 = vunpack.c.l.b16 %v1598
    %v3975 = vunpack.c.l.b16 %v1599
    %v3976 = vunpack.c.l.b16 %v1600
    %v3977 = vunpack.c.l.b16 %v1601
    %v3978 = vunpack.c.l.b16 %v1602
    %v3979 = vunpack.c.l.b16 %v1603
    %v3980 = vunpack.c.l.b16 %v1604
    %v3981 = vunpack.c.l.b16 %v1605
    %v3982 = vunpack.c.l.b16 %v1606
    %v3983 = vunpack.c.l.b16 %v1607
    %v3984 = vunpack.c.l.b16 %v1608
    %v3985 = vunpack.c.l.b16 %v1609
    %v3986 = vunpack.c.l.b16 %v1610
    %v3987 = vunpack.c.l.b16 %v1611
    %v3988 = vunpack.c.l.b16 %v1612
    %v3989 = vunpack.c.l.b16 %v1613
    %v3990 = vunpack.c.l.b16 %v1614
    %v3991 = vunpack.c.l.b16 %v1615
    %v3992 = vunpack.c.l.b16 %v1616
    %v3993 = vunpack.c.l.b16 %v1617
    %v3994 = vunpack.c.l.b16 %v1618
    %v3995 = vunpack.c.l.b16 %v1619
    %v3996 = vunpack.c.l.b16 %v1620
    %v3997 = vunpack.c.l.b16 %v1621
    %v3998 = vunpack.c.l.b16 %v1622
    %v3999 = vunpack.c.l.b16 %v1623
    %v4000 = vunpack.c.l.b16 %v1624
    %v4001 = vunpack.c.l.b16 %v1625
    %v4002 = vunpack.c.l.b16 %v1626
    %v4003 = vunpack.c.l.b16 %v1627
    %v4004 = vunpack.c.l.b16 %v1628
    %v4005 = vunpack.c.l.b16 %v1629
    %v4006 = vunpack.c.l.b16 %v1630
    %v4007 = vunpack.c.l.b16 %v1631
    %v4008 = vunpack.c.l.b16 %v1632
    %v4009 = vunpack.c.l.b16 %v1633
    %v4010 = vunpack.c.l.b16 %v1634
    %v4011 = vunpack.c.l.b16 %v1635
    %v4012 = vunpack.c.l.b16 %v1636
    %v4013 = vunpack.c.l.b16 %v1637
    %v4014 = vunpack.c.l.b16 %v1638
    %v4015 = vunpack.c.l.b16 %v1639
    %v4016 = vunpack.c.l.b16 %v1640
    %v4017 = vunpack.c.l.b16 %v1641
    %v4018 = vunpack.c.l.b16 %v1642
    %v4019 = vunpack.c.l.b16 %v1643
    %v4020 = vunpack.c.l.b16 %v1644
    %v4021 = vunpack.c.l.b16 %v1645
    %v4022 = vunpack.c.l.b16 %v1646
    %v4023 = vunpack.c.l.b16 %v1647
    %v4024 = vunpack.c.l.b16 %v1648
    %v4025 = vunpack.c.l.b16 %v1649
    %v4026 = vunpack.c.l.b16 %v1650
    %v4027 = vunpack.c.l.b16 %v1651
    %v4028 = vunpack.c.l.b16 %v1652
    %v4029 = vunpack.c.l.b16 %v1653
    %v4030 = vunpack.c.l.b16 %v1654
    %v4031 = vunpack.c.l.b16 %v1655
    %v4032 = vunpack.c.l.b16 %v1656
    %v4033 = vunpack.c.l.b16 %v1657
    %v4034 = vunpack.c.l.b16 %v1658
    %v4035 = vunpack.c.l.b16 %v1659
    %v4036 = vunpack.c.l.b16 %v1660
    %v4037 = vunpack.c.l.b16 %v1661
    %v4038 = vunpack.c.l.b16 %v1662
    %v4039 = vunpack.c.l.b16 %v1663
    %v4040 = vunpack.c.l.b16 %v1664
    %v4041 = vunpack.c.l.b16 %v1665
    %v4042 = vunpack.c.l.b16 %v1666
    %v4043 = vunpack.c.l.b16 %v1667
    %v4044 = vunpack.c.l.b16 %v1668
    %v4045 = vunpack.c.l.b16 %v1669
    %v4046 = vunpack.c.l.b16 %v1670
    %v4047 = vunpack.c.l.b16 %v1671
    %v4048 = vunpack.c.l.b16 %v1672
    %v4049 = vunpack.c.l.b16 %v1673
    %v4050 = vunpack.c.l.b16 %v1674
    %v4051 = vunpack.c.l.b16 %v1675
    %v4052 = vunpack.c.l.b16 %v1676
    %v4053 = vunpack.c.l.b16 %v1677
    %v4054 = vunpack.c.l.b16 %v1678
    %v4055 = vunpack.c.l.b16 %v1679
    %v4056 = vunpack.c.l.b16 %v1680
    %v4057 = vunpack.c.l.b16 %v1681
    %v4058 = vunpack.c.l.b16 %v1682
    %v4059 = vunpack.c.l.b16 %v1683
    %v4060 = vunpack.c.l.b16 %v1684
    %v4061 = vunpack.c.l.b16 %v1685
    %v4062 = vunpack.c.l.b16 %v1686
    %v4063 = vunpack.c.l.b16 %v1687
    %v4064 = vunpack.c.l.b16 %v1688
    %v4065 = vunpack.c.l.b16 %v1689
    %v4066 = vunpack.c.l.b16 %v1690
    %v4067 = vunpack.c.l.b16 %v1691
    %v4068 = vunpack.c.l.b16 %v1692
    %v4069 = vunpack.c.l.b16 %v1693
    %v4070 = vunpack.c.l.b16 %v1694
    %v4071 = vunpack.c.l.b16 %v1695
    %v4072 = vunpack.c.l.b16 %v1696
    %v4073 = vunpack.c.l.b16 %v1697
    %v4074 = vunpack.c.l.b16 %v1698
    %v4075 = vunpack.c.l.b16 %v1699
    %v4076 = vunpack.c.l.b16 %v1700
    %v4077 = vunpack.c.l.b16 %v1701
    %v4078 = vunpack.c.l.b16 %v1702
    %v4079 = vunpack.c.l.b16 %v1703
    %v4080 = vpack.c.b16 %v2929, %v2928
    %v4081 = vpack.c.b16 %v2931, %v2930
    %v4082 = vpack.c.b16 %v2933, %v2932
    %v4083 = vpack.c.b16 %v2935, %v2934
    %v4084 = vpack.c.b16 %v2937, %v2936
    %v4085 = vpack.c.b16 %v2939, %v2938
    %v4086 = vpack.c.b16 %v2941, %v2940
    %v4087 = vpack.c.b16 %v2943, %v2942
    %v4088 = vpack.c.b16 %v2945, %v2944
    %v4089 = vpack.c.b16 %v2947, %v2946
    %v4090 = vpack.c.b16 %v2949, %v2948
    %v4091 = vpack.c.b16 %v2951, %v2950
    %v4092 = vpack.c.b16 %v2953, %v2952
    %v4093 = vpack.c.b16 %v2955, %v2954
    %v4094 = vpack.c.b16 %v2957, %v2956
    %v4095 = vpack.c.b16 %v2959, %v2958
    %v4096 = vpack.c.b16 %v2961, %v2960
    %v4097 = vpack.c.b16 %v2963, %v2962
    %v4098 = vpack.c.b16 %v2965, %v2964
    %v4099 = vpack.c.b16 %v2967, %v2966
    %v4100 = vpack.c.b16 %v2969, %v2968
    %v4101 = vpack.c.b16 %v2971, %v2970
    %v4102 = vpack.c.b16 %v2973, %v2972
    %v4103 = vpack.c.b16 %v2975, %v2974
    %v4104 = vpack.c.b16 %v2977, %v2976
    %v4105 = vpack.c.b16 %v2979, %v2978
    %v4106 = vpack.c.b16 %v2981, %v2980
    %v4107 = vpack.c.b16 %v2983, %v2982
    %v4108 = vpack.c.b16 %v2985, %v2984
    %v4109 = vpack.c.b16 %v2987, %v2986
    %v4110 = vpack.c.b16 %v2989, %v2988
    %v4111 = vpack.c.b16 %v2991, %v2990
    %v4112 = vpack.c.b16 %v2993, %v2992
    %v4113 = vpack.c.b16 %v2995, %v2994
    %v4114 = vpack.c.b16 %v2997, %v2996
    %v4115 = vpack.c.b16 %v2999, %v2998
    %v4116 = vpack.c.b16 %v3001, %v3000
    %v4117 = vpack.c.b16 %v3003, %v3002
    %v4118 = vpack.c.b16 %v3005, %v3004
    %v4119 = vpack.c.b16 %v3007, %v3006
    %v4120 = vpack.c.b16 %v3009, %v3008
    %v4121 = vpack.c.b16 %v3011, %v3010
    %v4122 = vpack.c.b16 %v3013, %v3012
    %v4123 = vpack.c.b16 %v3015, %v3014
    %v4124 = vpack.c.b16 %v3017, %v3016
    %v4125 = vpack.c.b16 %v3019, %v3018
    %v4126 = vpack.c.b16 %v3021, %v3020
    %v4127 = vpack.c.b16 %v3023, %v3022
    %v4128 = vpack.c.b16 %v3025, %v3024
    %v4129 = vpack.c.b16 %v3027, %v3026
    %v4130 = vpack.c.b16 %v3029, %v3028
    %v4131 = vpack.c.b16 %v3031, %v3030
    %v4132 = vpack.c.b16 %v3033, %v3032
    %v4133 = vpack.c.b16 %v3035, %v3034
    %v4134 = vpack.c.b16 %v3037, %v3036
    %v4135 = vpack.c.b16 %v3039, %v3038
    %v4136 = vpack.c.b16 %v3041, %v3040
    %v4137 = vpack.c.b16 %v3043, %v3042
    %v4138 = vpack.c.b16 %v3045, %v3044
    %v4139 = vpack.c.b16 %v3047, %v3046
    %v4140 = vpack.c.b16 %v3049, %v3048
    %v4141 = vpack.c.b16 %v3051, %v3050
    %v4142 = vpack.c.b16 %v3053, %v3052
    %v4143 = vpack.c.b16 %v3055, %v3054
    %v4144 = vpack.c.b16 %v3057, %v3056
    %v4145 = vpack.c.b16 %v3059, %v3058
    %v4146 = vpack.c.b16 %v3061, %v3060
    %v4147 = vpack.c.b16 %v3063, %v3062
    %v4148 = vpack.c.b16 %v3065, %v3064
    %v4149 = vpack.c.b16 %v3067, %v3066
    %v4150 = vpack.c.b16 %v3069, %v3068
    %v4151 = vpack.c.b16 %v3071, %v3070
    %v4152 = vpack.c.b16 %v3073, %v3072
    %v4153 = vpack.c.b16 %v3075, %v3074
    %v4154 = vpack.c.b16 %v3077, %v3076
    %v4155 = vpack.c.b16 %v3079, %v3078
    %v4156 = vpack.c.b16 %v3081, %v3080
    %v4157 = vpack.c.b16 %v3083, %v3082
    %v4158 = vpack.c.b16 %v3085, %v3084
    %v4159 = vpack.c.b16 %v3087, %v3086
    %v4160 = vpack.c.b16 %v3089, %v3088
    %v4161 = vpack.c.b16 %v3091, %v3090
    %v4162 = vpack.c.b16 %v3093, %v3092
    %v4163 = vpack.c.b16 %v3095, %v3094
    %v4164 = vpack.c.b16 %v3097, %v3096
    %v4165 = vpack.c.b16 %v3099, %v3098
    %v4166 = vpack.c.b16 %v3101, %v3100
    %v4167 = vpack.c.b16 %v3103, %v3102
    %v4168 = vpack.c.b16 %v3105, %v3104
    %v4169 = vpack.c.b16 %v3107, %v3106
    %v4170 = vpack.c.b16 %v3109, %v3108
    %v4171 = vpack.c.b16 %v3111, %v3110
    %v4172 = vpack.c.b16 %v3113, %v3112
    %v4173 = vpack.c.b16 %v3115, %v3114
    %v4174 = vpack.c.b16 %v3117, %v3116
    %v4175 = vpack.c.b16 %v3119, %v3118
    %v4176 = vpack.c.b16 %v3121, %v3120
    %v4177 = vpack.c.b16 %v3123, %v3122
    %v4178 = vpack.c.b16 %v3125, %v3124
    %v4179 = vpack.c.b16 %v3127, %v3126
    %v4180 = vpack.c.b16 %v3129, %v3128
    %v4181 = vpack.c.b16 %v3131, %v3130
    %v4182 = vpack.c.b16 %v3133, %v3132
    %v4183 = vpack.c.b16 %v3135, %v3134
    %v4184 = vpack.c.b16 %v3137, %v3136
    %v4185 = vpack.c.b16 %v3139, %v3138
    %v4186 = vpack.c.b16 %v3141, %v3140
    %v4187 = vpack.c.b16 %v3143, %v3142
    %v4188 = vpack.c.b16 %v3145, %v3144
    %v4189 = vpack.c.b16 %v3147, %v3146
    %v4190 = vpack.c.b16 %v3149, %v3148
    %v4191 = vpack.c.b16 %v3151, %v3150
    %v4192 = vpack.c.b16 %v3153, %v3152
    %v4193 = vpack.c.b16 %v3155, %v3154
    %v4194 = vpack.c.b16 %v3157, %v3156
    %v4195 = vpack.c.b16 %v3159, %v3158
    %v4196 = vpack.c.b16 %v3161, %v3160
    %v4197 = vpack.c.b16 %v3163, %v3162
    %v4198 = vpack.c.b16 %v3165, %v3164
    %v4199 = vpack.c.b16 %v3167, %v3166
    %v4200 = vpack.c.b16 %v3169, %v3168
    %v4201 = vpack.c.b16 %v3171, %v3170
    %v4202 = vpack.c.b16 %v3173, %v3172
    %v4203 = vpack.c.b16 %v3175, %v3174
    %v4204 = vpack.c.b16 %v3177, %v3176
    %v4205 = vpack.c.b16 %v3179, %v3178
    %v4206 = vpack.c.b16 %v3181, %v3180
    %v4207 = vpack.c.b16 %v3183, %v3182
    %v4208 = vpack.c.b16 %v3185, %v3184
    %v4209 = vpack.c.b16 %v3187, %v3186
    %v4210 = vpack.c.b16 %v3189, %v3188
    %v4211 = vpack.c.b16 %v3191, %v3190
    %v4212 = vpack.c.b16 %v3193, %v3192
    %v4213 = vpack.c.b16 %v3195, %v3194
    %v4214 = vpack.c.b16 %v3197, %v3196
    %v4215 = vpack.c.b16 %v3199, %v3198
    %v4216 = vpack.c.b16 %v3201, %v3200
    %v4217 = vpack.c.b16 %v3203, %v3202
    %v4218 = vpack.c.b16 %v3205, %v3204
    %v4219 = vpack.c.b16 %v3207, %v3206
    %v4220 = vpack.c.b16 %v3209, %v3208
    %v4221 = vpack.c.b16 %v3211, %v3210
    %v4222 = vpack.c.b16 %v3213, %v3212
    %v4223 = vpack.c.b16 %v3215, %v3214
    %v4224 = vpack.c.b16 %v3217, %v3216
    %v4225 = vpack.c.b16 %v3219, %v3218
    %v4226 = vpack.c.b16 %v3221, %v3220
    %v4227 = vpack.c.b16 %v3223, %v3222
    %v4228 = vpack.c.b16 %v3225, %v3224
    %v4229 = vpack.c.b16 %v3227, %v3226
    %v4230 = vpack.c.b16 %v3229, %v3228
    %v4231 = vpack.c.b16 %v3231, %v3230
    %v4232 = vpack.c.b16 %v3233, %v3232
    %v4233 = vpack.c.b16 %v3235, %v3234
    %v4234 = vpack.c.b16 %v3237, %v3236
    %v4235 = vpack.c.b16 %v3239, %v3238
    %v4236 = vpack.c.b16 %v3241, %v3240
    %v4237 = vpack.c.b16 %v3243, %v3242
    %v4238 = vpack.c.b16 %v3245, %v3244
    %v4239 = vpack.c.b16 %v3247, %v3246
    %v4240 = vpack.c.b16 %v3249, %v3248
    %v4241 = vpack.c.b16 %v3251, %v3250
    %v4242 = vpack.c.b16 %v3253, %v3252
    %v4243 = vpack.c.b16 %v3255, %v3254
    %v4244 = vpack.c.b16 %v3257, %v3256
    %v4245 = vpack.c.b16 %v3259, %v3258
    %v4246 = vpack.c.b16 %v3261, %v3260
    %v4247 = vpack.c.b16 %v3263, %v3262
    %v4248 = vpack.c.b16 %v3265, %v3264
    %v4249 = vpack.c.b16 %v3267, %v3266
    %v4250 = vpack.c.b16 %v3269, %v3268
    %v4251 = vpack.c.b16 %v3271, %v3270
    %v4252 = vpack.c.b16 %v3273, %v3272
    %v4253 = vpack.c.b16 %v3275, %v3274
    %v4254 = vpack.c.b16 %v3277, %v3276
    %v4255 = vpack.c.b16 %v3279, %v3278
    %v4256 = vpack.c.b16 %v3281, %v3280
    %v4257 = vpack.c.b16 %v3283, %v3282
    %v4258 = vpack.c.b16 %v3285, %v3284
    %v4259 = vpack.c.b16 %v3287, %v3286
    %v4260 = vpack.c.b16 %v3289, %v3288
    %v4261 = vpack.c.b16 %v3291, %v3290
    %v4262 = vpack.c.b16 %v3293, %v3292
    %v4263 = vpack.c.b16 %v3295, %v3294
    %v4264 = vpack.c.b16 %v3297, %v3296
    %v4265 = vpack.c.b16 %v3299, %v3298
    %v4266 = vpack.c.b16 %v3301, %v3300
    %v4267 = vpack.c.b16 %v3303, %v3302
    %v4268 = vpack.c.b16 %v3305, %v3304
    %v4269 = vpack.c.b16 %v3307, %v3306
    %v4270 = vpack.c.b16 %v3309, %v3308
    %v4271 = vpack.c.b16 %v3311, %v3310
    %v4272 = vpack.c.b16 %v3313, %v3312
    %v4273 = vpack.c.b16 %v3315, %v3314
    %v4274 = vpack.c.b16 %v3317, %v3316
    %v4275 = vpack.c.b16 %v3319, %v3318
    %v4276 = vpack.c.b16 %v3321, %v3320
    %v4277 = vpack.c.b16 %v3323, %v3322
    %v4278 = vpack.c.b16 %v3325, %v3324
    %v4279 = vpack.c.b16 %v3327, %v3326
    %v4280 = vpack.c.b16 %v3329, %v3328
    %v4281 = vpack.c.b16 %v3331, %v3330
    %v4282 = vpack.c.b16 %v3333, %v3332
    %v4283 = vpack.c.b16 %v3335, %v3334
    %v4284 = vpack.c.b16 %v3337, %v3336
    %v4285 = vpack.c.b16 %v3339, %v3338
    %v4286 = vpack.c.b16 %v3341, %v3340
    %v4287 = vpack.c.b16 %v3343, %v3342
    %v4288 = vpack.c.b16 %v3345, %v3344
    %v4289 = vpack.c.b16 %v3347, %v3346
    %v4290 = vpack.c.b16 %v3349, %v3348
    %v4291 = vpack.c.b16 %v3351, %v3350
    %v4292 = vpack.c.b16 %v3353, %v3352
    %v4293 = vpack.c.b16 %v3355, %v3354
    %v4294 = vpack.c.b16 %v3357, %v3356
    %v4295 = vpack.c.b16 %v3359, %v3358
    %v4296 = vpack.c.b16 %v3361, %v3360
    %v4297 = vpack.c.b16 %v3363, %v3362
    %v4298 = vpack.c.b16 %v3365, %v3364
    %v4299 = vpack.c.b16 %v3367, %v3366
    %v4300 = vpack.c.b16 %v3369, %v3368
    %v4301 = vpack.c.b16 %v3371, %v3370
    %v4302 = vpack.c.b16 %v3373, %v3372
    %v4303 = vpack.c.b16 %v3375, %v3374
    %v4304 = vpack.c.b16 %v3377, %v3376
    %v4305 = vpack.c.b16 %v3379, %v3378
    %v4306 = vpack.c.b16 %v3381, %v3380
    %v4307 = vpack.c.b16 %v3383, %v3382
    %v4308 = vpack.c.b16 %v3385, %v3384
    %v4309 = vpack.c.b16 %v3387, %v3386
    %v4310 = vpack.c.b16 %v3389, %v3388
    %v4311 = vpack.c.b16 %v3391, %v3390
    %v4312 = vpack.c.b16 %v3393, %v3392
    %v4313 = vpack.c.b16 %v3395, %v3394
    %v4314 = vpack.c.b16 %v3397, %v3396
    %v4315 = vpack.c.b16 %v3399, %v3398
    %v4316 = vpack.c.b16 %v3401, %v3400
    %v4317 = vpack.c.b16 %v3403, %v3402
    %v4318 = vpack.c.b16 %v3405, %v3404
    %v4319 = vpack.c.b16 %v3407, %v3406
    %v4320 = vpack.c.b16 %v3409, %v3408
    %v4321 = vpack.c.b16 %v3411, %v3410
    %v4322 = vpack.c.b16 %v3413, %v3412
    %v4323 = vpack.c.b16 %v3415, %v3414
    %v4324 = vpack.c.b16 %v3417, %v3416
    %v4325 = vpack.c.b16 %v3419, %v3418
    %v4326 = vpack.c.b16 %v3421, %v3420
    %v4327 = vpack.c.b16 %v3423, %v3422
    %v4328 = vpack.c.b16 %v3425, %v3424
    %v4329 = vpack.c.b16 %v3427, %v3426
    %v4330 = vpack.c.b16 %v3429, %v3428
    %v4331 = vpack.c.b16 %v3431, %v3430
    %v4332 = vpack.c.b16 %v3433, %v3432
    %v4333 = vpack.c.b16 %v3435, %v3434
    %v4334 = vpack.c.b16 %v3437, %v3436
    %v4335 = vpack.c.b16 %v3439, %v3438
    %v4336 = vpack.c.b16 %v3441, %v3440
    %v4337 = vpack.c.b16 %v3443, %v3442
    %v4338 = vpack.c.b16 %v3445, %v3444
    %v4339 = vpack.c.b16 %v3447, %v3446
    %v4340 = vpack.c.b16 %v3449, %v3448
    %v4341 = vpack.c.b16 %v3451, %v3450
    %v4342 = vpack.c.b16 %v3453, %v3452
    %v4343 = vpack.c.b16 %v3455, %v3454
    %v4344 = vpack.c.b16 %v3457, %v3456
    %v4345 = vpack.c.b16 %v3459, %v3458
    %v4346 = vpack.c.b16 %v3461, %v3460
    %v4347 = vpack.c.b16 %v3463, %v3462
    %v4348 = vpack.c.b16 %v3465, %v3464
    %v4349 = vpack.c.b16 %v3467, %v3466
    %v4350 = vpack.c.b16 %v3469, %v3468
    %v4351 = vpack.c.b16 %v3471, %v3470
    %v4352 = vpack.c.b16 %v3473, %v3472
    %v4353 = vpack.c.b16 %v3475, %v3474
    %v4354 = vpack.c.b16 %v3477, %v3476
    %v4355 = vpack.c.b16 %v3479, %v3478
    %v4356 = vpack.c.b16 %v3481, %v3480
    %v4357 = vpack.c.b16 %v3483, %v3482
    %v4358 = vpack.c.b16 %v3485, %v3484
    %v4359 = vpack.c.b16 %v3487, %v3486
    %v4360 = vpack.c.b16 %v3489, %v3488
    %v4361 = vpack.c.b16 %v3491, %v3490
    %v4362 = vpack.c.b16 %v3493, %v3492
    %v4363 = vpack.c.b16 %v3495, %v3494
    %v4364 = vpack.c.b16 %v3497, %v3496
    %v4365 = vpack.c.b16 %v3499, %v3498
    %v4366 = vpack.c.b16 %v3501, %v3500
    %v4367 = vpack.c.b16 %v3503, %v3502
    %v4368 = vpack.c.b16 %v3505, %v3504
    %v4369 = vpack.c.b16 %v3507, %v3506
    %v4370 = vpack.c.b16 %v3509, %v3508
    %v4371 = vpack.c.b16 %v3511, %v3510
    %v4372 = vpack.c.b16 %v3513, %v3512
    %v4373 = vpack.c.b16 %v3515, %v3514
    %v4374 = vpack.c.b16 %v3517, %v3516
    %v4375 = vpack.c.b16 %v3519, %v3518
    %v4376 = vpack.c.b16 %v3521, %v3520
    %v4377 = vpack.c.b16 %v3523, %v3522
    %v4378 = vpack.c.b16 %v3525, %v3524
    %v4379 = vpack.c.b16 %v3527, %v3526
    %v4380 = vpack.c.b16 %v3529, %v3528
    %v4381 = vpack.c.b16 %v3531, %v3530
    %v4382 = vpack.c.b16 %v3533, %v3532
    %v4383 = vpack.c.b16 %v3535, %v3534
    %v4384 = vpack.c.b16 %v3537, %v3536
    %v4385 = vpack.c.b16 %v3539, %v3538
    %v4386 = vpack.c.b16 %v3541, %v3540
    %v4387 = vpack.c.b16 %v3543, %v3542
    %v4388 = vpack.c.b16 %v3545, %v3544
    %v4389 = vpack.c.b16 %v3547, %v3546
    %v4390 = vpack.c.b16 %v3549, %v3548
    %v4391 = vpack.c.b16 %v3551, %v3550
    %v4392 = vpack.c.b16 %v3553, %v3552
    %v4393 = vpack.c.b16 %v3555, %v3554
    %v4394 = vpack.c.b16 %v3557, %v3556
    %v4395 = vpack.c.b16 %v3559, %v3558
    %v4396 = vpack.c.b16 %v3561, %v3560
    %v4397 = vpack.c.b16 %v3563, %v3562
    %v4398 = vpack.c.b16 %v3565, %v3564
    %v4399 = vpack.c.b16 %v3567, %v3566
    %v4400 = vpack.c.b16 %v3569, %v3568
    %v4401 = vpack.c.b16 %v3571, %v3570
    %v4402 = vpack.c.b16 %v3573, %v3572
    %v4403 = vpack.c.b16 %v3575, %v3574
    %v4404 = vpack.c.b16 %v3577, %v3576
    %v4405 = vpack.c.b16 %v3579, %v3578
    %v4406 = vpack.c.b16 %v3581, %v3580
    %v4407 = vpack.c.b16 %v3583, %v3582
    %v4408 = vpack.c.b16 %v3585, %v3584
    %v4409 = vpack.c.b16 %v3587, %v3586
    %v4410 = vpack.c.b16 %v3589, %v3588
    %v4411 = vpack.c.b16 %v3591, %v3590
    %v4412 = vpack.c.b16 %v3593, %v3592
    %v4413 = vpack.c.b16 %v3595, %v3594
    %v4414 = vpack.c.b16 %v3597, %v3596
    %v4415 = vpack.c.b16 %v3599, %v3598
    %v4416 = vpack.c.b16 %v3601, %v3600
    %v4417 = vpack.c.b16 %v3603, %v3602
    %v4418 = vpack.c.b16 %v3605, %v3604
    %v4419 = vpack.c.b16 %v3607, %v3606
    %v4420 = vpack.c.b16 %v3609, %v3608
    %v4421 = vpack.c.b16 %v3611, %v3610
    %v4422 = vpack.c.b16 %v3613, %v3612
    %v4423 = vpack.c.b16 %v3615, %v3614
    %v4424 = vpack.c.b16 %v3617, %v3616
    %v4425 = vpack.c.b16 %v3619, %v3618
    %v4426 = vpack.c.b16 %v3621, %v3620
    %v4427 = vpack.c.b16 %v3623, %v3622
    %v4428 = vpack.c.b16 %v3625, %v3624
    %v4429 = vpack.c.b16 %v3627, %v3626
    %v4430 = vpack.c.b16 %v3629, %v3628
    %v4431 = vpack.c.b16 %v3631, %v3630
    %v4432 = vpack.c.b16 %v3633, %v3632
    %v4433 = vpack.c.b16 %v3635, %v3634
    %v4434 = vpack.c.b16 %v3637, %v3636
    %v4435 = vpack.c.b16 %v3639, %v3638
    %v4436 = vpack.c.b16 %v3641, %v3640
    %v4437 = vpack.c.b16 %v3643, %v3642
    %v4438 = vpack.c.b16 %v3645, %v3644
    %v4439 = vpack.c.b16 %v3647, %v3646
    %v4440 = vpack.c.b16 %v3649, %v3648
    %v4441 = vpack.c.b16 %v3651, %v3650
    %v4442 = vpack.c.b16 %v3653, %v3652
    %v4443 = vpack.c.b16 %v3655, %v3654
    %v4444 = vpack.c.b16 %v3657, %v3656
    %v4445 = vpack.c.b16 %v3659, %v3658
    %v4446 = vpack.c.b16 %v3661, %v3660
    %v4447 = vpack.c.b16 %v3663, %v3662
    %v4448 = vpack.c.b16 %v3665, %v3664
    %v4449 = vpack.c.b16 %v3667, %v3666
    %v4450 = vpack.c.b16 %v3669, %v3668
    %v4451 = vpack.c.b16 %v3671, %v3670
    %v4452 = vpack.c.b16 %v3673, %v3672
    %v4453 = vpack.c.b16 %v3675, %v3674
    %v4454 = vpack.c.b16 %v3677, %v3676
    %v4455 = vpack.c.b16 %v3679, %v3678
    %v4456 = vpack.c.b16 %v3681, %v3680
    %v4457 = vpack.c.b16 %v3683, %v3682
    %v4458 = vpack.c.b16 %v3685, %v3684
    %v4459 = vpack.c.b16 %v3687, %v3686
    %v4460 = vpack.c.b16 %v3689, %v3688
    %v4461 = vpack.c.b16 %v3691, %v3690
    %v4462 = vpack.c.b16 %v3693, %v3692
    %v4463 = vpack.c.b16 %v3695, %v3694
    %v4464 = vpack.c.b16 %v3697, %v3696
    %v4465 = vpack.c.b16 %v3699, %v3698
    %v4466 = vpack.c.b16 %v3701, %v3700
    %v4467 = vpack.c.b16 %v3703, %v3702
    %v4468 = vpack.c.b16 %v3705, %v3704
    %v4469 = vpack.c.b16 %v3707, %v3706
    %v4470 = vpack.c.b16 %v3709, %v3708
    %v4471 = vpack.c.b16 %v3711, %v3710
    %v4472 = vpack.c.b16 %v3713, %v3712
    %v4473 = vpack.c.b16 %v3715, %v3714
    %v4474 = vpack.c.b16 %v3717, %v3716
    %v4475 = vpack.c.b16 %v3719, %v3718
    %v4476 = vpack.c.b16 %v3721, %v3720
    %v4477 = vpack.c.b16 %v3723, %v3722
    %v4478 = vpack.c.b16 %v3725, %v3724
    %v4479 = vpack.c.b16 %v3727, %v3726
    %v4480 = vpack.c.b16 %v3729, %v3728
    %v4481 = vpack.c.b16 %v3731, %v3730
    %v4482 = vpack.c.b16 %v3733, %v3732
    %v4483 = vpack.c.b16 %v3735, %v3734
    %v4484 = vpack.c.b16 %v3737, %v3736
    %v4485 = vpack.c.b16 %v3739, %v3738
    %v4486 = vpack.c.b16 %v3741, %v3740
    %v4487 = vpack.c.b16 %v3743, %v3742
    %v4488 = vpack.c.b16 %v3745, %v3744
    %v4489 = vpack.c.b16 %v3747, %v3746
    %v4490 = vpack.c.b16 %v3749, %v3748
    %v4491 = vpack.c.b16 %v3751, %v3750
    %v4492 = vpack.c.b16 %v3753, %v3752
    %v4493 = vpack.c.b16 %v3755, %v3754
    %v4494 = vpack.c.b16 %v3757, %v3756
    %v4495 = vpack.c.b16 %v3759, %v3758
    %v4496 = vpack.c.b16 %v3761, %v3760
    %v4497 = vpack.c.b16 %v3763, %v3762
    %v4498 = vpack.c.b16 %v3765, %v3764
    %v4499 = vpack.c.b16 %v3767, %v3766
    %v4500 = vpack.c.b16 %v3769, %v3768
    %v4501 = vpack.c.b16 %v3771, %v3770
    %v4502 = vpack.c.b16 %v3773, %v3772
    %v4503 = vpack.c.b16 %v3775, %v3774
    %v4504 = vpack.c.b16 %v3777, %v3776
    %v4505 = vpack.c.b16 %v3779, %v3778
    %v4506 = vpack.c.b16 %v3781, %v3780
    %v4507 = vpack.c.b16 %v3783, %v3782
    %v4508 = vpack.c.b16 %v3785, %v3784
    %v4509 = vpack.c.b16 %v3787, %v3786
    %v4510 = vpack.c.b16 %v3789, %v3788
    %v4511 = vpack.c.b16 %v3791, %v3790
    %v4512 = vpack.c.b16 %v3793, %v3792
    %v4513 = vpack.c.b16 %v3795, %v3794
    %v4514 = vpack.c.b16 %v3797, %v3796
    %v4515 = vpack.c.b16 %v3799, %v3798
    %v4516 = vpack.c.b16 %v3801, %v3800
    %v4517 = vpack.c.b16 %v3803, %v3802
    %v4518 = vpack.c.b16 %v3805, %v3804
    %v4519 = vpack.c.b16 %v3807, %v3806
    %v4520 = vpack.c.b16 %v3809, %v3808
    %v4521 = vpack.c.b16 %v3811, %v3810
    %v4522 = vpack.c.b16 %v3813, %v3812
    %v4523 = vpack.c.b16 %v3815, %v3814
    %v4524 = vpack.c.b16 %v3817, %v3816
    %v4525 = vpack.c.b16 %v3819, %v3818
    %v4526 = vpack.c.b16 %v3821, %v3820
    %v4527 = vpack.c.b16 %v3823, %v3822
    %v4528 = vpack.c.b16 %v3825, %v3824
    %v4529 = vpack.c.b16 %v3827, %v3826
    %v4530 = vpack.c.b16 %v3829, %v3828
    %v4531 = vpack.c.b16 %v3831, %v3830
    %v4532 = vpack.c.b16 %v3833, %v3832
    %v4533 = vpack.c.b16 %v3835, %v3834
    %v4534 = vpack.c.b16 %v3837, %v3836
    %v4535 = vpack.c.b16 %v3839, %v3838
    %v4536 = vpack.c.b16 %v3841, %v3840
    %v4537 = vpack.c.b16 %v3843, %v3842
    %v4538 = vpack.c.b16 %v3845, %v3844
    %v4539 = vpack.c.b16 %v3847, %v3846
    %v4540 = vpack.c.b16 %v3849, %v3848
    %v4541 = vpack.c.b16 %v3851, %v3850
    %v4542 = vpack.c.b16 %v3853, %v3852
    %v4543 = vpack.c.b16 %v3855, %v3854
    %v4544 = vpack.c.b16 %v3857, %v3856
    %v4545 = vpack.c.b16 %v3859, %v3858
    %v4546 = vpack.c.b16 %v3861, %v3860
    %v4547 = vpack.c.b16 %v3863, %v3862
    %v4548 = vpack.c.b16 %v3865, %v3864
    %v4549 = vpack.c.b16 %v3867, %v3866
    %v4550 = vpack.c.b16 %v3869, %v3868
    %v4551 = vpack.c.b16 %v3871, %v3870
    %v4552 = vpack.c.b16 %v3873, %v3872
    %v4553 = vpack.c.b16 %v3875, %v3874
    %v4554 = vpack.c.b16 %v3877, %v3876
    %v4555 = vpack.c.b16 %v3879, %v3878
    %v4556 = vpack.c.b16 %v3881, %v3880
    %v4557 = vpack.c.b16 %v3883, %v3882
    %v4558 = vpack.c.b16 %v3885, %v3884
    %v4559 = vpack.c.b16 %v3887, %v3886
    %v4560 = vpack.c.b16 %v3889, %v3888
    %v4561 = vpack.c.b16 %v3891, %v3890
    %v4562 = vpack.c.b16 %v3893, %v3892
    %v4563 = vpack.c.b16 %v3895, %v3894
    %v4564 = vpack.c.b16 %v3897, %v3896
    %v4565 = vpack.c.b16 %v3899, %v3898
    %v4566 = vpack.c.b16 %v3901, %v3900
    %v4567 = vpack.c.b16 %v3903, %v3902
    %v4568 = vpack.c.b16 %v3905, %v3904
    %v4569 = vpack.c.b16 %v3907, %v3906
    %v4570 = vpack.c.b16 %v3909, %v3908
    %v4571 = vpack.c.b16 %v3911, %v3910
    %v4572 = vpack.c.b16 %v3913, %v3912
    %v4573 = vpack.c.b16 %v3915, %v3914
    %v4574 = vpack.c.b16 %v3917, %v3916
    %v4575 = vpack.c.b16 %v3919, %v3918
    %v4576 = vpack.c.b16 %v3921, %v3920
    %v4577 = vpack.c.b16 %v3923, %v3922
    %v4578 = vpack.c.b16 %v3925, %v3924
    %v4579 = vpack.c.b16 %v3927, %v3926
    %v4580 = vpack.c.b16 %v3929, %v3928
    %v4581 = vpack.c.b16 %v3931, %v3930
    %v4582 = vpack.c.b16 %v3933, %v3932
    %v4583 = vpack.c.b16 %v3935, %v3934
    %v4584 = vpack.c.b16 %v3937, %v3936
    %v4585 = vpack.c.b16 %v3939, %v3938
    %v4586 = vpack.c.b16 %v3941, %v3940
    %v4587 = vpack.c.b16 %v3943, %v3942
    %v4588 = vpack.c.b16 %v3945, %v3944
    %v4589 = vpack.c.b16 %v3947, %v3946
    %v4590 = vpack.c.b16 %v3949, %v3948
    %v4591 = vpack.c.b16 %v3951, %v3950
    %v4592 = vpack.c.b16 %v3953, %v3952
    %v4593 = vpack.c.b16 %v3955, %v3954
    %v4594 = vpack.c.b16 %v3957, %v3956
    %v4595 = vpack.c.b16 %v3959, %v3958
    %v4596 = vpack.c.b16 %v3961, %v3960
    %v4597 = vpack.c.b16 %v3963, %v3962
    %v4598 = vpack.c.b16 %v3965, %v3964
    %v4599 = vpack.c.b16 %v3967, %v3966
    %v4600 = vpack.c.b16 %v3969, %v3968
    %v4601 = vpack.c.b16 %v3971, %v3970
    %v4602 = vpack.c.b16 %v3973, %v3972
    %v4603 = vpack.c.b16 %v3975, %v3974
    %v4604 = vpack.c.b16 %v3977, %v3976
    %v4605 = vpack.c.b16 %v3979, %v3978
    %v4606 = vpack.c.b16 %v3981, %v3980
    %v4607 = vpack.c.b16 %v3983, %v3982
    %v4608 = vpack.c.b16 %v3985, %v3984
    %v4609 = vpack.c.b16 %v3987, %v3986
    %v4610 = vpack.c.b16 %v3989, %v3988
    %v4611 = vpack.c.b16 %v3991, %v3990
    %v4612 = vpack.c.b16 %v3993, %v3992
    %v4613 = vpack.c.b16 %v3995, %v3994
    %v4614 = vpack.c.b16 %v3997, %v3996
    %v4615 = vpack.c.b16 %v3999, %v3998
    %v4616 = vpack.c.b16 %v4001, %v4000
    %v4617 = vpack.c.b16 %v4003, %v4002
    %v4618 = vpack.c.b16 %v4005, %v4004
    %v4619 = vpack.c.b16 %v4007, %v4006
    %v4620 = vpack.c.b16 %v4009, %v4008
    %v4621 = vpack.c.b16 %v4011, %v4010
    %v4622 = vpack.c.b16 %v4013, %v4012
    %v4623 = vpack.c.b16 %v4015, %v4014
    %v4624 = vpack.c.b16 %v4017, %v4016
    %v4625 = vpack.c.b16 %v4019, %v4018
    %v4626 = vpack.c.b16 %v4021, %v4020
    %v4627 = vpack.c.b16 %v4023, %v4022
    %v4628 = vpack.c.b16 %v4025, %v4024
    %v4629 = vpack.c.b16 %v4027, %v4026
    %v4630 = vpack.c.b16 %v4029, %v4028
    %v4631 = vpack.c.b16 %v4031, %v4030
    %v4632 = vpack.c.b16 %v4033, %v4032
    %v4633 = vpack.c.b16 %v4035, %v4034
    %v4634 = vpack.c.b16 %v4037, %v4036
    %v4635 = vpack.c.b16 %v4039, %v4038
    %v4636 = vpack.c.b16 %v4041, %v4040
    %v4637 = vpack.c.b16 %v4043, %v4042
    %v4638 = vpack.c.b16 %v4045, %v4044
    %v4639 = vpack.c.b16 %v4047, %v4046
    %v4640 = vpack.c.b16 %v4049, %v4048
    %v4641 = vpack.c.b16 %v4051, %v4050
    %v4642 = vpack.c.b16 %v4053, %v4052
    %v4643 = vpack.c.b16 %v4055, %v4054
    %v4644 = vpack.c.b16 %v4057, %v4056
    %v4645 = vpack.c.b16 %v4059, %v4058
    %v4646 = vpack.c.b16 %v4061, %v4060
    %v4647 = vpack.c.b16 %v4063, %v4062
    %v4648 = vpack.c.b16 %v4065, %v4064
    %v4649 = vpack.c.b16 %v4067, %v4066
    %v4650 = vpack.c.b16 %v4069, %v4068
    %v4651 = vpack.c.b16 %v4071, %v4070
    %v4652 = vpack.c.b16 %v4073, %v4072
    %v4653 = vpack.c.b16 %v4075, %v4074
    %v4654 = vpack.c.b16 %v4077, %v4076
    %v4655 = vpack.c.b16 %v4079, %v4078
    %5232 = vmatpush.bf16.msra.mxu0 %v4087
    %5233 = vmatpush.bf16.msra.mxu0 %v4086
    %5234 = vmatpush.bf16.msra.mxu0 %v4085
    %5235 = vmatpush.bf16.msra.mxu0 %v4084
    %5236 = vmatpush.bf16.msra.mxu0 %v4083
    %5237 = vmatpush.bf16.msra.mxu0 %v4082
    %5238 = vmatpush.bf16.msra.mxu0 %v4081
    %5239 = vmatpush.bf16.msra.mxu0 %v4080
    %5240 = vmatmul.bf16.gmra.mxu0 %v1704
    %v5241 = vpop.f32.mrf.mxu0
    %v5242 = vadd.f32 0.0, %v5241
    %v5243 = vpop.f32.mrf.mxu0
    %5244 = vdwg.mxu0
    %5245 = vmatpush.bf16.msra.mxu0 %v4095
    %5246 = vmatpush.bf16.msra.mxu0 %v4094
    %5247 = vmatpush.bf16.msra.mxu0 %v4093
    %5248 = vmatpush.bf16.msra.mxu0 %v4092
    %5249 = vmatpush.bf16.msra.mxu0 %v4091
    %5250 = vmatpush.bf16.msra.mxu0 %v4090
    %5251 = vmatpush.bf16.msra.mxu0 %v4089
    %5252 = vmatpush.bf16.msra.mxu0 %v4088
    %5253 = vmatmul.bf16.gmra.mxu0 %v1705
    %v5254 = vpop.f32.mrf.mxu0
    %v5255 = vadd.f32 %v5242, %v5254
    %v5256 = vpop.f32.mrf.mxu0
    %5257 = vdwg.mxu0
    %5258 = vmatpush.bf16.msra.mxu0 %v4103
    %5259 = vmatpush.bf16.msra.mxu0 %v4102
    %5260 = vmatpush.bf16.msra.mxu0 %v4101
    %5261 = vmatpush.bf16.msra.mxu0 %v4100
    %5262 = vmatpush.bf16.msra.mxu0 %v4099
    %5263 = vmatpush.bf16.msra.mxu0 %v4098
    %5264 = vmatpush.bf16.msra.mxu0 %v4097
    %5265 = vmatpush.bf16.msra.mxu0 %v4096
    %5266 = vmatmul.bf16.gmra.mxu0 %v1706
    %v5267 = vpop.f32.mrf.mxu0
    %v5268 = vadd.f32 %v5255, %v5267
    %v5269 = vpop.f32.mrf.mxu0
    %5270 = vdwg.mxu0
    %5271 = vmatpush.bf16.msra.mxu0 %v4111
    %5272 = vmatpush.bf16.msra.mxu0 %v4110
    %5273 = vmatpush.bf16.msra.mxu0 %v4109
    %5274 = vmatpush.bf16.msra.mxu0 %v4108
    %5275 = vmatpush.bf16.msra.mxu0 %v4107
    %5276 = vmatpush.bf16.msra.mxu0 %v4106
    %5277 = vmatpush.bf16.msra.mxu0 %v4105
    %5278 = vmatpush.bf16.msra.mxu0 %v4104
    %5279 = vmatmul.bf16.gmra.mxu0 %v1707
    %v5280 = vpop.f32.mrf.mxu0
    %v5281 = vadd.f32 %v5268, %v5280
    %v5282 = vpop.f32.mrf.mxu0
    %5283 = vdwg.mxu0
    %5284 = vmatpush.bf16.msra.mxu0 %v4119
    %5285 = vmatpush.bf16.msra.mxu0 %v4118
    %5286 = vmatpush.bf16.msra.mxu0 %v4117
    %5287 = vmatpush.bf16.msra.mxu0 %v4116
    %5288 = vmatpush.bf16.msra.mxu0 %v4115
    %5289 = vmatpush.bf16.msra.mxu0 %v4114
    %5290 = vmatpush.bf16.msra.mxu0 %v4113
    %5291 = vmatpush.bf16.msra.mxu0 %v4112
    %5292 = vmatmul.bf16.gmra.mxu0 %v1708
    %v5293 = vpop.f32.mrf.mxu0
    %v5294 = vadd.f32 %v5281, %v5293
    %v5295 = vpop.f32.mrf.mxu0
    %5296 = vdwg.mxu0
    %5297 = vmatpush.bf16.msra.mxu0 %v4127
    %5298 = vmatpush.bf16.msra.mxu0 %v4126
    %5299 = vmatpush.bf16.msra.mxu0 %v4125
    %5300 = vmatpush.bf16.msra.mxu0 %v4124
    %5301 = vmatpush.bf16.msra.mxu0 %v4123
    %5302 = vmatpush.bf16.msra.mxu0 %v4122
    %5303 = vmatpush.bf16.msra.mxu0 %v4121
    %5304 = vmatpush.bf16.msra.mxu0 %v4120
    %5305 = vmatmul.bf16.gmra.mxu0 %v1709
    %v5306 = vpop.f32.mrf.mxu0
    %v5307 = vadd.f32 %v5294, %v5306
    %v5308 = vpop.f32.mrf.mxu0
    %5309 = vdwg.mxu0
    %5310 = vmatpush.bf16.msra.mxu0 %v4135
    %5311 = vmatpush.bf16.msra.mxu0 %v4134
    %5312 = vmatpush.bf16.msra.mxu0 %v4133
    %5313 = vmatpush.bf16.msra.mxu0 %v4132
    %5314 = vmatpush.bf16.msra.mxu0 %v4131
    %5315 = vmatpush.bf16.msra.mxu0 %v4130
    %5316 = vmatpush.bf16.msra.mxu0 %v4129
    %5317 = vmatpush.bf16.msra.mxu0 %v4128
    %5318 = vmatmul.bf16.gmra.mxu0 %v1710
    %v5319 = vpop.f32.mrf.mxu0
    %v5320 = vadd.f32 %v5307, %v5319
    %v5321 = vpop.f32.mrf.mxu0
    %5322 = vdwg.mxu0
    %5323 = vmatpush.bf16.msra.mxu0 %v4143
    %5324 = vmatpush.bf16.msra.mxu0 %v4142
    %5325 = vmatpush.bf16.msra.mxu0 %v4141
    %5326 = vmatpush.bf16.msra.mxu0 %v4140
    %5327 = vmatpush.bf16.msra.mxu0 %v4139
    %5328 = vmatpush.bf16.msra.mxu0 %v4138
    %5329 = vmatpush.bf16.msra.mxu0 %v4137
    %5330 = vmatpush.bf16.msra.mxu0 %v4136
    %5331 = vmatmul.bf16.gmra.mxu0 %v1711
    %v5332 = vpop.f32.mrf.mxu0
    %v5333 = vadd.f32 %v5320, %v5332
    %v5334 = vpop.f32.mrf.mxu0
    %5335 = vdwg.mxu0
    %5336 = vmatpush.bf16.msra.mxu0 %v4151
    %5337 = vmatpush.bf16.msra.mxu0 %v4150
    %5338 = vmatpush.bf16.msra.mxu0 %v4149
    %5339 = vmatpush.bf16.msra.mxu0 %v4148
    %5340 = vmatpush.bf16.msra.mxu0 %v4147
    %5341 = vmatpush.bf16.msra.mxu0 %v4146
    %5342 = vmatpush.bf16.msra.mxu0 %v4145
    %5343 = vmatpush.bf16.msra.mxu0 %v4144
    %5344 = vmatmul.bf16.gmra.mxu0 %v1712
    %v5345 = vpop.f32.mrf.mxu0
    %v5346 = vadd.f32 %v5333, %v5345
    %v5347 = vpop.f32.mrf.mxu0
    %5348 = vdwg.mxu0
    %5349 = vmatpush.bf16.msra.mxu0 %v4159
    %5350 = vmatpush.bf16.msra.mxu0 %v4158
    %5351 = vmatpush.bf16.msra.mxu0 %v4157
    %5352 = vmatpush.bf16.msra.mxu0 %v4156
    %5353 = vmatpush.bf16.msra.mxu0 %v4155
    %5354 = vmatpush.bf16.msra.mxu0 %v4154
    %5355 = vmatpush.bf16.msra.mxu0 %v4153
    %5356 = vmatpush.bf16.msra.mxu0 %v4152
    %5357 = vmatmul.bf16.gmra.mxu0 %v1713
    %v5358 = vpop.f32.mrf.mxu0
    %v5359 = vadd.f32 %v5346, %v5358
    %v5360 = vpop.f32.mrf.mxu0
    %5361 = vdwg.mxu0
    %5362 = vmatpush.bf16.msra.mxu0 %v4167
    %5363 = vmatpush.bf16.msra.mxu0 %v4166
    %5364 = vmatpush.bf16.msra.mxu0 %v4165
    %5365 = vmatpush.bf16.msra.mxu0 %v4164
    %5366 = vmatpush.bf16.msra.mxu0 %v4163
    %5367 = vmatpush.bf16.msra.mxu0 %v4162
    %5368 = vmatpush.bf16.msra.mxu0 %v4161
    %5369 = vmatpush.bf16.msra.mxu0 %v4160
    %5370 = vmatmul.bf16.gmra.mxu0 %v1714
    %v5371 = vpop.f32.mrf.mxu0
    %v5372 = vadd.f32 %v5359, %v5371
    %v5373 = vpop.f32.mrf.mxu0
    %5374 = vdwg.mxu0
    %5375 = vmatpush.bf16.msra.mxu0 %v4175
    %5376 = vmatpush.bf16.msra.mxu0 %v4174
    %5377 = vmatpush.bf16.msra.mxu0 %v4173
    %5378 = vmatpush.bf16.msra.mxu0 %v4172
    %5379 = vmatpush.bf16.msra.mxu0 %v4171
    %5380 = vmatpush.bf16.msra.mxu0 %v4170
    %5381 = vmatpush.bf16.msra.mxu0 %v4169
    %5382 = vmatpush.bf16.msra.mxu0 %v4168
    %5383 = vmatmul.bf16.gmra.mxu0 %v1715
    %v5384 = vpop.f32.mrf.mxu0
    %v5385 = vadd.f32 %v5372, %v5384
    %v5386 = vpop.f32.mrf.mxu0
    %5387 = vdwg.mxu0
    %5388 = vmatpush.bf16.msra.mxu0 %v4183
    %5389 = vmatpush.bf16.msra.mxu0 %v4182
    %5390 = vmatpush.bf16.msra.mxu0 %v4181
    %5391 = vmatpush.bf16.msra.mxu0 %v4180
    %5392 = vmatpush.bf16.msra.mxu0 %v4179
    %5393 = vmatpush.bf16.msra.mxu0 %v4178
    %5394 = vmatpush.bf16.msra.mxu0 %v4177
    %5395 = vmatpush.bf16.msra.mxu0 %v4176
    %5396 = vmatmul.bf16.gmra.mxu0 %v1716
    %v5397 = vpop.f32.mrf.mxu0
    %v5398 = vadd.f32 %v5385, %v5397
    %v5399 = vpop.f32.mrf.mxu0
    %5400 = vdwg.mxu0
    %5401 = vmatpush.bf16.msra.mxu0 %v4191
    %5402 = vmatpush.bf16.msra.mxu0 %v4190
    %5403 = vmatpush.bf16.msra.mxu0 %v4189
    %5404 = vmatpush.bf16.msra.mxu0 %v4188
    %5405 = vmatpush.bf16.msra.mxu0 %v4187
    %5406 = vmatpush.bf16.msra.mxu0 %v4186
    %5407 = vmatpush.bf16.msra.mxu0 %v4185
    %5408 = vmatpush.bf16.msra.mxu0 %v4184
    %5409 = vmatmul.bf16.gmra.mxu0 %v1717
    %v5410 = vpop.f32.mrf.mxu0
    %v5411 = vadd.f32 %v5398, %v5410
    %v5412 = vpop.f32.mrf.mxu0
    %5413 = vdwg.mxu0
    %5414 = vmatpush.bf16.msra.mxu0 %v4199
    %5415 = vmatpush.bf16.msra.mxu0 %v4198
    %5416 = vmatpush.bf16.msra.mxu0 %v4197
    %5417 = vmatpush.bf16.msra.mxu0 %v4196
    %5418 = vmatpush.bf16.msra.mxu0 %v4195
    %5419 = vmatpush.bf16.msra.mxu0 %v4194
    %5420 = vmatpush.bf16.msra.mxu0 %v4193
    %5421 = vmatpush.bf16.msra.mxu0 %v4192
    %5422 = vmatmul.bf16.gmra.mxu0 %v1718
    %v5423 = vpop.f32.mrf.mxu0
    %v5424 = vadd.f32 %v5411, %v5423
    %v5425 = vpop.f32.mrf.mxu0
    %5426 = vdwg.mxu0
    %5427 = vmatpush.bf16.msra.mxu0 %v4207
    %5428 = vmatpush.bf16.msra.mxu0 %v4206
    %5429 = vmatpush.bf16.msra.mxu0 %v4205
    %5430 = vmatpush.bf16.msra.mxu0 %v4204
    %5431 = vmatpush.bf16.msra.mxu0 %v4203
    %5432 = vmatpush.bf16.msra.mxu0 %v4202
    %5433 = vmatpush.bf16.msra.mxu0 %v4201
    %5434 = vmatpush.bf16.msra.mxu0 %v4200
    %5435 = vmatmul.bf16.gmra.mxu0 %v1719
    %v5436 = vpop.f32.mrf.mxu0
    %v5437 = vadd.f32 %v5424, %v5436
    %v5438 = vpop.f32.mrf.mxu0
    %5439 = vdwg.mxu0
    %5440 = vmatpush.bf16.msra.mxu0 %v4215
    %5441 = vmatpush.bf16.msra.mxu0 %v4214
    %5442 = vmatpush.bf16.msra.mxu0 %v4213
    %5443 = vmatpush.bf16.msra.mxu0 %v4212
    %5444 = vmatpush.bf16.msra.mxu0 %v4211
    %5445 = vmatpush.bf16.msra.mxu0 %v4210
    %5446 = vmatpush.bf16.msra.mxu0 %v4209
    %5447 = vmatpush.bf16.msra.mxu0 %v4208
    %5448 = vmatmul.bf16.gmra.mxu0 %v1720
    %v5449 = vpop.f32.mrf.mxu0
    %v5450 = vadd.f32 %v5437, %v5449
    %v5451 = vpop.f32.mrf.mxu0
    %5452 = vdwg.mxu0
    %5453 = vmatpush.bf16.msra.mxu0 %v4223
    %5454 = vmatpush.bf16.msra.mxu0 %v4222
    %5455 = vmatpush.bf16.msra.mxu0 %v4221
    %5456 = vmatpush.bf16.msra.mxu0 %v4220
    %5457 = vmatpush.bf16.msra.mxu0 %v4219
    %5458 = vmatpush.bf16.msra.mxu0 %v4218
    %5459 = vmatpush.bf16.msra.mxu0 %v4217
    %5460 = vmatpush.bf16.msra.mxu0 %v4216
    %5461 = vmatmul.bf16.gmra.mxu0 %v1721
    %v5462 = vpop.f32.mrf.mxu0
    %v5463 = vadd.f32 %v5450, %v5462
    %v5464 = vpop.f32.mrf.mxu0
    %5465 = vdwg.mxu0
    %5466 = vmatpush.bf16.msra.mxu0 %v4231
    %5467 = vmatpush.bf16.msra.mxu0 %v4230
    %5468 = vmatpush.bf16.msra.mxu0 %v4229
    %5469 = vmatpush.bf16.msra.mxu0 %v4228
    %5470 = vmatpush.bf16.msra.mxu0 %v4227
    %5471 = vmatpush.bf16.msra.mxu0 %v4226
    %5472 = vmatpush.bf16.msra.mxu0 %v4225
    %5473 = vmatpush.bf16.msra.mxu0 %v4224
    %5474 = vmatmul.bf16.gmra.mxu0 %v1722
    %v5475 = vpop.f32.mrf.mxu0
    %v5476 = vadd.f32 %v5463, %v5475
    %v5477 = vpop.f32.mrf.mxu0
    %5478 = vdwg.mxu0
    %5479 = vmatpush.bf16.msra.mxu0 %v4239
    %5480 = vmatpush.bf16.msra.mxu0 %v4238
    %5481 = vmatpush.bf16.msra.mxu0 %v4237
    %5482 = vmatpush.bf16.msra.mxu0 %v4236
    %5483 = vmatpush.bf16.msra.mxu0 %v4235
    %5484 = vmatpush.bf16.msra.mxu0 %v4234
    %5485 = vmatpush.bf16.msra.mxu0 %v4233
    %5486 = vmatpush.bf16.msra.mxu0 %v4232
    %5487 = vmatmul.bf16.gmra.mxu0 %v1723
    %v5488 = vpop.f32.mrf.mxu0
    %v5489 = vadd.f32 %v5476, %v5488
    %v5490 = vpop.f32.mrf.mxu0
    %5491 = vdwg.mxu0
    %5492 = vmatpush.bf16.msra.mxu0 %v4247
    %5493 = vmatpush.bf16.msra.mxu0 %v4246
    %5494 = vmatpush.bf16.msra.mxu0 %v4245
    %5495 = vmatpush.bf16.msra.mxu0 %v4244
    %5496 = vmatpush.bf16.msra.mxu0 %v4243
    %5497 = vmatpush.bf16.msra.mxu0 %v4242
    %5498 = vmatpush.bf16.msra.mxu0 %v4241
    %5499 = vmatpush.bf16.msra.mxu0 %v4240
    %5500 = vmatmul.bf16.gmra.mxu0 %v1724
    %v5501 = vpop.f32.mrf.mxu0
    %v5502 = vadd.f32 %v5489, %v5501
    %v5503 = vpop.f32.mrf.mxu0
    %5504 = vdwg.mxu0
    %5505 = vmatpush.bf16.msra.mxu0 %v4255
    %5506 = vmatpush.bf16.msra.mxu0 %v4254
    %5507 = vmatpush.bf16.msra.mxu0 %v4253
    %5508 = vmatpush.bf16.msra.mxu0 %v4252
    %5509 = vmatpush.bf16.msra.mxu0 %v4251
    %5510 = vmatpush.bf16.msra.mxu0 %v4250
    %5511 = vmatpush.bf16.msra.mxu0 %v4249
    %5512 = vmatpush.bf16.msra.mxu0 %v4248
    %5513 = vmatmul.bf16.gmra.mxu0 %v1725
    %v5514 = vpop.f32.mrf.mxu0
    %v5515 = vadd.f32 %v5502, %v5514
    %v5516 = vpop.f32.mrf.mxu0
    %5517 = vdwg.mxu0
    %5518 = vmatpush.bf16.msra.mxu0 %v4263
    %5519 = vmatpush.bf16.msra.mxu0 %v4262
    %5520 = vmatpush.bf16.msra.mxu0 %v4261
    %5521 = vmatpush.bf16.msra.mxu0 %v4260
    %5522 = vmatpush.bf16.msra.mxu0 %v4259
    %5523 = vmatpush.bf16.msra.mxu0 %v4258
    %5524 = vmatpush.bf16.msra.mxu0 %v4257
    %5525 = vmatpush.bf16.msra.mxu0 %v4256
    %5526 = vmatmul.bf16.gmra.mxu0 %v1726
    %v5527 = vpop.f32.mrf.mxu0
    %v5528 = vadd.f32 %v5515, %v5527
    %v5529 = vpop.f32.mrf.mxu0
    %5530 = vdwg.mxu0
    %5531 = vmatpush.bf16.msra.mxu0 %v4271
    %5532 = vmatpush.bf16.msra.mxu0 %v4270
    %5533 = vmatpush.bf16.msra.mxu0 %v4269
    %5534 = vmatpush.bf16.msra.mxu0 %v4268
    %5535 = vmatpush.bf16.msra.mxu0 %v4267
    %5536 = vmatpush.bf16.msra.mxu0 %v4266
    %5537 = vmatpush.bf16.msra.mxu0 %v4265
    %5538 = vmatpush.bf16.msra.mxu0 %v4264
    %5539 = vmatmul.bf16.gmra.mxu0 %v1727
    %v5540 = vpop.f32.mrf.mxu0
    %v5541 = vadd.f32 %v5528, %v5540
    %v5542 = vpop.f32.mrf.mxu0
    %5543 = vdwg.mxu0
    %5544 = vmatpush.bf16.msra.mxu0 %v4279
    %5545 = vmatpush.bf16.msra.mxu0 %v4278
    %5546 = vmatpush.bf16.msra.mxu0 %v4277
    %5547 = vmatpush.bf16.msra.mxu0 %v4276
    %5548 = vmatpush.bf16.msra.mxu0 %v4275
    %5549 = vmatpush.bf16.msra.mxu0 %v4274
    %5550 = vmatpush.bf16.msra.mxu0 %v4273
    %5551 = vmatpush.bf16.msra.mxu0 %v4272
    %5552 = vmatmul.bf16.gmra.mxu0 %v1728
    %v5553 = vpop.f32.mrf.mxu0
    %v5554 = vadd.f32 %v5541, %v5553
    %v5555 = vpop.f32.mrf.mxu0
    %5556 = vdwg.mxu0
    %5557 = vmatpush.bf16.msra.mxu0 %v4287
    %5558 = vmatpush.bf16.msra.mxu0 %v4286
    %5559 = vmatpush.bf16.msra.mxu0 %v4285
    %5560 = vmatpush.bf16.msra.mxu0 %v4284
    %5561 = vmatpush.bf16.msra.mxu0 %v4283
    %5562 = vmatpush.bf16.msra.mxu0 %v4282
    %5563 = vmatpush.bf16.msra.mxu0 %v4281
    %5564 = vmatpush.bf16.msra.mxu0 %v4280
    %5565 = vmatmul.bf16.gmra.mxu0 %v1729
    %v5566 = vpop.f32.mrf.mxu0
    %v5567 = vadd.f32 %v5554, %v5566
    %v5568 = vpop.f32.mrf.mxu0
    %5569 = vdwg.mxu0
    %5570 = vmatpush.bf16.msra.mxu0 %v4295
    %5571 = vmatpush.bf16.msra.mxu0 %v4294
    %5572 = vmatpush.bf16.msra.mxu0 %v4293
    %5573 = vmatpush.bf16.msra.mxu0 %v4292
    %5574 = vmatpush.bf16.msra.mxu0 %v4291
    %5575 = vmatpush.bf16.msra.mxu0 %v4290
    %5576 = vmatpush.bf16.msra.mxu0 %v4289
    %5577 = vmatpush.bf16.msra.mxu0 %v4288
    %5578 = vmatmul.bf16.gmra.mxu0 %v1730
    %v5579 = vpop.f32.mrf.mxu0
    %v5580 = vadd.f32 %v5567, %v5579
    %v5581 = vpop.f32.mrf.mxu0
    %5582 = vdwg.mxu0
    %5583 = vmatpush.bf16.msra.mxu0 %v4303
    %5584 = vmatpush.bf16.msra.mxu0 %v4302
    %5585 = vmatpush.bf16.msra.mxu0 %v4301
    %5586 = vmatpush.bf16.msra.mxu0 %v4300
    %5587 = vmatpush.bf16.msra.mxu0 %v4299
    %5588 = vmatpush.bf16.msra.mxu0 %v4298
    %5589 = vmatpush.bf16.msra.mxu0 %v4297
    %5590 = vmatpush.bf16.msra.mxu0 %v4296
    %5591 = vmatmul.bf16.gmra.mxu0 %v1731
    %v5592 = vpop.f32.mrf.mxu0
    %v5593 = vadd.f32 %v5580, %v5592
    %v5594 = vpop.f32.mrf.mxu0
    %5595 = vdwg.mxu0
    %5596 = vmatpush.bf16.msra.mxu0 %v4311
    %5597 = vmatpush.bf16.msra.mxu0 %v4310
    %5598 = vmatpush.bf16.msra.mxu0 %v4309
    %5599 = vmatpush.bf16.msra.mxu0 %v4308
    %5600 = vmatpush.bf16.msra.mxu0 %v4307
    %5601 = vmatpush.bf16.msra.mxu0 %v4306
    %5602 = vmatpush.bf16.msra.mxu0 %v4305
    %5603 = vmatpush.bf16.msra.mxu0 %v4304
    %5604 = vmatmul.bf16.gmra.mxu0 %v1732
    %v5605 = vpop.f32.mrf.mxu0
    %v5606 = vadd.f32 %v5593, %v5605
    %v5607 = vpop.f32.mrf.mxu0
    %5608 = vdwg.mxu0
    %5609 = vmatpush.bf16.msra.mxu0 %v4319
    %5610 = vmatpush.bf16.msra.mxu0 %v4318
    %5611 = vmatpush.bf16.msra.mxu0 %v4317
    %5612 = vmatpush.bf16.msra.mxu0 %v4316
    %5613 = vmatpush.bf16.msra.mxu0 %v4315
    %5614 = vmatpush.bf16.msra.mxu0 %v4314
    %5615 = vmatpush.bf16.msra.mxu0 %v4313
    %5616 = vmatpush.bf16.msra.mxu0 %v4312
    %5617 = vmatmul.bf16.gmra.mxu0 %v1733
    %v5618 = vpop.f32.mrf.mxu0
    %v5619 = vadd.f32 %v5606, %v5618
    %v5620 = vpop.f32.mrf.mxu0
    %5621 = vdwg.mxu0
    %5622 = vmatpush.bf16.msra.mxu0 %v4327
    %5623 = vmatpush.bf16.msra.mxu0 %v4326
    %5624 = vmatpush.bf16.msra.mxu0 %v4325
    %5625 = vmatpush.bf16.msra.mxu0 %v4324
    %5626 = vmatpush.bf16.msra.mxu0 %v4323
    %5627 = vmatpush.bf16.msra.mxu0 %v4322
    %5628 = vmatpush.bf16.msra.mxu0 %v4321
    %5629 = vmatpush.bf16.msra.mxu0 %v4320
    %5630 = vmatmul.bf16.gmra.mxu0 %v1734
    %v5631 = vpop.f32.mrf.mxu0
    %v5632 = vadd.f32 %v5619, %v5631
    %v5633 = vpop.f32.mrf.mxu0
    %5634 = vdwg.mxu0
    %5635 = vmatpush.bf16.msra.mxu0 %v4335
    %5636 = vmatpush.bf16.msra.mxu0 %v4334
    %5637 = vmatpush.bf16.msra.mxu0 %v4333
    %5638 = vmatpush.bf16.msra.mxu0 %v4332
    %5639 = vmatpush.bf16.msra.mxu0 %v4331
    %5640 = vmatpush.bf16.msra.mxu0 %v4330
    %5641 = vmatpush.bf16.msra.mxu0 %v4329
    %5642 = vmatpush.bf16.msra.mxu0 %v4328
    %5643 = vmatmul.bf16.gmra.mxu0 %v1735
    %v5644 = vpop.f32.mrf.mxu0
    %v5645 = vadd.f32 %v5632, %v5644
    %v5646 = vpop.f32.mrf.mxu0
    %5647 = vdwg.mxu0
    %5648 = vmatpush.bf16.msra.mxu0 %v4343
    %5649 = vmatpush.bf16.msra.mxu0 %v4342
    %5650 = vmatpush.bf16.msra.mxu0 %v4341
    %5651 = vmatpush.bf16.msra.mxu0 %v4340
    %5652 = vmatpush.bf16.msra.mxu0 %v4339
    %5653 = vmatpush.bf16.msra.mxu0 %v4338
    %5654 = vmatpush.bf16.msra.mxu0 %v4337
    %5655 = vmatpush.bf16.msra.mxu0 %v4336
    %5656 = vmatmul.bf16.gmra.mxu0 %v1736
    %v5657 = vpop.f32.mrf.mxu0
    %v5658 = vadd.f32 %v5645, %v5657
    %v5659 = vpop.f32.mrf.mxu0
    %5660 = vdwg.mxu0
    %5661 = vmatpush.bf16.msra.mxu0 %v4351
    %5662 = vmatpush.bf16.msra.mxu0 %v4350
    %5663 = vmatpush.bf16.msra.mxu0 %v4349
    %5664 = vmatpush.bf16.msra.mxu0 %v4348
    %5665 = vmatpush.bf16.msra.mxu0 %v4347
    %5666 = vmatpush.bf16.msra.mxu0 %v4346
    %5667 = vmatpush.bf16.msra.mxu0 %v4345
    %5668 = vmatpush.bf16.msra.mxu0 %v4344
    %5669 = vmatmul.bf16.gmra.mxu0 %v1737
    %v5670 = vpop.f32.mrf.mxu0
    %v5671 = vadd.f32 %v5658, %v5670
    %v5672 = vpop.f32.mrf.mxu0
    %5673 = vdwg.mxu0
    %5674 = vmatpush.bf16.msra.mxu0 %v4359
    %5675 = vmatpush.bf16.msra.mxu0 %v4358
    %5676 = vmatpush.bf16.msra.mxu0 %v4357
    %5677 = vmatpush.bf16.msra.mxu0 %v4356
    %5678 = vmatpush.bf16.msra.mxu0 %v4355
    %5679 = vmatpush.bf16.msra.mxu0 %v4354
    %5680 = vmatpush.bf16.msra.mxu0 %v4353
    %5681 = vmatpush.bf16.msra.mxu0 %v4352
    %5682 = vmatmul.bf16.gmra.mxu0 %v1738
    %v5683 = vpop.f32.mrf.mxu0
    %v5684 = vadd.f32 %v5671, %v5683
    %v5685 = vpop.f32.mrf.mxu0
    %5686 = vdwg.mxu0
    %5687 = vmatpush.bf16.msra.mxu0 %v4367
    %5688 = vmatpush.bf16.msra.mxu0 %v4366
    %5689 = vmatpush.bf16.msra.mxu0 %v4365
    %5690 = vmatpush.bf16.msra.mxu0 %v4364
    %5691 = vmatpush.bf16.msra.mxu0 %v4363
    %5692 = vmatpush.bf16.msra.mxu0 %v4362
    %5693 = vmatpush.bf16.msra.mxu0 %v4361
    %5694 = vmatpush.bf16.msra.mxu0 %v4360
    %5695 = vmatmul.bf16.gmra.mxu0 %v1739
    %v5696 = vpop.f32.mrf.mxu0
    %v5697 = vadd.f32 %v5684, %v5696
    %v5698 = vpop.f32.mrf.mxu0
    %5699 = vdwg.mxu0
    %5700 = vmatpush.bf16.msra.mxu0 %v4375
    %5701 = vmatpush.bf16.msra.mxu0 %v4374
    %5702 = vmatpush.bf16.msra.mxu0 %v4373
    %5703 = vmatpush.bf16.msra.mxu0 %v4372
    %5704 = vmatpush.bf16.msra.mxu0 %v4371
    %5705 = vmatpush.bf16.msra.mxu0 %v4370
    %5706 = vmatpush.bf16.msra.mxu0 %v4369
    %5707 = vmatpush.bf16.msra.mxu0 %v4368
    %5708 = vmatmul.bf16.gmra.mxu0 %v1740
    %v5709 = vpop.f32.mrf.mxu0
    %v5710 = vadd.f32 %v5697, %v5709
    %v5711 = vpop.f32.mrf.mxu0
    %5712 = vdwg.mxu0
    %5713 = vmatpush.bf16.msra.mxu0 %v4383
    %5714 = vmatpush.bf16.msra.mxu0 %v4382
    %5715 = vmatpush.bf16.msra.mxu0 %v4381
    %5716 = vmatpush.bf16.msra.mxu0 %v4380
    %5717 = vmatpush.bf16.msra.mxu0 %v4379
    %5718 = vmatpush.bf16.msra.mxu0 %v4378
    %5719 = vmatpush.bf16.msra.mxu0 %v4377
    %5720 = vmatpush.bf16.msra.mxu0 %v4376
    %5721 = vmatmul.bf16.gmra.mxu0 %v1741
    %v5722 = vpop.f32.mrf.mxu0
    %v5723 = vadd.f32 %v5710, %v5722
    %v5724 = vpop.f32.mrf.mxu0
    %5725 = vdwg.mxu0
    %5726 = vmatpush.bf16.msra.mxu0 %v4391
    %5727 = vmatpush.bf16.msra.mxu0 %v4390
    %5728 = vmatpush.bf16.msra.mxu0 %v4389
    %5729 = vmatpush.bf16.msra.mxu0 %v4388
    %5730 = vmatpush.bf16.msra.mxu0 %v4387
    %5731 = vmatpush.bf16.msra.mxu0 %v4386
    %5732 = vmatpush.bf16.msra.mxu0 %v4385
    %5733 = vmatpush.bf16.msra.mxu0 %v4384
    %5734 = vmatmul.bf16.gmra.mxu0 %v1742
    %v5735 = vpop.f32.mrf.mxu0
    %v5736 = vadd.f32 %v5723, %v5735
    %v5737 = vpop.f32.mrf.mxu0
    %5738 = vdwg.mxu0
    %5739 = vmatpush.bf16.msra.mxu0 %v4399
    %5740 = vmatpush.bf16.msra.mxu0 %v4398
    %5741 = vmatpush.bf16.msra.mxu0 %v4397
    %5742 = vmatpush.bf16.msra.mxu0 %v4396
    %5743 = vmatpush.bf16.msra.mxu0 %v4395
    %5744 = vmatpush.bf16.msra.mxu0 %v4394
    %5745 = vmatpush.bf16.msra.mxu0 %v4393
    %5746 = vmatpush.bf16.msra.mxu0 %v4392
    %5747 = vmatmul.bf16.gmra.mxu0 %v1743
    %v5748 = vpop.f32.mrf.mxu0
    %v5749 = vadd.f32 %v5736, %v5748
    %v5750 = vpop.f32.mrf.mxu0
    %5751 = vdwg.mxu0
    %5752 = vmatpush.bf16.msra.mxu0 %v4407
    %5753 = vmatpush.bf16.msra.mxu0 %v4406
    %5754 = vmatpush.bf16.msra.mxu0 %v4405
    %5755 = vmatpush.bf16.msra.mxu0 %v4404
    %5756 = vmatpush.bf16.msra.mxu0 %v4403
    %5757 = vmatpush.bf16.msra.mxu0 %v4402
    %5758 = vmatpush.bf16.msra.mxu0 %v4401
    %5759 = vmatpush.bf16.msra.mxu0 %v4400
    %5760 = vmatmul.bf16.gmra.mxu0 %v1744
    %v5761 = vpop.f32.mrf.mxu0
    %v5762 = vadd.f32 %v5749, %v5761
    %v5763 = vpop.f32.mrf.mxu0
    %5764 = vdwg.mxu0
    %5765 = vmatpush.bf16.msra.mxu0 %v4415
    %5766 = vmatpush.bf16.msra.mxu0 %v4414
    %5767 = vmatpush.bf16.msra.mxu0 %v4413
    %5768 = vmatpush.bf16.msra.mxu0 %v4412
    %5769 = vmatpush.bf16.msra.mxu0 %v4411
    %5770 = vmatpush.bf16.msra.mxu0 %v4410
    %5771 = vmatpush.bf16.msra.mxu0 %v4409
    %5772 = vmatpush.bf16.msra.mxu0 %v4408
    %5773 = vmatmul.bf16.gmra.mxu0 %v1745
    %v5774 = vpop.f32.mrf.mxu0
    %v5775 = vadd.f32 %v5762, %v5774
    %v5776 = vpop.f32.mrf.mxu0
    %5777 = vdwg.mxu0
    %5778 = vmatpush.bf16.msra.mxu0 %v4423
    %5779 = vmatpush.bf16.msra.mxu0 %v4422
    %5780 = vmatpush.bf16.msra.mxu0 %v4421
    %5781 = vmatpush.bf16.msra.mxu0 %v4420
    %5782 = vmatpush.bf16.msra.mxu0 %v4419
    %5783 = vmatpush.bf16.msra.mxu0 %v4418
    %5784 = vmatpush.bf16.msra.mxu0 %v4417
    %5785 = vmatpush.bf16.msra.mxu0 %v4416
    %5786 = vmatmul.bf16.gmra.mxu0 %v1746
    %v5787 = vpop.f32.mrf.mxu0
    %v5788 = vadd.f32 %v5775, %v5787
    %v5789 = vpop.f32.mrf.mxu0
    %5790 = vdwg.mxu0
    %5791 = vmatpush.bf16.msra.mxu0 %v4431
    %5792 = vmatpush.bf16.msra.mxu0 %v4430
    %5793 = vmatpush.bf16.msra.mxu0 %v4429
    %5794 = vmatpush.bf16.msra.mxu0 %v4428
    %5795 = vmatpush.bf16.msra.mxu0 %v4427
    %5796 = vmatpush.bf16.msra.mxu0 %v4426
    %5797 = vmatpush.bf16.msra.mxu0 %v4425
    %5798 = vmatpush.bf16.msra.mxu0 %v4424
    %5799 = vmatmul.bf16.gmra.mxu0 %v1747
    %v5800 = vpop.f32.mrf.mxu0
    %v5801 = vadd.f32 %v5788, %v5800
    %v5802 = vpop.f32.mrf.mxu0
    %5803 = vdwg.mxu0
    %5804 = vmatpush.bf16.msra.mxu0 %v4439
    %5805 = vmatpush.bf16.msra.mxu0 %v4438
    %5806 = vmatpush.bf16.msra.mxu0 %v4437
    %5807 = vmatpush.bf16.msra.mxu0 %v4436
    %5808 = vmatpush.bf16.msra.mxu0 %v4435
    %5809 = vmatpush.bf16.msra.mxu0 %v4434
    %5810 = vmatpush.bf16.msra.mxu0 %v4433
    %5811 = vmatpush.bf16.msra.mxu0 %v4432
    %5812 = vmatmul.bf16.gmra.mxu0 %v1748
    %v5813 = vpop.f32.mrf.mxu0
    %v5814 = vadd.f32 %v5801, %v5813
    %v5815 = vpop.f32.mrf.mxu0
    %5816 = vdwg.mxu0
    %5817 = vmatpush.bf16.msra.mxu0 %v4447
    %5818 = vmatpush.bf16.msra.mxu0 %v4446
    %5819 = vmatpush.bf16.msra.mxu0 %v4445
    %5820 = vmatpush.bf16.msra.mxu0 %v4444
    %5821 = vmatpush.bf16.msra.mxu0 %v4443
    %5822 = vmatpush.bf16.msra.mxu0 %v4442
    %5823 = vmatpush.bf16.msra.mxu0 %v4441
    %5824 = vmatpush.bf16.msra.mxu0 %v4440
    %5825 = vmatmul.bf16.gmra.mxu0 %v1749
    %v5826 = vpop.f32.mrf.mxu0
    %v5827 = vadd.f32 %v5814, %v5826
    %v5828 = vpop.f32.mrf.mxu0
    %5829 = vdwg.mxu0
    %5830 = vmatpush.bf16.msra.mxu0 %v4455
    %5831 = vmatpush.bf16.msra.mxu0 %v4454
    %5832 = vmatpush.bf16.msra.mxu0 %v4453
    %5833 = vmatpush.bf16.msra.mxu0 %v4452
    %5834 = vmatpush.bf16.msra.mxu0 %v4451
    %5835 = vmatpush.bf16.msra.mxu0 %v4450
    %5836 = vmatpush.bf16.msra.mxu0 %v4449
    %5837 = vmatpush.bf16.msra.mxu0 %v4448
    %5838 = vmatmul.bf16.gmra.mxu0 %v1750
    %v5839 = vpop.f32.mrf.mxu0
    %v5840 = vadd.f32 %v5827, %v5839
    %v5841 = vpop.f32.mrf.mxu0
    %5842 = vdwg.mxu0
    %5843 = vmatpush.bf16.msra.mxu0 %v4463
    %5844 = vmatpush.bf16.msra.mxu0 %v4462
    %5845 = vmatpush.bf16.msra.mxu0 %v4461
    %5846 = vmatpush.bf16.msra.mxu0 %v4460
    %5847 = vmatpush.bf16.msra.mxu0 %v4459
    %5848 = vmatpush.bf16.msra.mxu0 %v4458
    %5849 = vmatpush.bf16.msra.mxu0 %v4457
    %5850 = vmatpush.bf16.msra.mxu0 %v4456
    %5851 = vmatmul.bf16.gmra.mxu0 %v1751
    %v5852 = vpop.f32.mrf.mxu0
    %v5853 = vadd.f32 %v5840, %v5852
    %v5854 = vpop.f32.mrf.mxu0
    %5855 = vdwg.mxu0
    %5856 = vmatpush.bf16.msra.mxu0 %v4471
    %5857 = vmatpush.bf16.msra.mxu0 %v4470
    %5858 = vmatpush.bf16.msra.mxu0 %v4469
    %5859 = vmatpush.bf16.msra.mxu0 %v4468
    %5860 = vmatpush.bf16.msra.mxu0 %v4467
    %5861 = vmatpush.bf16.msra.mxu0 %v4466
    %5862 = vmatpush.bf16.msra.mxu0 %v4465
    %5863 = vmatpush.bf16.msra.mxu0 %v4464
    %5864 = vmatmul.bf16.gmra.mxu0 %v1752
    %v5865 = vpop.f32.mrf.mxu0
    %v5866 = vadd.f32 %v5853, %v5865
    %v5867 = vpop.f32.mrf.mxu0
    %5868 = vdwg.mxu0
    %5869 = vmatpush.bf16.msra.mxu0 %v4479
    %5870 = vmatpush.bf16.msra.mxu0 %v4478
    %5871 = vmatpush.bf16.msra.mxu0 %v4477
    %5872 = vmatpush.bf16.msra.mxu0 %v4476
    %5873 = vmatpush.bf16.msra.mxu0 %v4475
    %5874 = vmatpush.bf16.msra.mxu0 %v4474
    %5875 = vmatpush.bf16.msra.mxu0 %v4473
    %5876 = vmatpush.bf16.msra.mxu0 %v4472
    %5877 = vmatmul.bf16.gmra.mxu0 %v1753
    %v5878 = vpop.f32.mrf.mxu0
    %v5879 = vadd.f32 %v5866, %v5878
    %v5880 = vpop.f32.mrf.mxu0
    %5881 = vdwg.mxu0
    %5882 = vmatpush.bf16.msra.mxu0 %v4487
    %5883 = vmatpush.bf16.msra.mxu0 %v4486
    %5884 = vmatpush.bf16.msra.mxu0 %v4485
    %5885 = vmatpush.bf16.msra.mxu0 %v4484
    %5886 = vmatpush.bf16.msra.mxu0 %v4483
    %5887 = vmatpush.bf16.msra.mxu0 %v4482
    %5888 = vmatpush.bf16.msra.mxu0 %v4481
    %5889 = vmatpush.bf16.msra.mxu0 %v4480
    %5890 = vmatmul.bf16.gmra.mxu0 %v1754
    %v5891 = vpop.f32.mrf.mxu0
    %v5892 = vadd.f32 %v5879, %v5891
    %v5893 = vpop.f32.mrf.mxu0
    %5894 = vdwg.mxu0
    %5895 = vmatpush.bf16.msra.mxu0 %v4495
    %5896 = vmatpush.bf16.msra.mxu0 %v4494
    %5897 = vmatpush.bf16.msra.mxu0 %v4493
    %5898 = vmatpush.bf16.msra.mxu0 %v4492
    %5899 = vmatpush.bf16.msra.mxu0 %v4491
    %5900 = vmatpush.bf16.msra.mxu0 %v4490
    %5901 = vmatpush.bf16.msra.mxu0 %v4489
    %5902 = vmatpush.bf16.msra.mxu0 %v4488
    %5903 = vmatmul.bf16.gmra.mxu0 %v1755
    %v5904 = vpop.f32.mrf.mxu0
    %v5905 = vadd.f32 %v5892, %v5904
    %v5906 = vpop.f32.mrf.mxu0
    %5907 = vdwg.mxu0
    %5908 = vmatpush.bf16.msra.mxu0 %v4503
    %5909 = vmatpush.bf16.msra.mxu0 %v4502
    %5910 = vmatpush.bf16.msra.mxu0 %v4501
    %5911 = vmatpush.bf16.msra.mxu0 %v4500
    %5912 = vmatpush.bf16.msra.mxu0 %v4499
    %5913 = vmatpush.bf16.msra.mxu0 %v4498
    %5914 = vmatpush.bf16.msra.mxu0 %v4497
    %5915 = vmatpush.bf16.msra.mxu0 %v4496
    %5916 = vmatmul.bf16.gmra.mxu0 %v1756
    %v5917 = vpop.f32.mrf.mxu0
    %v5918 = vadd.f32 %v5905, %v5917
    %v5919 = vpop.f32.mrf.mxu0
    %5920 = vdwg.mxu0
    %5921 = vmatpush.bf16.msra.mxu0 %v4511
    %5922 = vmatpush.bf16.msra.mxu0 %v4510
    %5923 = vmatpush.bf16.msra.mxu0 %v4509
    %5924 = vmatpush.bf16.msra.mxu0 %v4508
    %5925 = vmatpush.bf16.msra.mxu0 %v4507
    %5926 = vmatpush.bf16.msra.mxu0 %v4506
    %5927 = vmatpush.bf16.msra.mxu0 %v4505
    %5928 = vmatpush.bf16.msra.mxu0 %v4504
    %5929 = vmatmul.bf16.gmra.mxu0 %v1757
    %v5930 = vpop.f32.mrf.mxu0
    %v5931 = vadd.f32 %v5918, %v5930
    %v5932 = vpop.f32.mrf.mxu0
    %5933 = vdwg.mxu0
    %5934 = vmatpush.bf16.msra.mxu0 %v4519
    %5935 = vmatpush.bf16.msra.mxu0 %v4518
    %5936 = vmatpush.bf16.msra.mxu0 %v4517
    %5937 = vmatpush.bf16.msra.mxu0 %v4516
    %5938 = vmatpush.bf16.msra.mxu0 %v4515
    %5939 = vmatpush.bf16.msra.mxu0 %v4514
    %5940 = vmatpush.bf16.msra.mxu0 %v4513
    %5941 = vmatpush.bf16.msra.mxu0 %v4512
    %5942 = vmatmul.bf16.gmra.mxu0 %v1758
    %v5943 = vpop.f32.mrf.mxu0
    %v5944 = vadd.f32 %v5931, %v5943
    %v5945 = vpop.f32.mrf.mxu0
    %5946 = vdwg.mxu0
    %5947 = vmatpush.bf16.msra.mxu0 %v4527
    %5948 = vmatpush.bf16.msra.mxu0 %v4526
    %5949 = vmatpush.bf16.msra.mxu0 %v4525
    %5950 = vmatpush.bf16.msra.mxu0 %v4524
    %5951 = vmatpush.bf16.msra.mxu0 %v4523
    %5952 = vmatpush.bf16.msra.mxu0 %v4522
    %5953 = vmatpush.bf16.msra.mxu0 %v4521
    %5954 = vmatpush.bf16.msra.mxu0 %v4520
    %5955 = vmatmul.bf16.gmra.mxu0 %v1759
    %v5956 = vpop.f32.mrf.mxu0
    %v5957 = vadd.f32 %v5944, %v5956
    %v5958 = vpop.f32.mrf.mxu0
    %5959 = vdwg.mxu0
    %5960 = vmatpush.bf16.msra.mxu0 %v4535
    %5961 = vmatpush.bf16.msra.mxu0 %v4534
    %5962 = vmatpush.bf16.msra.mxu0 %v4533
    %5963 = vmatpush.bf16.msra.mxu0 %v4532
    %5964 = vmatpush.bf16.msra.mxu0 %v4531
    %5965 = vmatpush.bf16.msra.mxu0 %v4530
    %5966 = vmatpush.bf16.msra.mxu0 %v4529
    %5967 = vmatpush.bf16.msra.mxu0 %v4528
    %5968 = vmatmul.bf16.gmra.mxu0 %v1760
    %v5969 = vpop.f32.mrf.mxu0
    %v5970 = vadd.f32 %v5957, %v5969
    %v5971 = vpop.f32.mrf.mxu0
    %5972 = vdwg.mxu0
    %5973 = vmatpush.bf16.msra.mxu0 %v4543
    %5974 = vmatpush.bf16.msra.mxu0 %v4542
    %5975 = vmatpush.bf16.msra.mxu0 %v4541
    %5976 = vmatpush.bf16.msra.mxu0 %v4540
    %5977 = vmatpush.bf16.msra.mxu0 %v4539
    %5978 = vmatpush.bf16.msra.mxu0 %v4538
    %5979 = vmatpush.bf16.msra.mxu0 %v4537
    %5980 = vmatpush.bf16.msra.mxu0 %v4536
    %5981 = vmatmul.bf16.gmra.mxu0 %v1761
    %v5982 = vpop.f32.mrf.mxu0
    %v5983 = vadd.f32 %v5970, %v5982
    %v5984 = vpop.f32.mrf.mxu0
    %5985 = vdwg.mxu0
    %5986 = vmatpush.bf16.msra.mxu0 %v4551
    %5987 = vmatpush.bf16.msra.mxu0 %v4550
    %5988 = vmatpush.bf16.msra.mxu0 %v4549
    %5989 = vmatpush.bf16.msra.mxu0 %v4548
    %5990 = vmatpush.bf16.msra.mxu0 %v4547
    %5991 = vmatpush.bf16.msra.mxu0 %v4546
    %5992 = vmatpush.bf16.msra.mxu0 %v4545
    %5993 = vmatpush.bf16.msra.mxu0 %v4544
    %5994 = vmatmul.bf16.gmra.mxu0 %v1762
    %v5995 = vpop.f32.mrf.mxu0
    %v5996 = vadd.f32 %v5983, %v5995
    %v5997 = vpop.f32.mrf.mxu0
    %5998 = vdwg.mxu0
    %5999 = vmatpush.bf16.msra.mxu0 %v4559
    %6000 = vmatpush.bf16.msra.mxu0 %v4558
    %6001 = vmatpush.bf16.msra.mxu0 %v4557
    %6002 = vmatpush.bf16.msra.mxu0 %v4556
    %6003 = vmatpush.bf16.msra.mxu0 %v4555
    %6004 = vmatpush.bf16.msra.mxu0 %v4554
    %6005 = vmatpush.bf16.msra.mxu0 %v4553
    %6006 = vmatpush.bf16.msra.mxu0 %v4552
    %6007 = vmatmul.bf16.gmra.mxu0 %v1763
    %v6008 = vpop.f32.mrf.mxu0
    %v6009 = vadd.f32 %v5996, %v6008
    %v6010 = vpop.f32.mrf.mxu0
    %6011 = vdwg.mxu0
    %6012 = vmatpush.bf16.msra.mxu0 %v4567
    %6013 = vmatpush.bf16.msra.mxu0 %v4566
    %6014 = vmatpush.bf16.msra.mxu0 %v4565
    %6015 = vmatpush.bf16.msra.mxu0 %v4564
    %6016 = vmatpush.bf16.msra.mxu0 %v4563
    %6017 = vmatpush.bf16.msra.mxu0 %v4562
    %6018 = vmatpush.bf16.msra.mxu0 %v4561
    %6019 = vmatpush.bf16.msra.mxu0 %v4560
    %6020 = vmatmul.bf16.gmra.mxu0 %v1764
    %v6021 = vpop.f32.mrf.mxu0
    %v6022 = vadd.f32 %v6009, %v6021
    %v6023 = vpop.f32.mrf.mxu0
    %6024 = vdwg.mxu0
    %6025 = vmatpush.bf16.msra.mxu0 %v4575
    %6026 = vmatpush.bf16.msra.mxu0 %v4574
    %6027 = vmatpush.bf16.msra.mxu0 %v4573
    %6028 = vmatpush.bf16.msra.mxu0 %v4572
    %6029 = vmatpush.bf16.msra.mxu0 %v4571
    %6030 = vmatpush.bf16.msra.mxu0 %v4570
    %6031 = vmatpush.bf16.msra.mxu0 %v4569
    %6032 = vmatpush.bf16.msra.mxu0 %v4568
    %6033 = vmatmul.bf16.gmra.mxu0 %v1765
    %v6034 = vpop.f32.mrf.mxu0
    %v6035 = vadd.f32 %v6022, %v6034
    %v6036 = vpop.f32.mrf.mxu0
    %6037 = vdwg.mxu0
    %6038 = vmatpush.bf16.msra.mxu0 %v4583
    %6039 = vmatpush.bf16.msra.mxu0 %v4582
    %6040 = vmatpush.bf16.msra.mxu0 %v4581
    %6041 = vmatpush.bf16.msra.mxu0 %v4580
    %6042 = vmatpush.bf16.msra.mxu0 %v4579
    %6043 = vmatpush.bf16.msra.mxu0 %v4578
    %6044 = vmatpush.bf16.msra.mxu0 %v4577
    %6045 = vmatpush.bf16.msra.mxu0 %v4576
    %6046 = vmatmul.bf16.gmra.mxu0 %v1766
    %v6047 = vpop.f32.mrf.mxu0
    %v6048 = vadd.f32 %v6035, %v6047
    %v6049 = vpop.f32.mrf.mxu0
    %6050 = vdwg.mxu0
    %6051 = vmatpush.bf16.msra.mxu0 %v4591
    %6052 = vmatpush.bf16.msra.mxu0 %v4590
    %6053 = vmatpush.bf16.msra.mxu0 %v4589
    %6054 = vmatpush.bf16.msra.mxu0 %v4588
    %6055 = vmatpush.bf16.msra.mxu0 %v4587
    %6056 = vmatpush.bf16.msra.mxu0 %v4586
    %6057 = vmatpush.bf16.msra.mxu0 %v4585
    %6058 = vmatpush.bf16.msra.mxu0 %v4584
    %6059 = vmatmul.bf16.gmra.mxu0 %v1767
    %v6060 = vpop.f32.mrf.mxu0
    %v6061 = vadd.f32 %v6048, %v6060
    %v6062 = vpop.f32.mrf.mxu0
    %6063 = vdwg.mxu0
    %6064 = vmatpush.bf16.msra.mxu0 %v4599
    %6065 = vmatpush.bf16.msra.mxu0 %v4598
    %6066 = vmatpush.bf16.msra.mxu0 %v4597
    %6067 = vmatpush.bf16.msra.mxu0 %v4596
    %6068 = vmatpush.bf16.msra.mxu0 %v4595
    %6069 = vmatpush.bf16.msra.mxu0 %v4594
    %6070 = vmatpush.bf16.msra.mxu0 %v4593
    %6071 = vmatpush.bf16.msra.mxu0 %v4592
    %6072 = vmatmul.bf16.gmra.mxu0 %v1768
    %v6073 = vpop.f32.mrf.mxu0
    %v6074 = vadd.f32 %v6061, %v6073
    %v6075 = vpop.f32.mrf.mxu0
    %6076 = vdwg.mxu0
    %6077 = vmatpush.bf16.msra.mxu0 %v4607
    %6078 = vmatpush.bf16.msra.mxu0 %v4606
    %6079 = vmatpush.bf16.msra.mxu0 %v4605
    %6080 = vmatpush.bf16.msra.mxu0 %v4604
    %6081 = vmatpush.bf16.msra.mxu0 %v4603
    %6082 = vmatpush.bf16.msra.mxu0 %v4602
    %6083 = vmatpush.bf16.msra.mxu0 %v4601
    %6084 = vmatpush.bf16.msra.mxu0 %v4600
    %6085 = vmatmul.bf16.gmra.mxu0 %v1769
    %v6086 = vpop.f32.mrf.mxu0
    %v6087 = vadd.f32 %v6074, %v6086
    %v6088 = vpop.f32.mrf.mxu0
    %6089 = vdwg.mxu0
    %6090 = vmatpush.bf16.msra.mxu0 %v4615
    %6091 = vmatpush.bf16.msra.mxu0 %v4614
    %6092 = vmatpush.bf16.msra.mxu0 %v4613
    %6093 = vmatpush.bf16.msra.mxu0 %v4612
    %6094 = vmatpush.bf16.msra.mxu0 %v4611
    %6095 = vmatpush.bf16.msra.mxu0 %v4610
    %6096 = vmatpush.bf16.msra.mxu0 %v4609
    %6097 = vmatpush.bf16.msra.mxu0 %v4608
    %6098 = vmatmul.bf16.gmra.mxu0 %v1770
    %v6099 = vpop.f32.mrf.mxu0
    %v6100 = vadd.f32 %v6087, %v6099
    %v6101 = vpop.f32.mrf.mxu0
    %6102 = vdwg.mxu0
    %6103 = vmatpush.bf16.msra.mxu0 %v4623
    %6104 = vmatpush.bf16.msra.mxu0 %v4622
    %6105 = vmatpush.bf16.msra.mxu0 %v4621
    %6106 = vmatpush.bf16.msra.mxu0 %v4620
    %6107 = vmatpush.bf16.msra.mxu0 %v4619
    %6108 = vmatpush.bf16.msra.mxu0 %v4618
    %6109 = vmatpush.bf16.msra.mxu0 %v4617
    %6110 = vmatpush.bf16.msra.mxu0 %v4616
    %6111 = vmatmul.bf16.gmra.mxu0 %v1771
    %v6112 = vpop.f32.mrf.mxu0
    %v6113 = vadd.f32 %v6100, %v6112
    %v6114 = vpop.f32.mrf.mxu0
    %6115 = vdwg.mxu0
    %6116 = vmatpush.bf16.msra.mxu0 %v4631
    %6117 = vmatpush.bf16.msra.mxu0 %v4630
    %6118 = vmatpush.bf16.msra.mxu0 %v4629
    %6119 = vmatpush.bf16.msra.mxu0 %v4628
    %6120 = vmatpush.bf16.msra.mxu0 %v4627
    %6121 = vmatpush.bf16.msra.mxu0 %v4626
    %6122 = vmatpush.bf16.msra.mxu0 %v4625
    %6123 = vmatpush.bf16.msra.mxu0 %v4624
    %6124 = vmatmul.bf16.gmra.mxu0 %v1772
    %v6125 = vpop.f32.mrf.mxu0
    %v6126 = vadd.f32 %v6113, %v6125
    %v6127 = vpop.f32.mrf.mxu0
    %6128 = vdwg.mxu0
    %6129 = vmatpush.bf16.msra.mxu0 %v4639
    %6130 = vmatpush.bf16.msra.mxu0 %v4638
    %6131 = vmatpush.bf16.msra.mxu0 %v4637
    %6132 = vmatpush.bf16.msra.mxu0 %v4636
    %6133 = vmatpush.bf16.msra.mxu0 %v4635
    %6134 = vmatpush.bf16.msra.mxu0 %v4634
    %6135 = vmatpush.bf16.msra.mxu0 %v4633
    %6136 = vmatpush.bf16.msra.mxu0 %v4632
    %6137 = vmatmul.bf16.gmra.mxu0 %v1773
    %v6138 = vpop.f32.mrf.mxu0
    %v6139 = vadd.f32 %v6126, %v6138
    %v6140 = vpop.f32.mrf.mxu0
    %6141 = vdwg.mxu0
    %6142 = vmatpush.bf16.msra.mxu0 %v4647
    %6143 = vmatpush.bf16.msra.mxu0 %v4646
    %6144 = vmatpush.bf16.msra.mxu0 %v4645
    %6145 = vmatpush.bf16.msra.mxu0 %v4644
    %6146 = vmatpush.bf16.msra.mxu0 %v4643
    %6147 = vmatpush.bf16.msra.mxu0 %v4642
    %6148 = vmatpush.bf16.msra.mxu0 %v4641
    %6149 = vmatpush.bf16.msra.mxu0 %v4640
    %6150 = vmatmul.bf16.gmra.mxu0 %v1774
    %v6151 = vpop.f32.mrf.mxu0
    %v6152 = vadd.f32 %v6139, %v6151
    %v6153 = vpop.f32.mrf.mxu0
    %6154 = vdwg.mxu0
    %6155 = vmatpush.bf16.msra.mxu0 %v4655
    %6156 = vmatpush.bf16.msra.mxu0 %v4654
    %6157 = vmatpush.bf16.msra.mxu0 %v4653
    %6158 = vmatpush.bf16.msra.mxu0 %v4652
    %6159 = vmatpush.bf16.msra.mxu0 %v4651
    %6160 = vmatpush.bf16.msra.mxu0 %v4650
    %6161 = vmatpush.bf16.msra.mxu0 %v4649
    %6162 = vmatpush.bf16.msra.mxu0 %v4648
    %6163 = vmatmul.bf16.gmra.mxu0 %v1775
    %v6164 = vpop.f32.mrf.mxu0
    %v6165 = vadd.f32 %v6152, %v6164
    %v6166 = vpop.f32.mrf.mxu0
    %6167 = vdwg.mxu0
    %6168 = vmatpush.msra.mxu0 %v300
    %6169 = vmatpush.msra.mxu0 %v299
    %6170 = vmatpush.msra.mxu0 %v298
    %6171 = vmatpush.msra.mxu0 %v297
    %6172 = vmatpush.msra.mxu0 %v296
    %6173 = vmatpush.msra.mxu0 %v295
    %6174 = vmatpush.msra.mxu0 %v294
    %6175 = vmatpush.msra.mxu0 %v293
    %6176 = vmatpush.msra.mxu0 %v292
    %6177 = vmatpush.msra.mxu0 %v291
    %6178 = vmatpush.msra.mxu0 %v290
    %6179 = vmatpush.msra.mxu0 %v289
    %6180 = vmatpush.msra.mxu0 %v288
    %6181 = vmatpush.msra.mxu0 %v287
    %6182 = vmatpush.msra.mxu0 %v286
    %6183 = vmatpush.msra.mxu0 %v285
    %6184 = vmatmul.f32.gmra.mxu0 %v6165
    %v6185 = vpop.f32.mrf.mxu0
    %v6186 = vadd.f32 0.0, %v6185
    %6187 = vdwg.mxu0
    %v6188 = vmax.f32 %v6186, 0.0
    %v6189 = vld [vmem:[#allocation7] sm:$0xf]
    %v6190 = vld [vmem:[#allocation7 + $0x4] sm:$0xf]
    %v6191 = vld [vmem:[#allocation7 + $0x8] sm:$0xf]
    %v6192 = vld [vmem:[#allocation7 + $0xc] sm:$0xf]
    %v6193 = vld [vmem:[#allocation7 + $0x10] sm:$0xf]
    %v6194 = vld [vmem:[#allocation7 + $0x14] sm:$0xf]
    %v6195 = vld [vmem:[#allocation7 + $0x18] sm:$0xf]
    %v6196 = vld [vmem:[#allocation7 + $0x1c] sm:$0xf]
    %v6197 = vld [vmem:[#allocation7 + $0x20] sm:$0xf]
    %v6198 = vld [vmem:[#allocation7 + $0x24] sm:$0xf]
    %v6199 = vld [vmem:[#allocation7 + $0x28] sm:$0xf]
    %v6200 = vld [vmem:[#allocation7 + $0x2c] sm:$0xf]
    %v6201 = vld [vmem:[#allocation7 + $0x30] sm:$0xf]
    %v6202 = vld [vmem:[#allocation7 + $0x34] sm:$0xf]
    %v6203 = vld [vmem:[#allocation7 + $0x38] sm:$0xf]
    %v6204 = vld [vmem:[#allocation7 + $0x3c] sm:$0xf]
    %v6205 = vpack.c.bf16 %v6188, %v6188
    %v6222 = vunpack.c.l.b16 %v6189
    %v6223 = vunpack.c.l.b16 %v6190
    %v6224 = vunpack.c.l.b16 %v6191
    %v6225 = vunpack.c.l.b16 %v6192
    %v6226 = vunpack.c.l.b16 %v6193
    %v6227 = vunpack.c.l.b16 %v6194
    %v6228 = vunpack.c.l.b16 %v6195
    %v6229 = vunpack.c.l.b16 %v6196
    %v6230 = vunpack.c.l.b16 %v6197
    %v6231 = vunpack.c.l.b16 %v6198
    %v6232 = vunpack.c.l.b16 %v6199
    %v6233 = vunpack.c.l.b16 %v6200
    %v6234 = vunpack.c.l.b16 %v6201
    %v6235 = vunpack.c.l.b16 %v6202
    %v6236 = vunpack.c.l.b16 %v6203
    %v6237 = vunpack.c.l.b16 %v6204
    %v6238 = vpack.c.b16 %v6223, %v6222
    %v6239 = vpack.c.b16 %v6225, %v6224
    %v6240 = vpack.c.b16 %v6227, %v6226
    %v6241 = vpack.c.b16 %v6229, %v6228
    %v6242 = vpack.c.b16 %v6231, %v6230
    %v6243 = vpack.c.b16 %v6233, %v6232
    %v6244 = vpack.c.b16 %v6235, %v6234
    %v6245 = vpack.c.b16 %v6237, %v6236
    %6254 = vmatpush.bf16.msra.mxu0 %v6245
    %6255 = vmatpush.bf16.msra.mxu0 %v6244
    %6256 = vmatpush.bf16.msra.mxu0 %v6243
    %6257 = vmatpush.bf16.msra.mxu0 %v6242
    %6258 = vmatpush.bf16.msra.mxu0 %v6241
    %6259 = vmatpush.bf16.msra.mxu0 %v6240
    %6260 = vmatpush.bf16.msra.mxu0 %v6239
    %6261 = vmatpush.bf16.msra.mxu0 %v6238
    %6262 = vmatmul.bf16.gmra.mxu0 %v6205
    %v6263 = vpop.f32.mrf.mxu0
    %v6264 = vadd.f32 0.0, %v6263
    %v6265 = vpop.f32.mrf.mxu0
    %6266 = vdwg.mxu0
    %6267 = vmatpush.msra.mxu0 %v300
    %6268 = vmatpush.msra.mxu0 %v299
    %6269 = vmatpush.msra.mxu0 %v298
    %6270 = vmatpush.msra.mxu0 %v297
    %6271 = vmatpush.msra.mxu0 %v296
    %6272 = vmatpush.msra.mxu0 %v295
    %6273 = vmatpush.msra.mxu0 %v294
    %6274 = vmatpush.msra.mxu0 %v293
    %6275 = vmatpush.msra.mxu0 %v292
    %6276 = vmatpush.msra.mxu0 %v291
    %6277 = vmatpush.msra.mxu0 %v290
    %6278 = vmatpush.msra.mxu0 %v289
    %6279 = vmatpush.msra.mxu0 %v288
    %6280 = vmatpush.msra.mxu0 %v287
    %6281 = vmatpush.msra.mxu0 %v286
    %6282 = vmatpush.msra.mxu0 %v285
    %6283 = vmatmul.f32.gmra.mxu0 %v6264
    %v6284 = vpop.f32.mrf.mxu0
    %v6285 = vadd.f32 0.0, %v6284
    %6286 = vdwg.mxu0
    %v6287 = vrot.slane %v6285, 4
    %v6288 = vadd.f32 %v6285, %v6287
    %v6289 = vrot.slane %v6288, 2
    %v6290 = vadd.f32 %v6288, %v6289
    %v6291 = vrot.slane %v6290, 1
    %v6292 = vadd.f32 %v6290, %v6291
    %v6293 = vrcp.pop 8.0
    %v6294 = vmul.f32 8.0, %v6293
    %v6295 = vsub.f32 1.0, %v6294
    %v6296 = vmul.f32 %v6293, %v6295
    %v6297 = vadd.f32 %v6293, %v6296
    %vm6298 = vweird.f32 %v6293
    %v6299 = vsel %vm6298, %v6293, %v6297
    %v6300 = vmul.f32 %v6292, %v6299
    %v6301 = vsub.f32 %v6285, %v6300
    %v6302 = vmul.f32 %v6301, %v6301
    %v6303 = vrot.slane %v6302, 4
    %v6304 = vadd.f32 %v6302, %v6303
    %v6305 = vrot.slane %v6304, 2
    %v6306 = vadd.f32 %v6304, %v6305
    %v6307 = vrot.slane %v6306, 1
    %v6308 = vadd.f32 %v6306, %v6307
    %v6309 = vmul.f32 %v6308, %v6299
    %v6310 = vadd.f32 %v6309, 1e-05
    %v6311 = vrsqrt.pop %v6310
    %v6312 = vmul.f32 %v6311, %v6310
    %v6313 = vmul.f32 %v6312, %v6311
    %v6314 = vmul.f32 0.5, %v6313
    %v6315 = vsub.f32 1.5, %v6314
    %v6316 = vmul.f32 %v6311, %v6315
    %vm6317 = vweird.f32 %v6310
    %vm6318 = vweird.f32 %v6311
    %vm6319 = vmor %vm6317, %vm6318
    %v6320 = vsel %vm6319, %v6311, %v6316
    %v6321 = vmul.f32 %v6301, %v6320
    %v6322 = vmax.f32 %v6321, 0.0
    %s6323 = scalar_lea.vmem [#allocation7], 64
    %v6324 = vld [vmem:[%s6323] sm:$0xf]
    %v6325 = vld [vmem:[%s6323 + $0x4] sm:$0xf]
    %v6326 = vld [vmem:[%s6323 + $0x8] sm:$0xf]
    %v6327 = vld [vmem:[%s6323 + $0xc] sm:$0xf]
    %v6328 = vld [vmem:[%s6323 + $0x10] sm:$0xf]
    %v6329 = vld [vmem:[%s6323 + $0x14] sm:$0xf]
    %v6330 = vld [vmem:[%s6323 + $0x18] sm:$0xf]
    %v6331 = vld [vmem:[%s6323 + $0x1c] sm:$0xf]
    %v6332 = vld [vmem:[%s6323 + $0x20] sm:$0xf]
    %v6333 = vld [vmem:[%s6323 + $0x24] sm:$0xf]
    %v6334 = vld [vmem:[%s6323 + $0x28] sm:$0xf]
    %v6335 = vld [vmem:[%s6323 + $0x2c] sm:$0xf]
    %v6336 = vld [vmem:[%s6323 + $0x30] sm:$0xf]
    %v6337 = vld [vmem:[%s6323 + $0x34] sm:$0xf]
    %v6338 = vld [vmem:[%s6323 + $0x38] sm:$0xf]
    %v6339 = vld [vmem:[%s6323 + $0x3c] sm:$0xf]
    %v6340 = vpack.c.bf16 %v6322, %v6322
    %v6357 = vunpack.c.l.b16 %v6324
    %v6358 = vunpack.c.l.b16 %v6325
    %v6359 = vunpack.c.l.b16 %v6326
    %v6360 = vunpack.c.l.b16 %v6327
    %v6361 = vunpack.c.l.b16 %v6328
    %v6362 = vunpack.c.l.b16 %v6329
    %v6363 = vunpack.c.l.b16 %v6330
    %v6364 = vunpack.c.l.b16 %v6331
    %v6365 = vunpack.c.l.b16 %v6332
    %v6366 = vunpack.c.l.b16 %v6333
    %v6367 = vunpack.c.l.b16 %v6334
    %v6368 = vunpack.c.l.b16 %v6335
    %v6369 = vunpack.c.l.b16 %v6336
    %v6370 = vunpack.c.l.b16 %v6337
    %v6371 = vunpack.c.l.b16 %v6338
    %v6372 = vunpack.c.l.b16 %v6339
    %v6373 = vpack.c.b16 %v6358, %v6357
    %v6374 = vpack.c.b16 %v6360, %v6359
    %v6375 = vpack.c.b16 %v6362, %v6361
    %v6376 = vpack.c.b16 %v6364, %v6363
    %v6377 = vpack.c.b16 %v6366, %v6365
    %v6378 = vpack.c.b16 %v6368, %v6367
    %v6379 = vpack.c.b16 %v6370, %v6369
    %v6380 = vpack.c.b16 %v6372, %v6371
    %6389 = vmatpush.bf16.msra.mxu0 %v6380
    %6390 = vmatpush.bf16.msra.mxu0 %v6379
    %6391 = vmatpush.bf16.msra.mxu0 %v6378
    %6392 = vmatpush.bf16.msra.mxu0 %v6377
    %6393 = vmatpush.bf16.msra.mxu0 %v6376
    %6394 = vmatpush.bf16.msra.mxu0 %v6375
    %6395 = vmatpush.bf16.msra.mxu0 %v6374
    %6396 = vmatpush.bf16.msra.mxu0 %v6373
    %6397 = vmatmul.bf16.gmra.mxu0 %v6340
    %v6398 = vpop.f32.mrf.mxu0
    %v6399 = vadd.f32 0.0, %v6398
    %v6400 = vpop.f32.mrf.mxu0
    %6401 = vdwg.mxu0
    %6402 = vmatpush.msra.mxu0 %v300
    %6403 = vmatpush.msra.mxu0 %v299
    %6404 = vmatpush.msra.mxu0 %v298
    %6405 = vmatpush.msra.mxu0 %v297
    %6406 = vmatpush.msra.mxu0 %v296
    %6407 = vmatpush.msra.mxu0 %v295
    %6408 = vmatpush.msra.mxu0 %v294
    %6409 = vmatpush.msra.mxu0 %v293
    %6410 = vmatpush.msra.mxu0 %v292
    %6411 = vmatpush.msra.mxu0 %v291
    %6412 = vmatpush.msra.mxu0 %v290
    %6413 = vmatpush.msra.mxu0 %v289
    %6414 = vmatpush.msra.mxu0 %v288
    %6415 = vmatpush.msra.mxu0 %v287
    %6416 = vmatpush.msra.mxu0 %v286
    %6417 = vmatpush.msra.mxu0 %v285
    %6418 = vmatmul.f32.gmra.mxu0 %v6399
    %v6419 = vpop.f32.mrf.mxu0
    %v6420 = vadd.f32 0.0, %v6419
    %6421 = vdwg.mxu0
    %v6422 = vrot.slane %v6420, 4
    %v6423 = vadd.f32 %v6420, %v6422
    %v6424 = vrot.slane %v6423, 2
    %v6425 = vadd.f32 %v6423, %v6424
    %v6426 = vrot.slane %v6425, 1
    %v6427 = vadd.f32 %v6425, %v6426
    %v6428 = vmul.f32 %v6427, %v6299
    %v6429 = vsub.f32 %v6420, %v6428
    %v6430 = vmul.f32 %v6429, %v6429
    %v6431 = vrot.slane %v6430, 4
    %v6432 = vadd.f32 %v6430, %v6431
    %v6433 = vrot.slane %v6432, 2
    %v6434 = vadd.f32 %v6432, %v6433
    %v6435 = vrot.slane %v6434, 1
    %v6436 = vadd.f32 %v6434, %v6435
    %v6437 = vmul.f32 %v6436, %v6299
    %v6438 = vadd.f32 %v6437, 1e-05
    %v6439 = vrsqrt.pop %v6438
    %v6440 = vmul.f32 %v6439, %v6438
    %v6441 = vmul.f32 %v6440, %v6439
    %v6442 = vmul.f32 0.5, %v6441
    %v6443 = vsub.f32 1.5, %v6442
    %v6444 = vmul.f32 %v6439, %v6443
    %vm6445 = vweird.f32 %v6438
    %vm6446 = vweird.f32 %v6439
    %vm6447 = vmor %vm6445, %vm6446
    %v6448 = vsel %vm6447, %v6439, %v6444
    %v6449 = vmul.f32 %v6429, %v6448
    %v6450 = vmax.f32 %v6449, 0.0
    %v6451 = vld [vmem:[#allocation9] sm:$0xf]
    %v6452 = vld [vmem:[#allocation9 + $0x4] sm:$0xf]
    %v6453 = vld [vmem:[#allocation9 + $0x8] sm:$0xf]
    %v6454 = vld [vmem:[#allocation9 + $0xc] sm:$0xf]
    %v6455 = vld [vmem:[#allocation9 + $0x10] sm:$0xf]
    %v6456 = vld [vmem:[#allocation9 + $0x14] sm:$0xf]
    %v6457 = vld [vmem:[#allocation9 + $0x18] sm:$0xf]
    %v6458 = vld [vmem:[#allocation9 + $0x1c] sm:$0xf]
    %v6459 = vld [vmem:[#allocation9 + $0x20] sm:$0xf]
    %v6460 = vld [vmem:[#allocation9 + $0x24] sm:$0xf]
    %v6461 = vld [vmem:[#allocation9 + $0x28] sm:$0xf]
    %v6462 = vld [vmem:[#allocation9 + $0x2c] sm:$0xf]
    %v6463 = vld [vmem:[#allocation9 + $0x30] sm:$0xf]
    %v6464 = vld [vmem:[#allocation9 + $0x34] sm:$0xf]
    %v6465 = vld [vmem:[#allocation9 + $0x38] sm:$0xf]
    %v6466 = vld [vmem:[#allocation9 + $0x3c] sm:$0xf]
    %v6467 = vpack.c.bf16 %v6450, %v6450
    %v6484 = vunpack.c.l.b16 %v6451
    %v6485 = vunpack.c.l.b16 %v6452
    %v6486 = vunpack.c.l.b16 %v6453
    %v6487 = vunpack.c.l.b16 %v6454
    %v6488 = vunpack.c.l.b16 %v6455
    %v6489 = vunpack.c.l.b16 %v6456
    %v6490 = vunpack.c.l.b16 %v6457
    %v6491 = vunpack.c.l.b16 %v6458
    %v6492 = vunpack.c.l.b16 %v6459
    %v6493 = vunpack.c.l.b16 %v6460
    %v6494 = vunpack.c.l.b16 %v6461
    %v6495 = vunpack.c.l.b16 %v6462
    %v6496 = vunpack.c.l.b16 %v6463
    %v6497 = vunpack.c.l.b16 %v6464
    %v6498 = vunpack.c.l.b16 %v6465
    %v6499 = vunpack.c.l.b16 %v6466
    %v6500 = vpack.c.b16 %v6485, %v6484
    %v6501 = vpack.c.b16 %v6487, %v6486
    %v6502 = vpack.c.b16 %v6489, %v6488
    %v6503 = vpack.c.b16 %v6491, %v6490
    %v6504 = vpack.c.b16 %v6493, %v6492
    %v6505 = vpack.c.b16 %v6495, %v6494
    %v6506 = vpack.c.b16 %v6497, %v6496
    %v6507 = vpack.c.b16 %v6499, %v6498
    %6516 = vmatpush.bf16.msra.mxu0 %v6507
    %6517 = vmatpush.bf16.msra.mxu0 %v6506
    %6518 = vmatpush.bf16.msra.mxu0 %v6505
    %6519 = vmatpush.bf16.msra.mxu0 %v6504
    %6520 = vmatpush.bf16.msra.mxu0 %v6503
    %6521 = vmatpush.bf16.msra.mxu0 %v6502
    %6522 = vmatpush.bf16.msra.mxu0 %v6501
    %6523 = vmatpush.bf16.msra.mxu0 %v6500
    %6524 = vmatmul.bf16.gmra.mxu0 %v6467
    %v6525 = vpop.f32.mrf.mxu0
    %v6526 = vadd.f32 0.0, %v6525
    %v6527 = vpop.f32.mrf.mxu0
    %6528 = vdwg.mxu0
    %6529 = vmatpush.msra.mxu0 %v479
    %6530 = vmatpush.msra.mxu0 %v478
    %6531 = vmatpush.msra.mxu0 %v477
    %6532 = vmatpush.msra.mxu0 %v476
    %6533 = vmatpush.msra.mxu0 %v475
    %6534 = vmatpush.msra.mxu0 %v474
    %6535 = vmatpush.msra.mxu0 %v473
    %6536 = vmatpush.msra.mxu0 %v472
    %6537 = vmatpush.msra.mxu0 %v471
    %6538 = vmatpush.msra.mxu0 %v470
    %6539 = vmatpush.msra.mxu0 %v469
    %6540 = vmatpush.msra.mxu0 %v468
    %6541 = vmatpush.msra.mxu0 %v467
    %6542 = vmatpush.msra.mxu0 %v466
    %6543 = vmatpush.msra.mxu0 %v465
    %6544 = vmatpush.msra.mxu0 %v464
    %6545 = vmatmul.f32.gmra.mxu0 %v6526
    %v6546 = vpop.f32.mrf.mxu0
    %v6547 = vadd.f32 0.0, %v6546
    %6548 = vdwg.mxu0
    %6549 = vst [vmem:[#allocation10] sm:$0xff] %v6547
    // Predicated region
    $region38: #{hhn_forward.1} parent=1 // pred_check
      _
    $region39: #{hhn_forward.1} parent=1 // pred_check_branch
      %6551 = sbr.rel (0) target = $region41
    $region40: #{hhn_forward.1} parent=1 // pred_region
      %6553 = vsyncadd [#allocation4], 0
      %s6555 = sshll.u32 [#allocation10], 4
      %s6556 = int_to_ptr.vmem [resolvable:$true] %s6555
      %s6557 = sshll.u32 %s5, 4
      %s6558 = int_to_ptr.hbm [resolvable:$true] %s6557
      %6560 = dma.vmem_to_hbm [thread:$0]  %s6556, 128, %s6558, [#allocation4]
    $region41: #{hhn_forward.1} parent=1 // pred_fallthru
      _
    // Predicated region
    $region42: #{hhn_forward.1} parent=1 // pred_check
      _
    $region43: #{hhn_forward.1} parent=1 // pred_check_branch
      %6562 = sbr.rel (0) target = $region45
    $region44: #{hhn_forward.1} parent=1 // pred_region
      %6564 = dma.done [#allocation4], 128
    $region45: #{hhn_forward.1} parent=1 // pred_fallthru
      _
    %6565 = vsyncpa [#allocation3], 1
    %6566 = vsyncpa [#allocation8], 1
    %6567 = vsyncpa [#allocation4], 1
    %6568 = vsyncpa [#allocation5], 1

</llo_original>
